<compile_context>
chip_gen: v5e
topology: v5e:2x2
jax: 0.10.0
libtpu: 0.0.40
codegen_flags: <defaults>
</compile_context>

<pallas_src>
import functools

import jax
import jax.numpy as jnp
from jax.experimental import pallas as pl
from jax.experimental.pallas import tpu as pltpu

# ------------------------- model configuration (small) ----------------------
EMB_DIM = 32          # emb_dim
NHEAD = 4             # nhead (must divide emb_dim)
NUM_LAYERS = 2        # num_layers
FFN_DIM = 64          # dim_feedforward
LN_EPS = 1e-5
NEG_INF = -1e30
N_CLASSES = 200       # x_head / y_head output width
HEAD_PAD = 512        # fused head width; x @ [0:200], y @ [256:456]
Y_OFF = 256
HID_PAD = 128         # lane-dense slot holding the (.., E) hidden output
VMAX = 202            # per-stream slot size in the packed embedding table
VTOT = 1280           # 6*VMAX = 1212 padded up to a multiple of 128


def _full_spec(shape):
    """BlockSpec covering the full array (single grid step)."""
    nd = len(shape)
    return pl.BlockSpec(shape, lambda i, _nd=nd: (0,) * _nd)


# ------------------------------ fused Pallas kernel --------------------------

def cm_bert_kernel(idx_ref, mask_ref, w_ref, b_ref, out_ref, *,
                   nhead, num_layers, ffn_dim, vtot, head_pad):
    """Whole CM-BERT forward: embeddings -> encoder layers -> fused heads."""
    B, S, _ = out_ref.shape
    E = w_ref.shape[1]
    H = nhead
    Dh = E // H
    F = ffn_dim
    L = num_layers
    M = B * S

    f32 = jnp.float32
    bf16 = jnp.bfloat16

    # ---- embeddings: single deep-K one-hot matmul over the packed table ----
    # TODO(synk): out-of-range indices silently select zero rows instead of
    # raising like torch.nn.Embedding.
    iota = jax.lax.broadcasted_iota(jnp.int32, (M, vtot), 1)
    hit = iota == idx_ref[:, 0:1]
    for j in range(1, 6):                       # streams occupy disjoint slots
        hit = jnp.logical_or(hit, iota == idx_ref[:, j:j + 1])
    onehot = jnp.where(hit, 1.0, 0.0).astype(bf16)          # (M, vtot)
    tab = w_ref[0:vtot, :]                                   # (vtot, E) bf16
    xf = jnp.dot(onehot, tab, preferred_element_type=f32)    # (M, E)

    # ---- additive attention-mask bias, hoisted out of the layer loop -------
    valid = mask_ref[...] > 0.5                              # (B, S)
    mb = jnp.where(valid, 0.0, NEG_INF).astype(f32)[:, None, :]   # (B,1,S)
    mask_bias = jnp.concatenate([mb] * H, axis=0)            # (H*B, 1, S)

    def layernorm(z, w, b):
        mu = z.mean(axis=-1, keepdims=True)
        var = ((z - mu) ** 2).mean(axis=-1, keepdims=True)
        return (z - mu) * jax.lax.rsqrt(var + LN_EPS) * w + b

    def split_heads(z):
        """(M, E) f32 -> (H*B, S, Dh) f32; batch order (h, b)."""
        parts = [z[:, h * Dh:(h + 1) * Dh] for h in range(H)]
        return jnp.concatenate(parts, axis=0).reshape(H * B, S, Dh)

    wbase = vtot + head_pad
    lrows = 4 * E + 2 * F

    # ---- transformer encoder layers (statically unrolled, post-norm, ReLU) --
    # TODO(synk): dropout (p=0.1) is modeled in eval mode (identity).
    for l in range(L):
        r0 = wbase + l * lrows
        wqkv = w_ref[r0:r0 + 3 * E, :]                       # (3E, E) bf16
        wo = w_ref[r0 + 3 * E:r0 + 4 * E, :]                 # (E, E)
        w1 = w_ref[r0 + 4 * E:r0 + 4 * E + F, :]             # (F, E)
        w2t = w_ref[r0 + 4 * E + F:r0 + 4 * E + 2 * F, :]    # (F, E) = lin2_w.T

        lb = b_ref[l * 8:(l + 1) * 8, :]                     # (8, 512) f32
        bqkv = lb[0:1, 0:3 * E]
        bo = lb[1:2, 0:E]
        ln1w, ln1b = lb[2:3, 0:E], lb[3:4, 0:E]
        b1 = lb[4:5, 0:F]
        b2 = lb[5:6, 0:E]
        ln2w, ln2b = lb[6:7, 0:E], lb[7:8, 0:E]

        xb = xf.astype(bf16)
        # fused QKV projection (Q rows already carry 1/sqrt(Dh))
        qkv = jnp.einsum('me,fe->mf', xb, wqkv,
                         preferred_element_type=f32) + bqkv  # (M, 3E) f32
        q_bh = split_heads(qkv[:, 0:E]).astype(bf16)         # (H*B, S, Dh)
        k_bh = split_heads(qkv[:, E:2 * E]).astype(bf16)
        v_bh = split_heads(qkv[:, 2 * E:3 * E]).astype(bf16)

        # batched attention over batch = H*B (3-D one-batch dot form)
        s = jnp.einsum('nqd,nkd->nqk', q_bh, k_bh,
                       preferred_element_type=f32)           # (H*B, S, S)
        # TODO(synk): PyTorch yields NaN for fully-masked query rows; here a
        # fully-masked row degenerates to a uniform softmax.
        s = s + mask_bias
        m = s.max(axis=-1, keepdims=True)
        p = jnp.exp(s - m)
        denom = p.sum(axis=-1, keepdims=True)
        ah = jnp.einsum('nqk,nkd->nqd', p.astype(bf16), v_bh,
                        preferred_element_type=f32)          # (H*B, S, Dh)
        ah = ah * pl.reciprocal(denom, approx=True)

        # merge heads back to (M, E) with PyTorch column order (h, dh)
        ah2 = ah.reshape(H * M, Dh)
        ah_merged = jnp.concatenate(
            [ah2[h * M:(h + 1) * M, :] for h in range(H)], axis=-1)  # (M, E)
        attn = jnp.einsum('md,fd->mf', ah_merged.astype(bf16), wo,
                          preferred_element_type=f32) + bo

        x1 = layernorm(xf + attn, ln1w, ln1b)

        hdn = jnp.einsum('me,fe->mf', x1.astype(bf16), w1,
                         preferred_element_type=f32) + b1
        hdn = jnp.maximum(hdn, 0.0)
        ffn = jnp.dot(hdn.astype(bf16), w2t,
                      preferred_element_type=f32) + b2

        xf = layernorm(x1 + ffn, ln2w, ln2b)

    # ---- fused x/y heads + lane-dense output slab ---------------------------
    headw = w_ref[vtot:vtot + head_pad, :]                   # (512, E) bf16
    headb = b_ref[L * 8:L * 8 + 1, :]                        # (1, 512) f32
    logits = jnp.einsum('me,ve->mv', xf.astype(bf16), headw,
                        preferred_element_type=f32) + headb  # (M, 512)

    out_ref[:, :, 0:head_pad] = logits.reshape(B, S, head_pad)
    hid = jnp.concatenate([xf, jnp.zeros((M, HID_PAD - E), f32)], axis=-1)
    out_ref[:, :, head_pad:head_pad + HID_PAD] = hid.reshape(B, S, HID_PAD)


# ------------------------------ parameters ----------------------------------

def init_params(key, emb_dim, nhead, num_layers, ffn_dim):
    """PyTorch-layout parameters (out_features, in_features)."""
    keys = iter(jax.random.split(key, 64))

    def nrm(shape, scale=0.02):
        return (scale * jax.random.normal(next(keys), shape)).astype(jnp.float32)

    params = {
        'x_emb': nrm((202, emb_dim)),
        'y_emb': nrm((202, emb_dim)),
        'date_emb': nrm((76, emb_dim)),
        'time_emb': nrm((49, emb_dim)),
        'delta_emb': nrm((48, emb_dim)),
        'freq_emb': nrm((4, emb_dim)),
        'x_head_w': nrm((N_CLASSES, emb_dim)),
        'x_head_b': jnp.zeros((1, N_CLASSES), jnp.float32),
        'y_head_w': nrm((N_CLASSES, emb_dim)),
        'y_head_b': jnp.zeros((1, N_CLASSES), jnp.float32),
        'layers': [],
    }
    for _ in range(num_layers):
        params['layers'].append(dict(
            in_proj_w=nrm((3 * emb_dim, emb_dim)),
            in_proj_b=nrm((1, 3 * emb_dim)),
            out_proj_w=nrm((emb_dim, emb_dim)),
            out_proj_b=nrm((1, emb_dim)),
            ln1_w=jnp.ones((1, emb_dim), jnp.float32),
            ln1_b=jnp.zeros((1, emb_dim), jnp.float32),
            lin1_w=nrm((ffn_dim, emb_dim)),
            lin1_b=nrm((1, ffn_dim)),
            lin2_w=nrm((emb_dim, ffn_dim)),
            lin2_b=nrm((1, emb_dim)),
            ln2_w=jnp.ones((1, emb_dim), jnp.float32),
            ln2_b=jnp.zeros((1, emb_dim), jnp.float32),
        ))
    return params


def prepare_params(params, nhead=NHEAD):
    """One-time transform: pack everything into 2 slabs (bf16 weights, f32 biases)."""
    E = params['x_emb'].shape[1]
    Dh = E // nhead
    scale = 1.0 / float(Dh) ** 0.5            # folded into Q rows/bias

    # -- bf16 weight slab, width E --
    tabs = [params['x_emb'], params['y_emb'], params['date_emb'],
            params['time_emb'], params['delta_emb'], params['freq_emb']]
    tab = jnp.zeros((VTOT, E), jnp.float32)
    for j, t in enumerate(tabs):
        tab = tab.at[j * VMAX:j * VMAX + t.shape[0]].set(t)

    head_w = jnp.zeros((HEAD_PAD, E), jnp.float32)
    head_w = head_w.at[:N_CLASSES].set(params['x_head_w'])
    head_w = head_w.at[Y_OFF:Y_OFF + N_CLASSES].set(params['y_head_w'])

    w_rows = [tab, head_w]
    for lp in params['layers']:
        w = lp['in_proj_w']
        wqkv = jnp.concatenate([w[:E] * scale, w[E:]], axis=0)      # (3E, E)
        w_rows += [wqkv, lp['out_proj_w'], lp['lin1_w'], lp['lin2_w'].T]
    w_slab = jnp.concatenate(w_rows, axis=0).astype(jnp.bfloat16)

    # -- f32 bias / LayerNorm slab, width HEAD_PAD (512) --
    def row(vec):
        r = jnp.zeros((1, HEAD_PAD), jnp.float32)
        return r.at[0, :vec.shape[0]].set(vec.astype(jnp.float32))

    b_rows = []
    for lp in params['layers']:
        b = lp['in_proj_b'][0]
        bqkv = jnp.concatenate([b[:E] * scale, b[E:]])
        b_rows += [row(bqkv), row(lp['out_proj_b'][0]),
                   row(lp['ln1_w'][0]), row(lp['ln1_b'][0]),
                   row(lp['lin1_b'][0]), row(lp['lin2_b'][0]),
                   row(lp['ln2_w'][0]), row(lp['ln2_b'][0])]
    head_b = jnp.zeros((1, HEAD_PAD), jnp.float32)
    head_b = head_b.at[0, :N_CLASSES].set(params['x_head_b'][0])
    head_b = head_b.at[0, Y_OFF:Y_OFF + N_CLASSES].set(params['y_head_b'][0])
    b_rows.append(head_b)
    n_pad = (-len(b_rows)) % 8
    if n_pad:
        b_rows.append(jnp.zeros((n_pad, HEAD_PAD), jnp.float32))
    b_slab = jnp.concatenate(b_rows, axis=0)

    return dict(w_slab=w_slab, b_slab=b_slab)


# ------------------------------ full forward ---------------------------------

def cm_bert_forward(prep, x_coords, y_coords, dates, times, deltas,
                    freq_classes, padding_mask,
                    nhead=NHEAD, num_layers=NUM_LAYERS, ffn_dim=FFN_DIM):
    B, S = x_coords.shape
    E = prep['w_slab'].shape[1]

    # offset-packed indices: stream j gets + j*VMAX (single in-kernel one-hot)
    idx = jnp.stack([x_coords, y_coords, dates, times, deltas, freq_classes],
                    axis=-1).astype(jnp.int32).reshape(B * S, 6)
    idx = idx + jnp.arange(6, dtype=jnp.int32) * VMAX
    mask_f = padding_mask.astype(jnp.float32)

    out_w = HEAD_PAD + HID_PAD
    kern = functools.partial(cm_bert_kernel, nhead=nhead, num_layers=num_layers,
                             ffn_dim=ffn_dim, vtot=VTOT, head_pad=HEAD_PAD)
    args = (idx, mask_f, prep['w_slab'], prep['b_slab'])

    slab = pl.pallas_call(
        kern,
        grid=(1,),
        in_specs=[_full_spec(a.shape) for a in args],
        out_specs=_full_spec((B, S, out_w)),
        out_shape=jax.ShapeDtypeStruct((B, S, out_w), jnp.float32),
        compiler_params=pltpu.CompilerParams(
            dimension_semantics=("arbitrary",)),
    )(*args)

    x_logits = slab[..., :N_CLASSES]
    y_logits = slab[..., Y_OFF:Y_OFF + N_CLASSES]
    out = slab[..., HEAD_PAD:HEAD_PAD + E]
    return out, x_logits, y_logits


# ------------------------------ pure-JAX reference ---------------------------

def cm_bert_reference(params, x_coords, y_coords, dates, times, deltas,
                      freq_classes, padding_mask, nhead=NHEAD):
    x = (params['x_emb'][x_coords] + params['y_emb'][y_coords] +
         params['date_emb'][dates] + params['time_emb'][times] +
         params['delta_emb'][deltas] + params['freq_emb'][freq_classes])
    B, S, E = x.shape
    Dh = E // nhead
    valid = padding_mask

    def ln(z, w, b):
        mu = z.mean(-1, keepdims=True)
        var = ((z - mu) ** 2).mean(-1, keepdims=True)
        return (z - mu) / jnp.sqrt(var + LN_EPS) * w[0] + b[0]

    for lp in params['layers']:
        qkv = jnp.einsum('bse,fe->bsf', x, lp['in_proj_w']) + lp['in_proj_b'][0]
        q, k, v = qkv[..., :E], qkv[..., E:2 * E], qkv[..., 2 * E:]
        q = q.reshape(B, S, nhead, Dh)
        k = k.reshape(B, S, nhead, Dh)
        v = v.reshape(B, S, nhead, Dh)
        s = jnp.einsum('bqhd,bkhd->bhqk', q, k) / jnp.sqrt(jnp.float32(Dh))
        s = jnp.where(valid[:, None, None, :], s, NEG_INF)
        p = jax.nn.softmax(s, axis=-1)
        attn = jnp.einsum('bhqk,bkhd->bqhd', p, v).reshape(B, S, E)
        attn = jnp.einsum('bse,fe->bsf', attn, lp['out_proj_w']) + lp['out_proj_b'][0]
        x = ln(x + attn, lp['ln1_w'], lp['ln1_b'])
        h = jax.nn.relu(jnp.einsum('bse,fe->bsf', x, lp['lin1_w']) + lp['lin1_b'][0])
        f = jnp.einsum('bsf,ef->bse', h, lp['lin2_w']) + lp['lin2_b'][0]
        x = ln(x + f, lp['ln2_w'], lp['ln2_b'])

    xl = jnp.einsum('bse,ve->bsv', x, params['x_head_w']) + params['x_head_b'][0]
    yl = jnp.einsum('bse,ve->bsv', x, params['y_head_w']) + params['y_head_b'][0]
    return x, xl, yl


# ------------------------------ main -----------------------------------------

if __name__ == "__main__":
    B, S = 2, 8
    key = jax.random.PRNGKey(0)
    pkey, k1, k2, k3, k4, k5, k6 = jax.random.split(key, 7)
    params = init_params(pkey, EMB_DIM, NHEAD, NUM_LAYERS, FFN_DIM)
    prep = prepare_params(params, nhead=NHEAD)

    x_coords = jax.random.randint(k1, (B, S), 0, 202)
    y_coords = jax.random.randint(k2, (B, S), 0, 202)
    dates = jax.random.randint(k3, (B, S), 0, 76)
    times = jax.random.randint(k4, (B, S), 0, 49)
    deltas = jax.random.randint(k5, (B, S), 0, 48)
    freq_classes = jax.random.randint(k6, (B, S), 0, 4)
    padding_mask = jnp.ones((B, S), dtype=bool).at[1, -2:].set(False)

    fwd = jax.jit(cm_bert_forward)
    out, x_logits, y_logits = fwd(prep, x_coords, y_coords, dates, times,
                                  deltas, freq_classes, padding_mask)
    jax.block_until_ready((out, x_logits, y_logits))

    assert out.shape == (B, S, EMB_DIM)
    assert x_logits.shape == (B, S, N_CLASSES)
    assert y_logits.shape == (B, S, N_CLASSES)

    ro, rx, ry = cm_bert_reference(
        params, x_coords, y_coords, dates, times, deltas, freq_classes,
        padding_mask)
    assert bool(jnp.isfinite(out).all())
    assert jnp.allclose(out, ro, atol=2e-2, rtol=2e-2)
    assert jnp.allclose(x_logits, rx, atol=2e-2, rtol=2e-2)
    assert jnp.allclose(y_logits, ry, atol=2e-2, rtol=2e-2)

    print("KERNEL_OK")
</pallas_src>

<mosaic_0001>
module attributes {stable_mosaic.version = 11 : i64} {
  func.func @cm_bert_kernel(%arg0: i32, %arg1: memref<16x6xi32, #tpu.memory_space<vmem>>, %arg2: memref<2x8xf32, #tpu.memory_space<vmem>>, %arg3: memref<2304x32xbf16, #tpu.memory_space<vmem>>, %arg4: memref<24x512xf32, #tpu.memory_space<vmem>>, %arg5: memref<2x8x640xf32, #tpu.memory_space<vmem>>) attributes {dimension_semantics = [#tpu.dimension_semantics<arbitrary>], iteration_bounds = array<i64: 1>, scalar_prefetch = 0 : i64, scratch_operands = 0 : i64, tpu.core_type = #tpu.core_type<tc>, window_params = [{pipeline_mode = #tpu.pipeline_mode<synchronous>, transform_indices = @transform_0, window_bounds = array<i64: 16, 6>}, {pipeline_mode = #tpu.pipeline_mode<synchronous>, transform_indices = @transform_1, window_bounds = array<i64: 2, 8>}, {pipeline_mode = #tpu.pipeline_mode<synchronous>, transform_indices = @transform_2, window_bounds = array<i64: 2304, 32>}, {pipeline_mode = #tpu.pipeline_mode<synchronous>, transform_indices = @transform_3, window_bounds = array<i64: 24, 512>}, {pipeline_mode = #tpu.pipeline_mode<synchronous>, transform_indices = @transform_4, window_bounds = array<i64: 2, 8, 640>}]} {
    %0 = tpu.iota {dimensions = array<i32: 1>} : vector<16x1280xi32>
    %c0 = arith.constant 0 : index
    %c0_0 = arith.constant 0 : index
    %1 = vector.load %arg1[%c0, %c0_0] : memref<16x6xi32, #tpu.memory_space<vmem>>, vector<16x1xi32>
    %2 = vector.broadcast %1 : vector<16x1xi32> to vector<16x1280xi32>
    %3 = arith.cmpi eq, %0, %2 : vector<16x1280xi32>
    %c0_1 = arith.constant 0 : index
    %c1 = arith.constant 1 : index
    %4 = vector.load %arg1[%c0_1, %c1] : memref<16x6xi32, #tpu.memory_space<vmem>>, vector<16x1xi32>
    %5 = vector.broadcast %4 : vector<16x1xi32> to vector<16x1280xi32>
    %6 = arith.cmpi eq, %0, %5 : vector<16x1280xi32>
    %7 = arith.ori %3, %6 : vector<16x1280xi1>
    %c0_2 = arith.constant 0 : index
    %c2 = arith.constant 2 : index
    %8 = vector.load %arg1[%c0_2, %c2] : memref<16x6xi32, #tpu.memory_space<vmem>>, vector<16x1xi32>
    %9 = vector.broadcast %8 : vector<16x1xi32> to vector<16x1280xi32>
    %10 = arith.cmpi eq, %0, %9 : vector<16x1280xi32>
    %11 = arith.ori %7, %10 : vector<16x1280xi1>
    %c0_3 = arith.constant 0 : index
    %c3 = arith.constant 3 : index
    %12 = vector.load %arg1[%c0_3, %c3] : memref<16x6xi32, #tpu.memory_space<vmem>>, vector<16x1xi32>
    %13 = vector.broadcast %12 : vector<16x1xi32> to vector<16x1280xi32>
    %14 = arith.cmpi eq, %0, %13 : vector<16x1280xi32>
    %15 = arith.ori %11, %14 : vector<16x1280xi1>
    %c0_4 = arith.constant 0 : index
    %c4 = arith.constant 4 : index
    %16 = vector.load %arg1[%c0_4, %c4] : memref<16x6xi32, #tpu.memory_space<vmem>>, vector<16x1xi32>
    %17 = vector.broadcast %16 : vector<16x1xi32> to vector<16x1280xi32>
    %18 = arith.cmpi eq, %0, %17 : vector<16x1280xi32>
    %19 = arith.ori %15, %18 : vector<16x1280xi1>
    %c0_5 = arith.constant 0 : index
    %c5 = arith.constant 5 : index
    %20 = vector.load %arg1[%c0_5, %c5] : memref<16x6xi32, #tpu.memory_space<vmem>>, vector<16x1xi32>
    %21 = vector.broadcast %20 : vector<16x1xi32> to vector<16x1280xi32>
    %22 = arith.cmpi eq, %0, %21 : vector<16x1280xi32>
    %23 = arith.ori %19, %22 : vector<16x1280xi1>
    %cst = arith.constant 1.000000e+00 : f32
    %cst_6 = arith.constant 0.000000e+00 : f32
    %24 = vector.broadcast %cst : f32 to vector<16x1280xf32>
    %25 = vector.broadcast %cst_6 : f32 to vector<16x1280xf32>
    %26 = arith.select %23, %24, %25 : vector<16x1280xi1>, vector<16x1280xf32>
    %27 = arith.truncf %26 : vector<16x1280xf32> to vector<16x1280xbf16>
    %c0_7 = arith.constant 0 : index
    %c0_8 = arith.constant 0 : index
    %28 = vector.load %arg3[%c0_7, %c0_8] : memref<2304x32xbf16, #tpu.memory_space<vmem>>, vector<1280x32xbf16>
    %cst_9 = arith.constant dense<0.000000e+00> : vector<16x32xf32>
    %29 = tpu.matmul %27, %28, %cst_9 {dimension_numbers = #tpu.dot_dimension_numbers<[1], [0], [0], [1], [0, 0, 1, 1], [], []>} : vector<16x1280xbf16>, vector<1280x32xbf16>, vector<16x32xf32> -> vector<16x32xf32>
    %c0_10 = arith.constant 0 : index
    %c0_11 = arith.constant 0 : index
    %30 = vector.load %arg2[%c0_10, %c0_11] : memref<2x8xf32, #tpu.memory_space<vmem>>, vector<2x8xf32>
    %cst_12 = arith.constant 5.000000e-01 : f32
    %31 = vector.broadcast %cst_12 : f32 to vector<2x8xf32>
    %32 = arith.cmpf ogt, %30, %31 : vector<2x8xf32>
    %cst_13 = arith.constant 0.000000e+00 : f32
    %cst_14 = arith.constant -1.000000e+30 : f32
    %33 = vector.broadcast %cst_13 : f32 to vector<2x8xf32>
    %34 = vector.broadcast %cst_14 : f32 to vector<2x8xf32>
    %35 = arith.select %32, %33, %34 : vector<2x8xi1>, vector<2x8xf32>
    %36 = vector.shape_cast %35 : vector<2x8xf32> to vector<2x1x8xf32>
    %37 = tpu.concatenate %36, %36, %36, %36 in 0 : vector<2x1x8xf32>, vector<2x1x8xf32>, vector<2x1x8xf32>, vector<2x1x8xf32> -> vector<8x1x8xf32>
    %c1792 = arith.constant 1792 : index
    %c0_15 = arith.constant 0 : index
    %38 = vector.load %arg3[%c1792, %c0_15] : memref<2304x32xbf16, #tpu.memory_space<vmem>>, vector<96x32xbf16>
    %c1888 = arith.constant 1888 : index
    %c0_16 = arith.constant 0 : index
    %39 = vector.load %arg3[%c1888, %c0_16] : memref<2304x32xbf16, #tpu.memory_space<vmem>>, vector<32x32xbf16>
    %c1920 = arith.constant 1920 : index
    %c0_17 = arith.constant 0 : index
    %40 = vector.load %arg3[%c1920, %c0_17] : memref<2304x32xbf16, #tpu.memory_space<vmem>>, vector<64x32xbf16>
    %c1984 = arith.constant 1984 : index
    %c0_18 = arith.constant 0 : index
    %41 = vector.load %arg3[%c1984, %c0_18] : memref<2304x32xbf16, #tpu.memory_space<vmem>>, vector<64x32xbf16>
    %c0_19 = arith.constant 0 : index
    %c0_20 = arith.constant 0 : index
    %42 = vector.load %arg4[%c0_19, %c0_20] : memref<24x512xf32, #tpu.memory_space<vmem>>, vector<8x512xf32>
    %43 = vector.extract_strided_slice %42 {offsets = [0, 0], sizes = [1, 96], strides = [1, 1]} : vector<8x512xf32> to vector<1x96xf32>
    %44 = vector.extract_strided_slice %42 {offsets = [1, 0], sizes = [1, 32], strides = [1, 1]} : vector<8x512xf32> to vector<1x32xf32>
    %45 = vector.extract_strided_slice %42 {offsets = [2, 0], sizes = [1, 32], strides = [1, 1]} : vector<8x512xf32> to vector<1x32xf32>
    %46 = vector.extract_strided_slice %42 {offsets = [3, 0], sizes = [1, 32], strides = [1, 1]} : vector<8x512xf32> to vector<1x32xf32>
    %47 = vector.extract_strided_slice %42 {offsets = [4, 0], sizes = [1, 64], strides = [1, 1]} : vector<8x512xf32> to vector<1x64xf32>
    %48 = vector.extract_strided_slice %42 {offsets = [5, 0], sizes = [1, 32], strides = [1, 1]} : vector<8x512xf32> to vector<1x32xf32>
    %49 = vector.extract_strided_slice %42 {offsets = [6, 0], sizes = [1, 32], strides = [1, 1]} : vector<8x512xf32> to vector<1x32xf32>
    %50 = vector.extract_strided_slice %42 {offsets = [7, 0], sizes = [1, 32], strides = [1, 1]} : vector<8x512xf32> to vector<1x32xf32>
    %51 = arith.truncf %29 : vector<16x32xf32> to vector<16x32xbf16>
    "tpu.trace_start"() <{level = 10 : i32, message = "me,fe->mf"}> : () -> ()
    %cst_21 = arith.constant dense<0.000000e+00> : vector<16x96xf32>
    %52 = tpu.matmul %51, %38, %cst_21 {dimension_numbers = #tpu.dot_dimension_numbers<[1], [1], [0], [0], [0, 0, 1, 0], [], []>} : vector<16x32xbf16>, vector<96x32xbf16>, vector<16x96xf32> -> vector<16x96xf32>
    "tpu.trace_stop"() : () -> ()
    %53 = vector.broadcast %43 : vector<1x96xf32> to vector<16x96xf32>
    %54 = arith.addf %52, %53 : vector<16x96xf32>
    %55 = vector.extract_strided_slice %54 {offsets = [0, 0], sizes = [16, 32], strides = [1, 1]} : vector<16x96xf32> to vector<16x32xf32>
    %56 = vector.extract_strided_slice %55 {offsets = [0, 0], sizes = [16, 8], strides = [1, 1]} : vector<16x32xf32> to vector<16x8xf32>
    %57 = vector.extract_strided_slice %55 {offsets = [0, 8], sizes = [16, 8], strides = [1, 1]} : vector<16x32xf32> to vector<16x8xf32>
    %58 = vector.extract_strided_slice %55 {offsets = [0, 16], sizes = [16, 8], strides = [1, 1]} : vector<16x32xf32> to vector<16x8xf32>
    %59 = vector.extract_strided_slice %55 {offsets = [0, 24], sizes = [16, 8], strides = [1, 1]} : vector<16x32xf32> to vector<16x8xf32>
    %60 = tpu.concatenate %56, %57, %58, %59 in 0 : vector<16x8xf32>, vector<16x8xf32>, vector<16x8xf32>, vector<16x8xf32> -> vector<64x8xf32>
    %61 = vector.shape_cast %60 : vector<64x8xf32> to vector<8x8x8xf32>
    %62 = arith.truncf %61 : vector<8x8x8xf32> to vector<8x8x8xbf16>
    %63 = vector.extract_strided_slice %54 {offsets = [0, 32], sizes = [16, 32], strides = [1, 1]} : vector<16x96xf32> to vector<16x32xf32>
    %64 = vector.extract_strided_slice %63 {offsets = [0, 0], sizes = [16, 8], strides = [1, 1]} : vector<16x32xf32> to vector<16x8xf32>
    %65 = vector.extract_strided_slice %63 {offsets = [0, 8], sizes = [16, 8], strides = [1, 1]} : vector<16x32xf32> to vector<16x8xf32>
    %66 = vector.extract_strided_slice %63 {offsets = [0, 16], sizes = [16, 8], strides = [1, 1]} : vector<16x32xf32> to vector<16x8xf32>
    %67 = vector.extract_strided_slice %63 {offsets = [0, 24], sizes = [16, 8], strides = [1, 1]} : vector<16x32xf32> to vector<16x8xf32>
    %68 = tpu.concatenate %64, %65, %66, %67 in 0 : vector<16x8xf32>, vector<16x8xf32>, vector<16x8xf32>, vector<16x8xf32> -> vector<64x8xf32>
    %69 = vector.shape_cast %68 : vector<64x8xf32> to vector<8x8x8xf32>
    %70 = arith.truncf %69 : vector<8x8x8xf32> to vector<8x8x8xbf16>
    %71 = vector.extract_strided_slice %54 {offsets = [0, 64], sizes = [16, 32], strides = [1, 1]} : vector<16x96xf32> to vector<16x32xf32>
    %72 = vector.extract_strided_slice %71 {offsets = [0, 0], sizes = [16, 8], strides = [1, 1]} : vector<16x32xf32> to vector<16x8xf32>
    %73 = vector.extract_strided_slice %71 {offsets = [0, 8], sizes = [16, 8], strides = [1, 1]} : vector<16x32xf32> to vector<16x8xf32>
    %74 = vector.extract_strided_slice %71 {offsets = [0, 16], sizes = [16, 8], strides = [1, 1]} : vector<16x32xf32> to vector<16x8xf32>
    %75 = vector.extract_strided_slice %71 {offsets = [0, 24], sizes = [16, 8], strides = [1, 1]} : vector<16x32xf32> to vector<16x8xf32>
    %76 = tpu.concatenate %72, %73, %74, %75 in 0 : vector<16x8xf32>, vector<16x8xf32>, vector<16x8xf32>, vector<16x8xf32> -> vector<64x8xf32>
    %77 = vector.shape_cast %76 : vector<64x8xf32> to vector<8x8x8xf32>
    %78 = arith.truncf %77 : vector<8x8x8xf32> to vector<8x8x8xbf16>
    "tpu.trace_start"() <{level = 10 : i32, message = "nqd,nkd->nqk"}> : () -> ()
    %cst_22 = arith.constant dense<0.000000e+00> : vector<8x8x8xf32>
    %79 = tpu.matmul %62, %70, %cst_22 {dimension_numbers = #tpu.dot_dimension_numbers<[2], [2], [1], [1], [0, 0, 0, 1, 1, 1], [0], [0]>} : vector<8x8x8xbf16>, vector<8x8x8xbf16>, vector<8x8x8xf32> -> vector<8x8x8xf32>
    "tpu.trace_stop"() : () -> ()
    %80 = vector.broadcast %37 : vector<8x1x8xf32> to vector<8x8x8xf32>
    %81 = arith.addf %79, %80 : vector<8x8x8xf32>
    %cst_23 = arith.constant dense<0xFF800000> : vector<8x8xf32>
    %82 = vector.multi_reduction <maximumf>, %81, %cst_23 [2] : vector<8x8x8xf32> to vector<8x8xf32>
    %83 = vector.shape_cast %82 : vector<8x8xf32> to vector<8x8x1xf32>
    %84 = vector.broadcast %83 : vector<8x8x1xf32> to vector<8x8x8xf32>
    %85 = arith.subf %81, %84 : vector<8x8x8xf32>
    %86 = math.exp %85 : vector<8x8x8xf32>
    %cst_24 = arith.constant dense<0.000000e+00> : vector<8x8xf32>
    %87 = vector.multi_reduction <add>, %86, %cst_24 [2] : vector<8x8x8xf32> to vector<8x8xf32>
    %88 = vector.shape_cast %87 : vector<8x8xf32> to vector<8x8x1xf32>
    %89 = arith.truncf %86 : vector<8x8x8xf32> to vector<8x8x8xbf16>
    "tpu.trace_start"() <{level = 10 : i32, message = "nqk,nkd->nqd"}> : () -> ()
    %cst_25 = arith.constant dense<0.000000e+00> : vector<8x8x8xf32>
    %90 = tpu.matmul %89, %78, %cst_25 {dimension_numbers = #tpu.dot_dimension_numbers<[2], [1], [1], [2], [0, 0, 0, 1, 1, 2], [0], [0]>} : vector<8x8x8xbf16>, vector<8x8x8xbf16>, vector<8x8x8xf32> -> vector<8x8x8xf32>
    "tpu.trace_stop"() : () -> ()
    %91 = tpu.reciprocal %88 {approx = true} : vector<8x8x1xf32> -> vector<8x8x1xf32>
    %92 = vector.broadcast %91 : vector<8x8x1xf32> to vector<8x8x8xf32>
    %93 = arith.mulf %90, %92 : vector<8x8x8xf32>
    %94 = vector.shape_cast %93 : vector<8x8x8xf32> to vector<64x8xf32>
    %95 = vector.extract_strided_slice %94 {offsets = [0, 0], sizes = [16, 8], strides = [1, 1]} : vector<64x8xf32> to vector<16x8xf32>
    %96 = vector.extract_strided_slice %94 {offsets = [16, 0], sizes = [16, 8], strides = [1, 1]} : vector<64x8xf32> to vector<16x8xf32>
    %97 = vector.extract_strided_slice %94 {offsets = [32, 0], sizes = [16, 8], strides = [1, 1]} : vector<64x8xf32> to vector<16x8xf32>
    %98 = vector.extract_strided_slice %94 {offsets = [48, 0], sizes = [16, 8], strides = [1, 1]} : vector<64x8xf32> to vector<16x8xf32>
    %99 = tpu.concatenate %95, %96, %97, %98 in 1 : vector<16x8xf32>, vector<16x8xf32>, vector<16x8xf32>, vector<16x8xf32> -> vector<16x32xf32>
    %100 = arith.truncf %99 : vector<16x32xf32> to vector<16x32xbf16>
    "tpu.trace_start"() <{level = 10 : i32, message = "md,fd->mf"}> : () -> ()
    %cst_26 = arith.constant dense<0.000000e+00> : vector<16x32xf32>
    %101 = tpu.matmul %100, %39, %cst_26 {dimension_numbers = #tpu.dot_dimension_numbers<[1], [1], [0], [0], [0, 0, 1, 0], [], []>} : vector<16x32xbf16>, vector<32x32xbf16>, vector<16x32xf32> -> vector<16x32xf32>
    "tpu.trace_stop"() : () -> ()
    %102 = vector.broadcast %44 : vector<1x32xf32> to vector<16x32xf32>
    %103 = arith.addf %101, %102 : vector<16x32xf32>
    %104 = arith.addf %29, %103 : vector<16x32xf32>
    %cst_27 = arith.constant dense<0.000000e+00> : vector<16xf32>
    %105 = vector.multi_reduction <add>, %104, %cst_27 [1] : vector<16x32xf32> to vector<16xf32>
    %106 = vector.shape_cast %105 : vector<16xf32> to vector<16x1xf32>
    %cst_28 = arith.constant 3.200000e+01 : f32
    %107 = vector.broadcast %cst_28 : f32 to vector<16x1xf32>
    %108 = arith.divf %106, %107 : vector<16x1xf32>
    %109 = vector.broadcast %108 : vector<16x1xf32> to vector<16x32xf32>
    %110 = arith.subf %104, %109 : vector<16x32xf32>
    %111 = arith.mulf %110, %110 : vector<16x32xf32>
    %cst_29 = arith.constant dense<0.000000e+00> : vector<16xf32>
    %112 = vector.multi_reduction <add>, %111, %cst_29 [1] : vector<16x32xf32> to vector<16xf32>
    %113 = vector.shape_cast %112 : vector<16xf32> to vector<16x1xf32>
    %cst_30 = arith.constant 3.200000e+01 : f32
    %114 = vector.broadcast %cst_30 : f32 to vector<16x1xf32>
    %115 = arith.divf %113, %114 : vector<16x1xf32>
    %116 = vector.broadcast %108 : vector<16x1xf32> to vector<16x32xf32>
    %117 = arith.subf %104, %116 : vector<16x32xf32>
    %cst_31 = arith.constant 9.99999974E-6 : f32
    %118 = vector.broadcast %cst_31 : f32 to vector<16x1xf32>
    %119 = arith.addf %115, %118 : vector<16x1xf32>
    %120 = math.rsqrt %119 : vector<16x1xf32>
    %121 = vector.broadcast %120 : vector<16x1xf32> to vector<16x32xf32>
    %122 = arith.mulf %117, %121 : vector<16x32xf32>
    %123 = vector.broadcast %45 : vector<1x32xf32> to vector<16x32xf32>
    %124 = arith.mulf %122, %123 : vector<16x32xf32>
    %125 = vector.broadcast %46 : vector<1x32xf32> to vector<16x32xf32>
    %126 = arith.addf %124, %125 : vector<16x32xf32>
    %127 = arith.truncf %126 : vector<16x32xf32> to vector<16x32xbf16>
    "tpu.trace_start"() <{level = 10 : i32, message = "me,fe->mf"}> : () -> ()
    %cst_32 = arith.constant dense<0.000000e+00> : vector<16x64xf32>
    %128 = tpu.matmul %127, %40, %cst_32 {dimension_numbers = #tpu.dot_dimension_numbers<[1], [1], [0], [0], [0, 0, 1, 0], [], []>} : vector<16x32xbf16>, vector<64x32xbf16>, vector<16x64xf32> -> vector<16x64xf32>
    "tpu.trace_stop"() : () -> ()
    %129 = vector.broadcast %47 : vector<1x64xf32> to vector<16x64xf32>
    %130 = arith.addf %128, %129 : vector<16x64xf32>
    %cst_33 = arith.constant 0.000000e+00 : f32
    %131 = vector.broadcast %cst_33 : f32 to vector<16x64xf32>
    %132 = arith.maximumf %130, %131 : vector<16x64xf32>
    %133 = arith.truncf %132 : vector<16x64xf32> to vector<16x64xbf16>
    %cst_34 = arith.constant dense<0.000000e+00> : vector<16x32xf32>
    %134 = tpu.matmul %133, %41, %cst_34 {dimension_numbers = #tpu.dot_dimension_numbers<[1], [0], [0], [1], [0, 0, 1, 1], [], []>} : vector<16x64xbf16>, vector<64x32xbf16>, vector<16x32xf32> -> vector<16x32xf32>
    %135 = vector.broadcast %48 : vector<1x32xf32> to vector<16x32xf32>
    %136 = arith.addf %134, %135 : vector<16x32xf32>
    %137 = arith.addf %126, %136 : vector<16x32xf32>
    %cst_35 = arith.constant dense<0.000000e+00> : vector<16xf32>
    %138 = vector.multi_reduction <add>, %137, %cst_35 [1] : vector<16x32xf32> to vector<16xf32>
    %139 = vector.shape_cast %138 : vector<16xf32> to vector<16x1xf32>
    %cst_36 = arith.constant 3.200000e+01 : f32
    %140 = vector.broadcast %cst_36 : f32 to vector<16x1xf32>
    %141 = arith.divf %139, %140 : vector<16x1xf32>
    %142 = vector.broadcast %141 : vector<16x1xf32> to vector<16x32xf32>
    %143 = arith.subf %137, %142 : vector<16x32xf32>
    %144 = arith.mulf %143, %143 : vector<16x32xf32>
    %cst_37 = arith.constant dense<0.000000e+00> : vector<16xf32>
    %145 = vector.multi_reduction <add>, %144, %cst_37 [1] : vector<16x32xf32> to vector<16xf32>
    %146 = vector.shape_cast %145 : vector<16xf32> to vector<16x1xf32>
    %cst_38 = arith.constant 3.200000e+01 : f32
    %147 = vector.broadcast %cst_38 : f32 to vector<16x1xf32>
    %148 = arith.divf %146, %147 : vector<16x1xf32>
    %149 = vector.broadcast %141 : vector<16x1xf32> to vector<16x32xf32>
    %150 = arith.subf %137, %149 : vector<16x32xf32>
    %cst_39 = arith.constant 9.99999974E-6 : f32
    %151 = vector.broadcast %cst_39 : f32 to vector<16x1xf32>
    %152 = arith.addf %148, %151 : vector<16x1xf32>
    %153 = math.rsqrt %152 : vector<16x1xf32>
    %154 = vector.broadcast %153 : vector<16x1xf32> to vector<16x32xf32>
    %155 = arith.mulf %150, %154 : vector<16x32xf32>
    %156 = vector.broadcast %49 : vector<1x32xf32> to vector<16x32xf32>
    %157 = arith.mulf %155, %156 : vector<16x32xf32>
    %158 = vector.broadcast %50 : vector<1x32xf32> to vector<16x32xf32>
    %159 = arith.addf %157, %158 : vector<16x32xf32>
    %c2048 = arith.constant 2048 : index
    %c0_40 = arith.constant 0 : index
    %160 = vector.load %arg3[%c2048, %c0_40] : memref<2304x32xbf16, #tpu.memory_space<vmem>>, vector<96x32xbf16>
    %c2144 = arith.constant 2144 : index
    %c0_41 = arith.constant 0 : index
    %161 = vector.load %arg3[%c2144, %c0_41] : memref<2304x32xbf16, #tpu.memory_space<vmem>>, vector<32x32xbf16>
    %c2176 = arith.constant 2176 : index
    %c0_42 = arith.constant 0 : index
    %162 = vector.load %arg3[%c2176, %c0_42] : memref<2304x32xbf16, #tpu.memory_space<vmem>>, vector<64x32xbf16>
    %c2240 = arith.constant 2240 : index
    %c0_43 = arith.constant 0 : index
    %163 = vector.load %arg3[%c2240, %c0_43] : memref<2304x32xbf16, #tpu.memory_space<vmem>>, vector<64x32xbf16>
    %c8 = arith.constant 8 : index
    %c0_44 = arith.constant 0 : index
    %164 = vector.load %arg4[%c8, %c0_44] : memref<24x512xf32, #tpu.memory_space<vmem>>, vector<8x512xf32>
    %165 = vector.extract_strided_slice %164 {offsets = [0, 0], sizes = [1, 96], strides = [1, 1]} : vector<8x512xf32> to vector<1x96xf32>
    %166 = vector.extract_strided_slice %164 {offsets = [1, 0], sizes = [1, 32], strides = [1, 1]} : vector<8x512xf32> to vector<1x32xf32>
    %167 = vector.extract_strided_slice %164 {offsets = [2, 0], sizes = [1, 32], strides = [1, 1]} : vector<8x512xf32> to vector<1x32xf32>
    %168 = vector.extract_strided_slice %164 {offsets = [3, 0], sizes = [1, 32], strides = [1, 1]} : vector<8x512xf32> to vector<1x32xf32>
    %169 = vector.extract_strided_slice %164 {offsets = [4, 0], sizes = [1, 64], strides = [1, 1]} : vector<8x512xf32> to vector<1x64xf32>
    %170 = vector.extract_strided_slice %164 {offsets = [5, 0], sizes = [1, 32], strides = [1, 1]} : vector<8x512xf32> to vector<1x32xf32>
    %171 = vector.extract_strided_slice %164 {offsets = [6, 0], sizes = [1, 32], strides = [1, 1]} : vector<8x512xf32> to vector<1x32xf32>
    %172 = vector.extract_strided_slice %164 {offsets = [7, 0], sizes = [1, 32], strides = [1, 1]} : vector<8x512xf32> to vector<1x32xf32>
    %173 = arith.truncf %159 : vector<16x32xf32> to vector<16x32xbf16>
    "tpu.trace_start"() <{level = 10 : i32, message = "me,fe->mf"}> : () -> ()
    %cst_45 = arith.constant dense<0.000000e+00> : vector<16x96xf32>
    %174 = tpu.matmul %173, %160, %cst_45 {dimension_numbers = #tpu.dot_dimension_numbers<[1], [1], [0], [0], [0, 0, 1, 0], [], []>} : vector<16x32xbf16>, vector<96x32xbf16>, vector<16x96xf32> -> vector<16x96xf32>
    "tpu.trace_stop"() : () -> ()
    %175 = vector.broadcast %165 : vector<1x96xf32> to vector<16x96xf32>
    %176 = arith.addf %174, %175 : vector<16x96xf32>
    %177 = vector.extract_strided_slice %176 {offsets = [0, 0], sizes = [16, 32], strides = [1, 1]} : vector<16x96xf32> to vector<16x32xf32>
    %178 = vector.extract_strided_slice %177 {offsets = [0, 0], sizes = [16, 8], strides = [1, 1]} : vector<16x32xf32> to vector<16x8xf32>
    %179 = vector.extract_strided_slice %177 {offsets = [0, 8], sizes = [16, 8], strides = [1, 1]} : vector<16x32xf32> to vector<16x8xf32>
    %180 = vector.extract_strided_slice %177 {offsets = [0, 16], sizes = [16, 8], strides = [1, 1]} : vector<16x32xf32> to vector<16x8xf32>
    %181 = vector.extract_strided_slice %177 {offsets = [0, 24], sizes = [16, 8], strides = [1, 1]} : vector<16x32xf32> to vector<16x8xf32>
    %182 = tpu.concatenate %178, %179, %180, %181 in 0 : vector<16x8xf32>, vector<16x8xf32>, vector<16x8xf32>, vector<16x8xf32> -> vector<64x8xf32>
    %183 = vector.shape_cast %182 : vector<64x8xf32> to vector<8x8x8xf32>
    %184 = arith.truncf %183 : vector<8x8x8xf32> to vector<8x8x8xbf16>
    %185 = vector.extract_strided_slice %176 {offsets = [0, 32], sizes = [16, 32], strides = [1, 1]} : vector<16x96xf32> to vector<16x32xf32>
    %186 = vector.extract_strided_slice %185 {offsets = [0, 0], sizes = [16, 8], strides = [1, 1]} : vector<16x32xf32> to vector<16x8xf32>
    %187 = vector.extract_strided_slice %185 {offsets = [0, 8], sizes = [16, 8], strides = [1, 1]} : vector<16x32xf32> to vector<16x8xf32>
    %188 = vector.extract_strided_slice %185 {offsets = [0, 16], sizes = [16, 8], strides = [1, 1]} : vector<16x32xf32> to vector<16x8xf32>
    %189 = vector.extract_strided_slice %185 {offsets = [0, 24], sizes = [16, 8], strides = [1, 1]} : vector<16x32xf32> to vector<16x8xf32>
    %190 = tpu.concatenate %186, %187, %188, %189 in 0 : vector<16x8xf32>, vector<16x8xf32>, vector<16x8xf32>, vector<16x8xf32> -> vector<64x8xf32>
    %191 = vector.shape_cast %190 : vector<64x8xf32> to vector<8x8x8xf32>
    %192 = arith.truncf %191 : vector<8x8x8xf32> to vector<8x8x8xbf16>
    %193 = vector.extract_strided_slice %176 {offsets = [0, 64], sizes = [16, 32], strides = [1, 1]} : vector<16x96xf32> to vector<16x32xf32>
    %194 = vector.extract_strided_slice %193 {offsets = [0, 0], sizes = [16, 8], strides = [1, 1]} : vector<16x32xf32> to vector<16x8xf32>
    %195 = vector.extract_strided_slice %193 {offsets = [0, 8], sizes = [16, 8], strides = [1, 1]} : vector<16x32xf32> to vector<16x8xf32>
    %196 = vector.extract_strided_slice %193 {offsets = [0, 16], sizes = [16, 8], strides = [1, 1]} : vector<16x32xf32> to vector<16x8xf32>
    %197 = vector.extract_strided_slice %193 {offsets = [0, 24], sizes = [16, 8], strides = [1, 1]} : vector<16x32xf32> to vector<16x8xf32>
    %198 = tpu.concatenate %194, %195, %196, %197 in 0 : vector<16x8xf32>, vector<16x8xf32>, vector<16x8xf32>, vector<16x8xf32> -> vector<64x8xf32>
    %199 = vector.shape_cast %198 : vector<64x8xf32> to vector<8x8x8xf32>
    %200 = arith.truncf %199 : vector<8x8x8xf32> to vector<8x8x8xbf16>
    "tpu.trace_start"() <{level = 10 : i32, message = "nqd,nkd->nqk"}> : () -> ()
    %cst_46 = arith.constant dense<0.000000e+00> : vector<8x8x8xf32>
    %201 = tpu.matmul %184, %192, %cst_46 {dimension_numbers = #tpu.dot_dimension_numbers<[2], [2], [1], [1], [0, 0, 0, 1, 1, 1], [0], [0]>} : vector<8x8x8xbf16>, vector<8x8x8xbf16>, vector<8x8x8xf32> -> vector<8x8x8xf32>
    "tpu.trace_stop"() : () -> ()
    %202 = vector.broadcast %37 : vector<8x1x8xf32> to vector<8x8x8xf32>
    %203 = arith.addf %201, %202 : vector<8x8x8xf32>
    %cst_47 = arith.constant dense<0xFF800000> : vector<8x8xf32>
    %204 = vector.multi_reduction <maximumf>, %203, %cst_47 [2] : vector<8x8x8xf32> to vector<8x8xf32>
    %205 = vector.shape_cast %204 : vector<8x8xf32> to vector<8x8x1xf32>
    %206 = vector.broadcast %205 : vector<8x8x1xf32> to vector<8x8x8xf32>
    %207 = arith.subf %203, %206 : vector<8x8x8xf32>
    %208 = math.exp %207 : vector<8x8x8xf32>
    %cst_48 = arith.constant dense<0.000000e+00> : vector<8x8xf32>
    %209 = vector.multi_reduction <add>, %208, %cst_48 [2] : vector<8x8x8xf32> to vector<8x8xf32>
    %210 = vector.shape_cast %209 : vector<8x8xf32> to vector<8x8x1xf32>
    %211 = arith.truncf %208 : vector<8x8x8xf32> to vector<8x8x8xbf16>
    "tpu.trace_start"() <{level = 10 : i32, message = "nqk,nkd->nqd"}> : () -> ()
    %cst_49 = arith.constant dense<0.000000e+00> : vector<8x8x8xf32>
    %212 = tpu.matmul %211, %200, %cst_49 {dimension_numbers = #tpu.dot_dimension_numbers<[2], [1], [1], [2], [0, 0, 0, 1, 1, 2], [0], [0]>} : vector<8x8x8xbf16>, vector<8x8x8xbf16>, vector<8x8x8xf32> -> vector<8x8x8xf32>
    "tpu.trace_stop"() : () -> ()
    %213 = tpu.reciprocal %210 {approx = true} : vector<8x8x1xf32> -> vector<8x8x1xf32>
    %214 = vector.broadcast %213 : vector<8x8x1xf32> to vector<8x8x8xf32>
    %215 = arith.mulf %212, %214 : vector<8x8x8xf32>
    %216 = vector.shape_cast %215 : vector<8x8x8xf32> to vector<64x8xf32>
    %217 = vector.extract_strided_slice %216 {offsets = [0, 0], sizes = [16, 8], strides = [1, 1]} : vector<64x8xf32> to vector<16x8xf32>
    %218 = vector.extract_strided_slice %216 {offsets = [16, 0], sizes = [16, 8], strides = [1, 1]} : vector<64x8xf32> to vector<16x8xf32>
    %219 = vector.extract_strided_slice %216 {offsets = [32, 0], sizes = [16, 8], strides = [1, 1]} : vector<64x8xf32> to vector<16x8xf32>
    %220 = vector.extract_strided_slice %216 {offsets = [48, 0], sizes = [16, 8], strides = [1, 1]} : vector<64x8xf32> to vector<16x8xf32>
    %221 = tpu.concatenate %217, %218, %219, %220 in 1 : vector<16x8xf32>, vector<16x8xf32>, vector<16x8xf32>, vector<16x8xf32> -> vector<16x32xf32>
    %222 = arith.truncf %221 : vector<16x32xf32> to vector<16x32xbf16>
    "tpu.trace_start"() <{level = 10 : i32, message = "md,fd->mf"}> : () -> ()
    %cst_50 = arith.constant dense<0.000000e+00> : vector<16x32xf32>
    %223 = tpu.matmul %222, %161, %cst_50 {dimension_numbers = #tpu.dot_dimension_numbers<[1], [1], [0], [0], [0, 0, 1, 0], [], []>} : vector<16x32xbf16>, vector<32x32xbf16>, vector<16x32xf32> -> vector<16x32xf32>
    "tpu.trace_stop"() : () -> ()
    %224 = vector.broadcast %166 : vector<1x32xf32> to vector<16x32xf32>
    %225 = arith.addf %223, %224 : vector<16x32xf32>
    %226 = arith.addf %159, %225 : vector<16x32xf32>
    %cst_51 = arith.constant dense<0.000000e+00> : vector<16xf32>
    %227 = vector.multi_reduction <add>, %226, %cst_51 [1] : vector<16x32xf32> to vector<16xf32>
    %228 = vector.shape_cast %227 : vector<16xf32> to vector<16x1xf32>
    %cst_52 = arith.constant 3.200000e+01 : f32
    %229 = vector.broadcast %cst_52 : f32 to vector<16x1xf32>
    %230 = arith.divf %228, %229 : vector<16x1xf32>
    %231 = vector.broadcast %230 : vector<16x1xf32> to vector<16x32xf32>
    %232 = arith.subf %226, %231 : vector<16x32xf32>
    %233 = arith.mulf %232, %232 : vector<16x32xf32>
    %cst_53 = arith.constant dense<0.000000e+00> : vector<16xf32>
    %234 = vector.multi_reduction <add>, %233, %cst_53 [1] : vector<16x32xf32> to vector<16xf32>
    %235 = vector.shape_cast %234 : vector<16xf32> to vector<16x1xf32>
    %cst_54 = arith.constant 3.200000e+01 : f32
    %236 = vector.broadcast %cst_54 : f32 to vector<16x1xf32>
    %237 = arith.divf %235, %236 : vector<16x1xf32>
    %238 = vector.broadcast %230 : vector<16x1xf32> to vector<16x32xf32>
    %239 = arith.subf %226, %238 : vector<16x32xf32>
    %cst_55 = arith.constant 9.99999974E-6 : f32
    %240 = vector.broadcast %cst_55 : f32 to vector<16x1xf32>
    %241 = arith.addf %237, %240 : vector<16x1xf32>
    %242 = math.rsqrt %241 : vector<16x1xf32>
    %243 = vector.broadcast %242 : vector<16x1xf32> to vector<16x32xf32>
    %244 = arith.mulf %239, %243 : vector<16x32xf32>
    %245 = vector.broadcast %167 : vector<1x32xf32> to vector<16x32xf32>
    %246 = arith.mulf %244, %245 : vector<16x32xf32>
    %247 = vector.broadcast %168 : vector<1x32xf32> to vector<16x32xf32>
    %248 = arith.addf %246, %247 : vector<16x32xf32>
    %249 = arith.truncf %248 : vector<16x32xf32> to vector<16x32xbf16>
    "tpu.trace_start"() <{level = 10 : i32, message = "me,fe->mf"}> : () -> ()
    %cst_56 = arith.constant dense<0.000000e+00> : vector<16x64xf32>
    %250 = tpu.matmul %249, %162, %cst_56 {dimension_numbers = #tpu.dot_dimension_numbers<[1], [1], [0], [0], [0, 0, 1, 0], [], []>} : vector<16x32xbf16>, vector<64x32xbf16>, vector<16x64xf32> -> vector<16x64xf32>
    "tpu.trace_stop"() : () -> ()
    %251 = vector.broadcast %169 : vector<1x64xf32> to vector<16x64xf32>
    %252 = arith.addf %250, %251 : vector<16x64xf32>
    %cst_57 = arith.constant 0.000000e+00 : f32
    %253 = vector.broadcast %cst_57 : f32 to vector<16x64xf32>
    %254 = arith.maximumf %252, %253 : vector<16x64xf32>
    %255 = arith.truncf %254 : vector<16x64xf32> to vector<16x64xbf16>
    %cst_58 = arith.constant dense<0.000000e+00> : vector<16x32xf32>
    %256 = tpu.matmul %255, %163, %cst_58 {dimension_numbers = #tpu.dot_dimension_numbers<[1], [0], [0], [1], [0, 0, 1, 1], [], []>} : vector<16x64xbf16>, vector<64x32xbf16>, vector<16x32xf32> -> vector<16x32xf32>
    %257 = vector.broadcast %170 : vector<1x32xf32> to vector<16x32xf32>
    %258 = arith.addf %256, %257 : vector<16x32xf32>
    %259 = arith.addf %248, %258 : vector<16x32xf32>
    %cst_59 = arith.constant dense<0.000000e+00> : vector<16xf32>
    %260 = vector.multi_reduction <add>, %259, %cst_59 [1] : vector<16x32xf32> to vector<16xf32>
    %261 = vector.shape_cast %260 : vector<16xf32> to vector<16x1xf32>
    %cst_60 = arith.constant 3.200000e+01 : f32
    %262 = vector.broadcast %cst_60 : f32 to vector<16x1xf32>
    %263 = arith.divf %261, %262 : vector<16x1xf32>
    %264 = vector.broadcast %263 : vector<16x1xf32> to vector<16x32xf32>
    %265 = arith.subf %259, %264 : vector<16x32xf32>
    %266 = arith.mulf %265, %265 : vector<16x32xf32>
    %cst_61 = arith.constant dense<0.000000e+00> : vector<16xf32>
    %267 = vector.multi_reduction <add>, %266, %cst_61 [1] : vector<16x32xf32> to vector<16xf32>
    %268 = vector.shape_cast %267 : vector<16xf32> to vector<16x1xf32>
    %cst_62 = arith.constant 3.200000e+01 : f32
    %269 = vector.broadcast %cst_62 : f32 to vector<16x1xf32>
    %270 = arith.divf %268, %269 : vector<16x1xf32>
    %271 = vector.broadcast %263 : vector<16x1xf32> to vector<16x32xf32>
    %272 = arith.subf %259, %271 : vector<16x32xf32>
    %cst_63 = arith.constant 9.99999974E-6 : f32
    %273 = vector.broadcast %cst_63 : f32 to vector<16x1xf32>
    %274 = arith.addf %270, %273 : vector<16x1xf32>
    %275 = math.rsqrt %274 : vector<16x1xf32>
    %276 = vector.broadcast %275 : vector<16x1xf32> to vector<16x32xf32>
    %277 = arith.mulf %272, %276 : vector<16x32xf32>
    %278 = vector.broadcast %171 : vector<1x32xf32> to vector<16x32xf32>
    %279 = arith.mulf %277, %278 : vector<16x32xf32>
    %280 = vector.broadcast %172 : vector<1x32xf32> to vector<16x32xf32>
    %281 = arith.addf %279, %280 : vector<16x32xf32>
    %c1280 = arith.constant 1280 : index
    %c0_64 = arith.constant 0 : index
    %282 = vector.load %arg3[%c1280, %c0_64] : memref<2304x32xbf16, #tpu.memory_space<vmem>>, vector<512x32xbf16>
    %c16 = arith.constant 16 : index
    %c0_65 = arith.constant 0 : index
    %283 = vector.load %arg4[%c16, %c0_65] : memref<24x512xf32, #tpu.memory_space<vmem>>, vector<1x512xf32>
    %284 = arith.truncf %281 : vector<16x32xf32> to vector<16x32xbf16>
    "tpu.trace_start"() <{level = 10 : i32, message = "me,ve->mv"}> : () -> ()
    %cst_66 = arith.constant dense<0.000000e+00> : vector<16x512xf32>
    %285 = tpu.matmul %284, %282, %cst_66 {dimension_numbers = #tpu.dot_dimension_numbers<[1], [1], [0], [0], [0, 0, 1, 0], [], []>} : vector<16x32xbf16>, vector<512x32xbf16>, vector<16x512xf32> -> vector<16x512xf32>
    "tpu.trace_stop"() : () -> ()
    %286 = vector.broadcast %283 : vector<1x512xf32> to vector<16x512xf32>
    %287 = arith.addf %285, %286 : vector<16x512xf32>
    %288 = vector.shape_cast %287 : vector<16x512xf32> to vector<2x8x512xf32>
    %c0_67 = arith.constant 0 : index
    %c0_68 = arith.constant 0 : index
    %c0_69 = arith.constant 0 : index
    %289 = vector.load %arg5[%c0_67, %c0_68, %c0_69] : memref<2x8x640xf32, #tpu.memory_space<vmem>>, vector<2x8x512xf32>
    tpu.vector_store %arg5[%c0_67, %c0_68, %c0_69], %288 {strides = array<i32>} : memref<2x8x640xf32, #tpu.memory_space<vmem>>, vector<2x8x512xf32>,
    %cst_70 = arith.constant 0.000000e+00 : f32
    %290 = vector.broadcast %cst_70 : f32 to vector<16x96xf32>
    %291 = tpu.concatenate %281, %290 in 1 : vector<16x32xf32>, vector<16x96xf32> -> vector<16x128xf32>
    %292 = vector.shape_cast %291 : vector<16x128xf32> to vector<2x8x128xf32>
    %c0_71 = arith.constant 0 : index
    %c0_72 = arith.constant 0 : index
    %c512 = arith.constant 512 : index
    %293 = vector.load %arg5[%c0_71, %c0_72, %c512] : memref<2x8x640xf32, #tpu.memory_space<vmem>>, vector<2x8x128xf32>
    tpu.vector_store %arg5[%c0_71, %c0_72, %c512], %292 {strides = array<i32>} : memref<2x8x640xf32, #tpu.memory_space<vmem>>, vector<2x8x128xf32>,
    return
  }
  func.func @transform_0(%arg0: i32) -> (i32, i32) {
    %c0_i32 = arith.constant 0 : i32
    %c0_i32_0 = arith.constant 0 : i32
    %c0_i32_1 = arith.constant 0 : i32
    return %c0_i32, %c0_i32_0 : i32, i32
  }
  func.func @transform_1(%arg0: i32) -> (i32, i32) {
    %c0_i32 = arith.constant 0 : i32
    %c0_i32_0 = arith.constant 0 : i32
    %c0_i32_1 = arith.constant 0 : i32
    return %c0_i32, %c0_i32_0 : i32, i32
  }
  func.func @transform_2(%arg0: i32) -> (i32, i32) {
    %c0_i32 = arith.constant 0 : i32
    %c0_i32_0 = arith.constant 0 : i32
    %c0_i32_1 = arith.constant 0 : i32
    return %c0_i32, %c0_i32_0 : i32, i32
  }
  func.func @transform_3(%arg0: i32) -> (i32, i32) {
    %c0_i32 = arith.constant 0 : i32
    %c0_i32_0 = arith.constant 0 : i32
    %c0_i32_1 = arith.constant 0 : i32
    return %c0_i32, %c0_i32_0 : i32, i32
  }
  func.func @transform_4(%arg0: i32) -> (i32, i32, i32) {
    %c0_i32 = arith.constant 0 : i32
    %c0_i32_0 = arith.constant 0 : i32
    %c0_i32_1 = arith.constant 0 : i32
    %c0_i32_2 = arith.constant 0 : i32
    return %c0_i32, %c0_i32_0, %c0_i32_1 : i32, i32, i32
  }
}

</mosaic_0001>

<llo_original>
// kernel: cm_bert_forward.1
$region0: #{cm_bert_forward.1}
  #allocation0 [shape = 'u32[]', space=smem, size = 0x4, offset = 0x4, fixed_abs, tag = 'smem constant byte address 0x4 - core index']
  #allocation1 [shape = 'u32[72,128]{1,0:T(1,128)}', space=vmem, size = 0x9000, scoped, tag = 'internal scratch']
  %s0 = inlined_call_operand.vmem [shape: s32[16,6], index: 0, kind: input, shape index: {}]
  %s1 = inlined_call_operand.vmem [shape: f32[2,8], index: 1, kind: input, shape index: {}]
  %s2 = inlined_call_operand.vmem [shape: bf16[2304,32], index: 2, kind: input, shape index: {}]
  %s3 = inlined_call_operand.vmem [shape: f32[24,512], index: 3, kind: input, shape index: {}]
  %s4 = inlined_call_operand.vmem [shape: f32[2,8,640], index: 4, kind: output, shape index: {}]
  %s5 = sld [smem:[#allocation0]]
  $region26: #{cm_bert_forward.1} parent=0
    _
  %s7 = ssub.s32 1, %s5
  %s8 = scalar_select 0, %s7, %s5
  // Predicated region
  $region2: #{cm_bert_forward.1} parent=0 // pred_check
    _
  $region3: #{cm_bert_forward.1} parent=0 // pred_check_branch
    %10 = sbr.rel (0) target = $region5
  $region4: #{cm_bert_forward.1} parent=0 // pred_region
    _
  $region5: #{cm_bert_forward.1} parent=0 // pred_fallthru
    _
  // Predicated region
  $region6: #{cm_bert_forward.1} parent=0 // pred_check
    _
  $region7: #{cm_bert_forward.1} parent=0 // pred_check_branch
    %12 = sbr.rel (0) target = $region9
  $region8: #{cm_bert_forward.1} parent=0 // pred_region
    _
  $region9: #{cm_bert_forward.1} parent=0 // pred_fallthru
    _
  // Predicated region
  $region10: #{cm_bert_forward.1} parent=0 // pred_check
    _
  $region11: #{cm_bert_forward.1} parent=0 // pred_check_branch
    %14 = sbr.rel (0) target = $region13
  $region12: #{cm_bert_forward.1} parent=0 // pred_region
    _
  $region13: #{cm_bert_forward.1} parent=0 // pred_fallthru
    _
  // Predicated region
  $region14: #{cm_bert_forward.1} parent=0 // pred_check
    _
  $region15: #{cm_bert_forward.1} parent=0 // pred_check_branch
    %16 = sbr.rel (0) target = $region17
  $region16: #{cm_bert_forward.1} parent=0 // pred_region
    _
  $region17: #{cm_bert_forward.1} parent=0 // pred_fallthru
    _
  %v18 = vlaneseq
  %v19 = vand.u32 %v18, 127
  %v20 = vadd.s32 %v19, 128
  %v21 = vadd.s32 %v19, 256
  %v22 = vadd.s32 %v19, 384
  %v23 = vadd.s32 %v19, 512
  %v24 = vadd.s32 %v19, 640
  %v25 = vadd.s32 %v19, 768
  %v26 = vadd.s32 %v19, 896
  %v27 = vadd.s32 %v19, 1024
  %v28 = vadd.s32 %v19, 1152
  %v29 = vld [vmem:[%s0] sm:$0xff]
  %v30 = vld [vmem:[%s0 + $0x8] sm:$0xff]
  %31 = vset.pattern.permute.xlu0 0
  %32 = vperm.xlu0 %31, %v29
  %v33 = vpop.permute.xlu0 %32
  %34 = vset.pattern.permute.xlu0 0
  %35 = vperm.xlu0 %34, %v30
  %v36 = vpop.permute.xlu0 %35
  %vm37 = vcmp.eq.s32.totalorder %v19, %v33
  %vm38 = vcmp.eq.s32.totalorder %v20, %v33
  %vm39 = vcmp.eq.s32.totalorder %v21, %v33
  %vm40 = vcmp.eq.s32.totalorder %v22, %v33
  %vm41 = vcmp.eq.s32.totalorder %v23, %v33
  %vm42 = vcmp.eq.s32.totalorder %v24, %v33
  %vm43 = vcmp.eq.s32.totalorder %v25, %v33
  %vm44 = vcmp.eq.s32.totalorder %v26, %v33
  %vm45 = vcmp.eq.s32.totalorder %v27, %v33
  %vm46 = vcmp.eq.s32.totalorder %v28, %v33
  %vm47 = vcmp.eq.s32.totalorder %v19, %v36
  %vm48 = vcmp.eq.s32.totalorder %v20, %v36
  %vm49 = vcmp.eq.s32.totalorder %v21, %v36
  %vm50 = vcmp.eq.s32.totalorder %v22, %v36
  %vm51 = vcmp.eq.s32.totalorder %v23, %v36
  %vm52 = vcmp.eq.s32.totalorder %v24, %v36
  %vm53 = vcmp.eq.s32.totalorder %v25, %v36
  %vm54 = vcmp.eq.s32.totalorder %v26, %v36
  %vm55 = vcmp.eq.s32.totalorder %v27, %v36
  %vm56 = vcmp.eq.s32.totalorder %v28, %v36
  %57 = vset.pattern.permute.xlu0 1
  %58 = vperm.xlu0 %57, %v29
  %v59 = vpop.permute.xlu0 %58
  %60 = vset.pattern.permute.xlu0 1
  %61 = vperm.xlu0 %60, %v30
  %v62 = vpop.permute.xlu0 %61
  %vm63 = vcmp.eq.s32.totalorder %v19, %v59
  %vm64 = vcmp.eq.s32.totalorder %v20, %v59
  %vm65 = vcmp.eq.s32.totalorder %v21, %v59
  %vm66 = vcmp.eq.s32.totalorder %v22, %v59
  %vm67 = vcmp.eq.s32.totalorder %v23, %v59
  %vm68 = vcmp.eq.s32.totalorder %v24, %v59
  %vm69 = vcmp.eq.s32.totalorder %v25, %v59
  %vm70 = vcmp.eq.s32.totalorder %v26, %v59
  %vm71 = vcmp.eq.s32.totalorder %v27, %v59
  %vm72 = vcmp.eq.s32.totalorder %v28, %v59
  %vm73 = vcmp.eq.s32.totalorder %v19, %v62
  %vm74 = vcmp.eq.s32.totalorder %v20, %v62
  %vm75 = vcmp.eq.s32.totalorder %v21, %v62
  %vm76 = vcmp.eq.s32.totalorder %v22, %v62
  %vm77 = vcmp.eq.s32.totalorder %v23, %v62
  %vm78 = vcmp.eq.s32.totalorder %v24, %v62
  %vm79 = vcmp.eq.s32.totalorder %v25, %v62
  %vm80 = vcmp.eq.s32.totalorder %v26, %v62
  %vm81 = vcmp.eq.s32.totalorder %v27, %v62
  %vm82 = vcmp.eq.s32.totalorder %v28, %v62
  %vm83 = vmor %vm37, %vm63
  %vm84 = vmor %vm38, %vm64
  %vm85 = vmor %vm39, %vm65
  %vm86 = vmor %vm40, %vm66
  %vm87 = vmor %vm41, %vm67
  %vm88 = vmor %vm42, %vm68
  %vm89 = vmor %vm43, %vm69
  %vm90 = vmor %vm44, %vm70
  %vm91 = vmor %vm45, %vm71
  %vm92 = vmor %vm46, %vm72
  %vm93 = vmor %vm47, %vm73
  %vm94 = vmor %vm48, %vm74
  %vm95 = vmor %vm49, %vm75
  %vm96 = vmor %vm50, %vm76
  %vm97 = vmor %vm51, %vm77
  %vm98 = vmor %vm52, %vm78
  %vm99 = vmor %vm53, %vm79
  %vm100 = vmor %vm54, %vm80
  %vm101 = vmor %vm55, %vm81
  %vm102 = vmor %vm56, %vm82
  %103 = vset.pattern.permute.xlu0 2
  %104 = vperm.xlu0 %103, %v29
  %v105 = vpop.permute.xlu0 %104
  %106 = vset.pattern.permute.xlu0 2
  %107 = vperm.xlu0 %106, %v30
  %v108 = vpop.permute.xlu0 %107
  %vm109 = vcmp.eq.s32.totalorder %v19, %v105
  %vm110 = vcmp.eq.s32.totalorder %v20, %v105
  %vm111 = vcmp.eq.s32.totalorder %v21, %v105
  %vm112 = vcmp.eq.s32.totalorder %v22, %v105
  %vm113 = vcmp.eq.s32.totalorder %v23, %v105
  %vm114 = vcmp.eq.s32.totalorder %v24, %v105
  %vm115 = vcmp.eq.s32.totalorder %v25, %v105
  %vm116 = vcmp.eq.s32.totalorder %v26, %v105
  %vm117 = vcmp.eq.s32.totalorder %v27, %v105
  %vm118 = vcmp.eq.s32.totalorder %v28, %v105
  %vm119 = vcmp.eq.s32.totalorder %v19, %v108
  %vm120 = vcmp.eq.s32.totalorder %v20, %v108
  %vm121 = vcmp.eq.s32.totalorder %v21, %v108
  %vm122 = vcmp.eq.s32.totalorder %v22, %v108
  %vm123 = vcmp.eq.s32.totalorder %v23, %v108
  %vm124 = vcmp.eq.s32.totalorder %v24, %v108
  %vm125 = vcmp.eq.s32.totalorder %v25, %v108
  %vm126 = vcmp.eq.s32.totalorder %v26, %v108
  %vm127 = vcmp.eq.s32.totalorder %v27, %v108
  %vm128 = vcmp.eq.s32.totalorder %v28, %v108
  %vm129 = vmor %vm83, %vm109
  %vm130 = vmor %vm84, %vm110
  %vm131 = vmor %vm85, %vm111
  %vm132 = vmor %vm86, %vm112
  %vm133 = vmor %vm87, %vm113
  %vm134 = vmor %vm88, %vm114
  %vm135 = vmor %vm89, %vm115
  %vm136 = vmor %vm90, %vm116
  %vm137 = vmor %vm91, %vm117
  %vm138 = vmor %vm92, %vm118
  %vm139 = vmor %vm93, %vm119
  %vm140 = vmor %vm94, %vm120
  %vm141 = vmor %vm95, %vm121
  %vm142 = vmor %vm96, %vm122
  %vm143 = vmor %vm97, %vm123
  %vm144 = vmor %vm98, %vm124
  %vm145 = vmor %vm99, %vm125
  %vm146 = vmor %vm100, %vm126
  %vm147 = vmor %vm101, %vm127
  %vm148 = vmor %vm102, %vm128
  %149 = vset.pattern.permute.xlu0 3
  %150 = vperm.xlu0 %149, %v29
  %v151 = vpop.permute.xlu0 %150
  %152 = vset.pattern.permute.xlu0 3
  %153 = vperm.xlu0 %152, %v30
  %v154 = vpop.permute.xlu0 %153
  %vm155 = vcmp.eq.s32.totalorder %v19, %v151
  %vm156 = vcmp.eq.s32.totalorder %v20, %v151
  %vm157 = vcmp.eq.s32.totalorder %v21, %v151
  %vm158 = vcmp.eq.s32.totalorder %v22, %v151
  %vm159 = vcmp.eq.s32.totalorder %v23, %v151
  %vm160 = vcmp.eq.s32.totalorder %v24, %v151
  %vm161 = vcmp.eq.s32.totalorder %v25, %v151
  %vm162 = vcmp.eq.s32.totalorder %v26, %v151
  %vm163 = vcmp.eq.s32.totalorder %v27, %v151
  %vm164 = vcmp.eq.s32.totalorder %v28, %v151
  %vm165 = vcmp.eq.s32.totalorder %v19, %v154
  %vm166 = vcmp.eq.s32.totalorder %v20, %v154
  %vm167 = vcmp.eq.s32.totalorder %v21, %v154
  %vm168 = vcmp.eq.s32.totalorder %v22, %v154
  %vm169 = vcmp.eq.s32.totalorder %v23, %v154
  %vm170 = vcmp.eq.s32.totalorder %v24, %v154
  %vm171 = vcmp.eq.s32.totalorder %v25, %v154
  %vm172 = vcmp.eq.s32.totalorder %v26, %v154
  %vm173 = vcmp.eq.s32.totalorder %v27, %v154
  %vm174 = vcmp.eq.s32.totalorder %v28, %v154
  %vm175 = vmor %vm129, %vm155
  %vm176 = vmor %vm130, %vm156
  %vm177 = vmor %vm131, %vm157
  %vm178 = vmor %vm132, %vm158
  %vm179 = vmor %vm133, %vm159
  %vm180 = vmor %vm134, %vm160
  %vm181 = vmor %vm135, %vm161
  %vm182 = vmor %vm136, %vm162
  %vm183 = vmor %vm137, %vm163
  %vm184 = vmor %vm138, %vm164
  %vm185 = vmor %vm139, %vm165
  %vm186 = vmor %vm140, %vm166
  %vm187 = vmor %vm141, %vm167
  %vm188 = vmor %vm142, %vm168
  %vm189 = vmor %vm143, %vm169
  %vm190 = vmor %vm144, %vm170
  %vm191 = vmor %vm145, %vm171
  %vm192 = vmor %vm146, %vm172
  %vm193 = vmor %vm147, %vm173
  %vm194 = vmor %vm148, %vm174
  %195 = vset.pattern.permute.xlu0 4
  %196 = vperm.xlu0 %195, %v29
  %v197 = vpop.permute.xlu0 %196
  %198 = vset.pattern.permute.xlu0 4
  %199 = vperm.xlu0 %198, %v30
  %v200 = vpop.permute.xlu0 %199
  %vm201 = vcmp.eq.s32.totalorder %v19, %v197
  %vm202 = vcmp.eq.s32.totalorder %v20, %v197
  %vm203 = vcmp.eq.s32.totalorder %v21, %v197
  %vm204 = vcmp.eq.s32.totalorder %v22, %v197
  %vm205 = vcmp.eq.s32.totalorder %v23, %v197
  %vm206 = vcmp.eq.s32.totalorder %v24, %v197
  %vm207 = vcmp.eq.s32.totalorder %v25, %v197
  %vm208 = vcmp.eq.s32.totalorder %v26, %v197
  %vm209 = vcmp.eq.s32.totalorder %v27, %v197
  %vm210 = vcmp.eq.s32.totalorder %v28, %v197
  %vm211 = vcmp.eq.s32.totalorder %v19, %v200
  %vm212 = vcmp.eq.s32.totalorder %v20, %v200
  %vm213 = vcmp.eq.s32.totalorder %v21, %v200
  %vm214 = vcmp.eq.s32.totalorder %v22, %v200
  %vm215 = vcmp.eq.s32.totalorder %v23, %v200
  %vm216 = vcmp.eq.s32.totalorder %v24, %v200
  %vm217 = vcmp.eq.s32.totalorder %v25, %v200
  %vm218 = vcmp.eq.s32.totalorder %v26, %v200
  %vm219 = vcmp.eq.s32.totalorder %v27, %v200
  %vm220 = vcmp.eq.s32.totalorder %v28, %v200
  %vm221 = vmor %vm175, %vm201
  %vm222 = vmor %vm176, %vm202
  %vm223 = vmor %vm177, %vm203
  %vm224 = vmor %vm178, %vm204
  %vm225 = vmor %vm179, %vm205
  %vm226 = vmor %vm180, %vm206
  %vm227 = vmor %vm181, %vm207
  %vm228 = vmor %vm182, %vm208
  %vm229 = vmor %vm183, %vm209
  %vm230 = vmor %vm184, %vm210
  %vm231 = vmor %vm185, %vm211
  %vm232 = vmor %vm186, %vm212
  %vm233 = vmor %vm187, %vm213
  %vm234 = vmor %vm188, %vm214
  %vm235 = vmor %vm189, %vm215
  %vm236 = vmor %vm190, %vm216
  %vm237 = vmor %vm191, %vm217
  %vm238 = vmor %vm192, %vm218
  %vm239 = vmor %vm193, %vm219
  %vm240 = vmor %vm194, %vm220
  %241 = vset.pattern.permute.xlu0 5
  %242 = vperm.xlu0 %241, %v29
  %v243 = vpop.permute.xlu0 %242
  %244 = vset.pattern.permute.xlu0 5
  %245 = vperm.xlu0 %244, %v30
  %v246 = vpop.permute.xlu0 %245
  %vm247 = vcmp.eq.s32.totalorder %v19, %v243
  %vm248 = vcmp.eq.s32.totalorder %v20, %v243
  %vm249 = vcmp.eq.s32.totalorder %v21, %v243
  %vm250 = vcmp.eq.s32.totalorder %v22, %v243
  %vm251 = vcmp.eq.s32.totalorder %v23, %v243
  %vm252 = vcmp.eq.s32.totalorder %v24, %v243
  %vm253 = vcmp.eq.s32.totalorder %v25, %v243
  %vm254 = vcmp.eq.s32.totalorder %v26, %v243
  %vm255 = vcmp.eq.s32.totalorder %v27, %v243
  %vm256 = vcmp.eq.s32.totalorder %v28, %v243
  %vm257 = vcmp.eq.s32.totalorder %v19, %v246
  %vm258 = vcmp.eq.s32.totalorder %v20, %v246
  %vm259 = vcmp.eq.s32.totalorder %v21, %v246
  %vm260 = vcmp.eq.s32.totalorder %v22, %v246
  %vm261 = vcmp.eq.s32.totalorder %v23, %v246
  %vm262 = vcmp.eq.s32.totalorder %v24, %v246
  %vm263 = vcmp.eq.s32.totalorder %v25, %v246
  %vm264 = vcmp.eq.s32.totalorder %v26, %v246
  %vm265 = vcmp.eq.s32.totalorder %v27, %v246
  %vm266 = vcmp.eq.s32.totalorder %v28, %v246
  %vm267 = vmor %vm221, %vm247
  %vm268 = vmor %vm222, %vm248
  %vm269 = vmor %vm223, %vm249
  %vm270 = vmor %vm224, %vm250
  %vm271 = vmor %vm225, %vm251
  %vm272 = vmor %vm226, %vm252
  %vm273 = vmor %vm227, %vm253
  %vm274 = vmor %vm228, %vm254
  %vm275 = vmor %vm229, %vm255
  %vm276 = vmor %vm230, %vm256
  %vm277 = vmor %vm231, %vm257
  %vm278 = vmor %vm232, %vm258
  %vm279 = vmor %vm233, %vm259
  %vm280 = vmor %vm234, %vm260
  %vm281 = vmor %vm235, %vm261
  %vm282 = vmor %vm236, %vm262
  %vm283 = vmor %vm237, %vm263
  %vm284 = vmor %vm238, %vm264
  %vm285 = vmor %vm239, %vm265
  %vm286 = vmor %vm240, %vm266
  %v287 = vsel %vm267, 1.0, 0.0
  %v288 = vsel %vm268, 1.0, 0.0
  %v289 = vsel %vm269, 1.0, 0.0
  %v290 = vsel %vm270, 1.0, 0.0
  %v291 = vsel %vm271, 1.0, 0.0
  %v292 = vsel %vm272, 1.0, 0.0
  %v293 = vsel %vm273, 1.0, 0.0
  %v294 = vsel %vm274, 1.0, 0.0
  %v295 = vsel %vm275, 1.0, 0.0
  %v296 = vsel %vm276, 1.0, 0.0
  %v297 = vsel %vm277, 1.0, 0.0
  %v298 = vsel %vm278, 1.0, 0.0
  %v299 = vsel %vm279, 1.0, 0.0
  %v300 = vsel %vm280, 1.0, 0.0
  %v301 = vsel %vm281, 1.0, 0.0
  %v302 = vsel %vm282, 1.0, 0.0
  %v303 = vsel %vm283, 1.0, 0.0
  %v304 = vsel %vm284, 1.0, 0.0
  %v305 = vsel %vm285, 1.0, 0.0
  %v306 = vsel %vm286, 1.0, 0.0
  %v307 = vpack.c.bf16 %v297, %v287
  %v308 = vpack.c.bf16 %v298, %v288
  %v309 = vpack.c.bf16 %v299, %v289
  %v310 = vpack.c.bf16 %v300, %v290
  %v311 = vpack.c.bf16 %v301, %v291
  %v312 = vpack.c.bf16 %v302, %v292
  %v313 = vpack.c.bf16 %v303, %v293
  %v314 = vpack.c.bf16 %v304, %v294
  %v315 = vpack.c.bf16 %v305, %v295
  %v316 = vpack.c.bf16 %v306, %v296
  %v317 = vld [vmem:[%s2] sm:$0xf]
  %v318 = vld [vmem:[%s2 + $0x4] sm:$0xf]
  %v319 = vld [vmem:[%s2 + $0x8] sm:$0xf]
  %v320 = vld [vmem:[%s2 + $0xc] sm:$0xf]
  %v321 = vld [vmem:[%s2 + $0x10] sm:$0xf]
  %v322 = vld [vmem:[%s2 + $0x14] sm:$0xf]
  %v323 = vld [vmem:[%s2 + $0x18] sm:$0xf]
  %v324 = vld [vmem:[%s2 + $0x1c] sm:$0xf]
  %v325 = vld [vmem:[%s2 + $0x20] sm:$0xf]
  %v326 = vld [vmem:[%s2 + $0x24] sm:$0xf]
  %v327 = vld [vmem:[%s2 + $0x28] sm:$0xf]
  %v328 = vld [vmem:[%s2 + $0x2c] sm:$0xf]
  %v329 = vld [vmem:[%s2 + $0x30] sm:$0xf]
  %v330 = vld [vmem:[%s2 + $0x34] sm:$0xf]
  %v331 = vld [vmem:[%s2 + $0x38] sm:$0xf]
  %v332 = vld [vmem:[%s2 + $0x3c] sm:$0xf]
  %v333 = vld [vmem:[%s2 + $0x40] sm:$0xf]
  %v334 = vld [vmem:[%s2 + $0x44] sm:$0xf]
  %v335 = vld [vmem:[%s2 + $0x48] sm:$0xf]
  %v336 = vld [vmem:[%s2 + $0x4c] sm:$0xf]
  %v337 = vld [vmem:[%s2 + $0x50] sm:$0xf]
  %v338 = vld [vmem:[%s2 + $0x54] sm:$0xf]
  %v339 = vld [vmem:[%s2 + $0x58] sm:$0xf]
  %v340 = vld [vmem:[%s2 + $0x5c] sm:$0xf]
  %v341 = vld [vmem:[%s2 + $0x60] sm:$0xf]
  %v342 = vld [vmem:[%s2 + $0x64] sm:$0xf]
  %v343 = vld [vmem:[%s2 + $0x68] sm:$0xf]
  %v344 = vld [vmem:[%s2 + $0x6c] sm:$0xf]
  %v345 = vld [vmem:[%s2 + $0x70] sm:$0xf]
  %v346 = vld [vmem:[%s2 + $0x74] sm:$0xf]
  %v347 = vld [vmem:[%s2 + $0x78] sm:$0xf]
  %v348 = vld [vmem:[%s2 + $0x7c] sm:$0xf]
  %v349 = vld [vmem:[%s2 + $0x80] sm:$0xf]
  %v350 = vld [vmem:[%s2 + $0x84] sm:$0xf]
  %v351 = vld [vmem:[%s2 + $0x88] sm:$0xf]
  %v352 = vld [vmem:[%s2 + $0x8c] sm:$0xf]
  %v353 = vld [vmem:[%s2 + $0x90] sm:$0xf]
  %v354 = vld [vmem:[%s2 + $0x94] sm:$0xf]
  %v355 = vld [vmem:[%s2 + $0x98] sm:$0xf]
  %v356 = vld [vmem:[%s2 + $0x9c] sm:$0xf]
  %v357 = vld [vmem:[%s2 + $0xa0] sm:$0xf]
  %v358 = vld [vmem:[%s2 + $0xa4] sm:$0xf]
  %v359 = vld [vmem:[%s2 + $0xa8] sm:$0xf]
  %v360 = vld [vmem:[%s2 + $0xac] sm:$0xf]
  %v361 = vld [vmem:[%s2 + $0xb0] sm:$0xf]
  %v362 = vld [vmem:[%s2 + $0xb4] sm:$0xf]
  %v363 = vld [vmem:[%s2 + $0xb8] sm:$0xf]
  %v364 = vld [vmem:[%s2 + $0xbc] sm:$0xf]
  %v365 = vld [vmem:[%s2 + $0xc0] sm:$0xf]
  %v366 = vld [vmem:[%s2 + $0xc4] sm:$0xf]
  %v367 = vld [vmem:[%s2 + $0xc8] sm:$0xf]
  %v368 = vld [vmem:[%s2 + $0xcc] sm:$0xf]
  %v369 = vld [vmem:[%s2 + $0xd0] sm:$0xf]
  %v370 = vld [vmem:[%s2 + $0xd4] sm:$0xf]
  %v371 = vld [vmem:[%s2 + $0xd8] sm:$0xf]
  %v372 = vld [vmem:[%s2 + $0xdc] sm:$0xf]
  %v373 = vld [vmem:[%s2 + $0xe0] sm:$0xf]
  %v374 = vld [vmem:[%s2 + $0xe4] sm:$0xf]
  %v375 = vld [vmem:[%s2 + $0xe8] sm:$0xf]
  %v376 = vld [vmem:[%s2 + $0xec] sm:$0xf]
  %v377 = vld [vmem:[%s2 + $0xf0] sm:$0xf]
  %v378 = vld [vmem:[%s2 + $0xf4] sm:$0xf]
  %v379 = vld [vmem:[%s2 + $0xf8] sm:$0xf]
  %v380 = vld [vmem:[%s2 + $0xfc] sm:$0xf]
  %v381 = vld [vmem:[%s2 + $0x100] sm:$0xf]
  %v382 = vld [vmem:[%s2 + $0x104] sm:$0xf]
  %v383 = vld [vmem:[%s2 + $0x108] sm:$0xf]
  %v384 = vld [vmem:[%s2 + $0x10c] sm:$0xf]
  %v385 = vld [vmem:[%s2 + $0x110] sm:$0xf]
  %v386 = vld [vmem:[%s2 + $0x114] sm:$0xf]
  %v387 = vld [vmem:[%s2 + $0x118] sm:$0xf]
  %v388 = vld [vmem:[%s2 + $0x11c] sm:$0xf]
  %v389 = vld [vmem:[%s2 + $0x120] sm:$0xf]
  %v390 = vld [vmem:[%s2 + $0x124] sm:$0xf]
  %v391 = vld [vmem:[%s2 + $0x128] sm:$0xf]
  %v392 = vld [vmem:[%s2 + $0x12c] sm:$0xf]
  %v393 = vld [vmem:[%s2 + $0x130] sm:$0xf]
  %v394 = vld [vmem:[%s2 + $0x134] sm:$0xf]
  %v395 = vld [vmem:[%s2 + $0x138] sm:$0xf]
  %v396 = vld [vmem:[%s2 + $0x13c] sm:$0xf]
  %v397 = vld [vmem:[%s2 + $0x140] sm:$0xf]
  %v398 = vld [vmem:[%s2 + $0x144] sm:$0xf]
  %v399 = vld [vmem:[%s2 + $0x148] sm:$0xf]
  %v400 = vld [vmem:[%s2 + $0x14c] sm:$0xf]
  %v401 = vld [vmem:[%s2 + $0x150] sm:$0xf]
  %v402 = vld [vmem:[%s2 + $0x154] sm:$0xf]
  %v403 = vld [vmem:[%s2 + $0x158] sm:$0xf]
  %v404 = vld [vmem:[%s2 + $0x15c] sm:$0xf]
  %v405 = vld [vmem:[%s2 + $0x160] sm:$0xf]
  %v406 = vld [vmem:[%s2 + $0x164] sm:$0xf]
  %v407 = vld [vmem:[%s2 + $0x168] sm:$0xf]
  %v408 = vld [vmem:[%s2 + $0x16c] sm:$0xf]
  %v409 = vld [vmem:[%s2 + $0x170] sm:$0xf]
  %v410 = vld [vmem:[%s2 + $0x174] sm:$0xf]
  %v411 = vld [vmem:[%s2 + $0x178] sm:$0xf]
  %v412 = vld [vmem:[%s2 + $0x17c] sm:$0xf]
  %v413 = vld [vmem:[%s2 + $0x180] sm:$0xf]
  %v414 = vld [vmem:[%s2 + $0x184] sm:$0xf]
  %v415 = vld [vmem:[%s2 + $0x188] sm:$0xf]
  %v416 = vld [vmem:[%s2 + $0x18c] sm:$0xf]
  %v417 = vld [vmem:[%s2 + $0x190] sm:$0xf]
  %v418 = vld [vmem:[%s2 + $0x194] sm:$0xf]
  %v419 = vld [vmem:[%s2 + $0x198] sm:$0xf]
  %v420 = vld [vmem:[%s2 + $0x19c] sm:$0xf]
  %v421 = vld [vmem:[%s2 + $0x1a0] sm:$0xf]
  %v422 = vld [vmem:[%s2 + $0x1a4] sm:$0xf]
  %v423 = vld [vmem:[%s2 + $0x1a8] sm:$0xf]
  %v424 = vld [vmem:[%s2 + $0x1ac] sm:$0xf]
  %v425 = vld [vmem:[%s2 + $0x1b0] sm:$0xf]
  %v426 = vld [vmem:[%s2 + $0x1b4] sm:$0xf]
  %v427 = vld [vmem:[%s2 + $0x1b8] sm:$0xf]
  %v428 = vld [vmem:[%s2 + $0x1bc] sm:$0xf]
  %v429 = vld [vmem:[%s2 + $0x1c0] sm:$0xf]
  %v430 = vld [vmem:[%s2 + $0x1c4] sm:$0xf]
  %v431 = vld [vmem:[%s2 + $0x1c8] sm:$0xf]
  %v432 = vld [vmem:[%s2 + $0x1cc] sm:$0xf]
  %v433 = vld [vmem:[%s2 + $0x1d0] sm:$0xf]
  %v434 = vld [vmem:[%s2 + $0x1d4] sm:$0xf]
  %v435 = vld [vmem:[%s2 + $0x1d8] sm:$0xf]
  %v436 = vld [vmem:[%s2 + $0x1dc] sm:$0xf]
  %v437 = vld [vmem:[%s2 + $0x1e0] sm:$0xf]
  %v438 = vld [vmem:[%s2 + $0x1e4] sm:$0xf]
  %v439 = vld [vmem:[%s2 + $0x1e8] sm:$0xf]
  %v440 = vld [vmem:[%s2 + $0x1ec] sm:$0xf]
  %v441 = vld [vmem:[%s2 + $0x1f0] sm:$0xf]
  %v442 = vld [vmem:[%s2 + $0x1f4] sm:$0xf]
  %v443 = vld [vmem:[%s2 + $0x1f8] sm:$0xf]
  %v444 = vld [vmem:[%s2 + $0x1fc] sm:$0xf]
  %v445 = vld [vmem:[%s2 + $0x200] sm:$0xf]
  %v446 = vld [vmem:[%s2 + $0x204] sm:$0xf]
  %v447 = vld [vmem:[%s2 + $0x208] sm:$0xf]
  %v448 = vld [vmem:[%s2 + $0x20c] sm:$0xf]
  %v449 = vld [vmem:[%s2 + $0x210] sm:$0xf]
  %v450 = vld [vmem:[%s2 + $0x214] sm:$0xf]
  %v451 = vld [vmem:[%s2 + $0x218] sm:$0xf]
  %v452 = vld [vmem:[%s2 + $0x21c] sm:$0xf]
  %v453 = vld [vmem:[%s2 + $0x220] sm:$0xf]
  %v454 = vld [vmem:[%s2 + $0x224] sm:$0xf]
  %v455 = vld [vmem:[%s2 + $0x228] sm:$0xf]
  %v456 = vld [vmem:[%s2 + $0x22c] sm:$0xf]
  %v457 = vld [vmem:[%s2 + $0x230] sm:$0xf]
  %v458 = vld [vmem:[%s2 + $0x234] sm:$0xf]
  %v459 = vld [vmem:[%s2 + $0x238] sm:$0xf]
  %v460 = vld [vmem:[%s2 + $0x23c] sm:$0xf]
  %v461 = vld [vmem:[%s2 + $0x240] sm:$0xf]
  %v462 = vld [vmem:[%s2 + $0x244] sm:$0xf]
  %v463 = vld [vmem:[%s2 + $0x248] sm:$0xf]
  %v464 = vld [vmem:[%s2 + $0x24c] sm:$0xf]
  %v465 = vld [vmem:[%s2 + $0x250] sm:$0xf]
  %v466 = vld [vmem:[%s2 + $0x254] sm:$0xf]
  %v467 = vld [vmem:[%s2 + $0x258] sm:$0xf]
  %v468 = vld [vmem:[%s2 + $0x25c] sm:$0xf]
  %v469 = vld [vmem:[%s2 + $0x260] sm:$0xf]
  %v470 = vld [vmem:[%s2 + $0x264] sm:$0xf]
  %v471 = vld [vmem:[%s2 + $0x268] sm:$0xf]
  %v472 = vld [vmem:[%s2 + $0x26c] sm:$0xf]
  %v473 = vld [vmem:[%s2 + $0x270] sm:$0xf]
  %v474 = vld [vmem:[%s2 + $0x274] sm:$0xf]
  %v475 = vld [vmem:[%s2 + $0x278] sm:$0xf]
  %v476 = vld [vmem:[%s2 + $0x27c] sm:$0xf]
  %v637 = vunpack.c.l.b16 %v317
  %v638 = vunpack.c.l.b16 %v318
  %v639 = vunpack.c.l.b16 %v319
  %v640 = vunpack.c.l.b16 %v320
  %v641 = vunpack.c.l.b16 %v321
  %v642 = vunpack.c.l.b16 %v322
  %v643 = vunpack.c.l.b16 %v323
  %v644 = vunpack.c.l.b16 %v324
  %v645 = vunpack.c.l.b16 %v325
  %v646 = vunpack.c.l.b16 %v326
  %v647 = vunpack.c.l.b16 %v327
  %v648 = vunpack.c.l.b16 %v328
  %v649 = vunpack.c.l.b16 %v329
  %v650 = vunpack.c.l.b16 %v330
  %v651 = vunpack.c.l.b16 %v331
  %v652 = vunpack.c.l.b16 %v332
  %v653 = vunpack.c.l.b16 %v333
  %v654 = vunpack.c.l.b16 %v334
  %v655 = vunpack.c.l.b16 %v335
  %v656 = vunpack.c.l.b16 %v336
  %v657 = vunpack.c.l.b16 %v337
  %v658 = vunpack.c.l.b16 %v338
  %v659 = vunpack.c.l.b16 %v339
  %v660 = vunpack.c.l.b16 %v340
  %v661 = vunpack.c.l.b16 %v341
  %v662 = vunpack.c.l.b16 %v342
  %v663 = vunpack.c.l.b16 %v343
  %v664 = vunpack.c.l.b16 %v344
  %v665 = vunpack.c.l.b16 %v345
  %v666 = vunpack.c.l.b16 %v346
  %v667 = vunpack.c.l.b16 %v347
  %v668 = vunpack.c.l.b16 %v348
  %v669 = vunpack.c.l.b16 %v349
  %v670 = vunpack.c.l.b16 %v350
  %v671 = vunpack.c.l.b16 %v351
  %v672 = vunpack.c.l.b16 %v352
  %v673 = vunpack.c.l.b16 %v353
  %v674 = vunpack.c.l.b16 %v354
  %v675 = vunpack.c.l.b16 %v355
  %v676 = vunpack.c.l.b16 %v356
  %v677 = vunpack.c.l.b16 %v357
  %v678 = vunpack.c.l.b16 %v358
  %v679 = vunpack.c.l.b16 %v359
  %v680 = vunpack.c.l.b16 %v360
  %v681 = vunpack.c.l.b16 %v361
  %v682 = vunpack.c.l.b16 %v362
  %v683 = vunpack.c.l.b16 %v363
  %v684 = vunpack.c.l.b16 %v364
  %v685 = vunpack.c.l.b16 %v365
  %v686 = vunpack.c.l.b16 %v366
  %v687 = vunpack.c.l.b16 %v367
  %v688 = vunpack.c.l.b16 %v368
  %v689 = vunpack.c.l.b16 %v369
  %v690 = vunpack.c.l.b16 %v370
  %v691 = vunpack.c.l.b16 %v371
  %v692 = vunpack.c.l.b16 %v372
  %v693 = vunpack.c.l.b16 %v373
  %v694 = vunpack.c.l.b16 %v374
  %v695 = vunpack.c.l.b16 %v375
  %v696 = vunpack.c.l.b16 %v376
  %v697 = vunpack.c.l.b16 %v377
  %v698 = vunpack.c.l.b16 %v378
  %v699 = vunpack.c.l.b16 %v379
  %v700 = vunpack.c.l.b16 %v380
  %v701 = vunpack.c.l.b16 %v381
  %v702 = vunpack.c.l.b16 %v382
  %v703 = vunpack.c.l.b16 %v383
  %v704 = vunpack.c.l.b16 %v384
  %v705 = vunpack.c.l.b16 %v385
  %v706 = vunpack.c.l.b16 %v386
  %v707 = vunpack.c.l.b16 %v387
  %v708 = vunpack.c.l.b16 %v388
  %v709 = vunpack.c.l.b16 %v389
  %v710 = vunpack.c.l.b16 %v390
  %v711 = vunpack.c.l.b16 %v391
  %v712 = vunpack.c.l.b16 %v392
  %v713 = vunpack.c.l.b16 %v393
  %v714 = vunpack.c.l.b16 %v394
  %v715 = vunpack.c.l.b16 %v395
  %v716 = vunpack.c.l.b16 %v396
  %v717 = vunpack.c.l.b16 %v397
  %v718 = vunpack.c.l.b16 %v398
  %v719 = vunpack.c.l.b16 %v399
  %v720 = vunpack.c.l.b16 %v400
  %v721 = vunpack.c.l.b16 %v401
  %v722 = vunpack.c.l.b16 %v402
  %v723 = vunpack.c.l.b16 %v403
  %v724 = vunpack.c.l.b16 %v404
  %v725 = vunpack.c.l.b16 %v405
  %v726 = vunpack.c.l.b16 %v406
  %v727 = vunpack.c.l.b16 %v407
  %v728 = vunpack.c.l.b16 %v408
  %v729 = vunpack.c.l.b16 %v409
  %v730 = vunpack.c.l.b16 %v410
  %v731 = vunpack.c.l.b16 %v411
  %v732 = vunpack.c.l.b16 %v412
  %v733 = vunpack.c.l.b16 %v413
  %v734 = vunpack.c.l.b16 %v414
  %v735 = vunpack.c.l.b16 %v415
  %v736 = vunpack.c.l.b16 %v416
  %v737 = vunpack.c.l.b16 %v417
  %v738 = vunpack.c.l.b16 %v418
  %v739 = vunpack.c.l.b16 %v419
  %v740 = vunpack.c.l.b16 %v420
  %v741 = vunpack.c.l.b16 %v421
  %v742 = vunpack.c.l.b16 %v422
  %v743 = vunpack.c.l.b16 %v423
  %v744 = vunpack.c.l.b16 %v424
  %v745 = vunpack.c.l.b16 %v425
  %v746 = vunpack.c.l.b16 %v426
  %v747 = vunpack.c.l.b16 %v427
  %v748 = vunpack.c.l.b16 %v428
  %v749 = vunpack.c.l.b16 %v429
  %v750 = vunpack.c.l.b16 %v430
  %v751 = vunpack.c.l.b16 %v431
  %v752 = vunpack.c.l.b16 %v432
  %v753 = vunpack.c.l.b16 %v433
  %v754 = vunpack.c.l.b16 %v434
  %v755 = vunpack.c.l.b16 %v435
  %v756 = vunpack.c.l.b16 %v436
  %v757 = vunpack.c.l.b16 %v437
  %v758 = vunpack.c.l.b16 %v438
  %v759 = vunpack.c.l.b16 %v439
  %v760 = vunpack.c.l.b16 %v440
  %v761 = vunpack.c.l.b16 %v441
  %v762 = vunpack.c.l.b16 %v442
  %v763 = vunpack.c.l.b16 %v443
  %v764 = vunpack.c.l.b16 %v444
  %v765 = vunpack.c.l.b16 %v445
  %v766 = vunpack.c.l.b16 %v446
  %v767 = vunpack.c.l.b16 %v447
  %v768 = vunpack.c.l.b16 %v448
  %v769 = vunpack.c.l.b16 %v449
  %v770 = vunpack.c.l.b16 %v450
  %v771 = vunpack.c.l.b16 %v451
  %v772 = vunpack.c.l.b16 %v452
  %v773 = vunpack.c.l.b16 %v453
  %v774 = vunpack.c.l.b16 %v454
  %v775 = vunpack.c.l.b16 %v455
  %v776 = vunpack.c.l.b16 %v456
  %v777 = vunpack.c.l.b16 %v457
  %v778 = vunpack.c.l.b16 %v458
  %v779 = vunpack.c.l.b16 %v459
  %v780 = vunpack.c.l.b16 %v460
  %v781 = vunpack.c.l.b16 %v461
  %v782 = vunpack.c.l.b16 %v462
  %v783 = vunpack.c.l.b16 %v463
  %v784 = vunpack.c.l.b16 %v464
  %v785 = vunpack.c.l.b16 %v465
  %v786 = vunpack.c.l.b16 %v466
  %v787 = vunpack.c.l.b16 %v467
  %v788 = vunpack.c.l.b16 %v468
  %v789 = vunpack.c.l.b16 %v469
  %v790 = vunpack.c.l.b16 %v470
  %v791 = vunpack.c.l.b16 %v471
  %v792 = vunpack.c.l.b16 %v472
  %v793 = vunpack.c.l.b16 %v473
  %v794 = vunpack.c.l.b16 %v474
  %v795 = vunpack.c.l.b16 %v475
  %v796 = vunpack.c.l.b16 %v476
  %v797 = vpack.c.b16 %v638, %v637
  %v798 = vpack.c.b16 %v640, %v639
  %v799 = vpack.c.b16 %v642, %v641
  %v800 = vpack.c.b16 %v644, %v643
  %v801 = vpack.c.b16 %v646, %v645
  %v802 = vpack.c.b16 %v648, %v647
  %v803 = vpack.c.b16 %v650, %v649
  %v804 = vpack.c.b16 %v652, %v651
  %v805 = vpack.c.b16 %v654, %v653
  %v806 = vpack.c.b16 %v656, %v655
  %v807 = vpack.c.b16 %v658, %v657
  %v808 = vpack.c.b16 %v660, %v659
  %v809 = vpack.c.b16 %v662, %v661
  %v810 = vpack.c.b16 %v664, %v663
  %v811 = vpack.c.b16 %v666, %v665
  %v812 = vpack.c.b16 %v668, %v667
  %v813 = vpack.c.b16 %v670, %v669
  %v814 = vpack.c.b16 %v672, %v671
  %v815 = vpack.c.b16 %v674, %v673
  %v816 = vpack.c.b16 %v676, %v675
  %v817 = vpack.c.b16 %v678, %v677
  %v818 = vpack.c.b16 %v680, %v679
  %v819 = vpack.c.b16 %v682, %v681
  %v820 = vpack.c.b16 %v684, %v683
  %v821 = vpack.c.b16 %v686, %v685
  %v822 = vpack.c.b16 %v688, %v687
  %v823 = vpack.c.b16 %v690, %v689
  %v824 = vpack.c.b16 %v692, %v691
  %v825 = vpack.c.b16 %v694, %v693
  %v826 = vpack.c.b16 %v696, %v695
  %v827 = vpack.c.b16 %v698, %v697
  %v828 = vpack.c.b16 %v700, %v699
  %v829 = vpack.c.b16 %v702, %v701
  %v830 = vpack.c.b16 %v704, %v703
  %v831 = vpack.c.b16 %v706, %v705
  %v832 = vpack.c.b16 %v708, %v707
  %v833 = vpack.c.b16 %v710, %v709
  %v834 = vpack.c.b16 %v712, %v711
  %v835 = vpack.c.b16 %v714, %v713
  %v836 = vpack.c.b16 %v716, %v715
  %v837 = vpack.c.b16 %v718, %v717
  %v838 = vpack.c.b16 %v720, %v719
  %v839 = vpack.c.b16 %v722, %v721
  %v840 = vpack.c.b16 %v724, %v723
  %v841 = vpack.c.b16 %v726, %v725
  %v842 = vpack.c.b16 %v728, %v727
  %v843 = vpack.c.b16 %v730, %v729
  %v844 = vpack.c.b16 %v732, %v731
  %v845 = vpack.c.b16 %v734, %v733
  %v846 = vpack.c.b16 %v736, %v735
  %v847 = vpack.c.b16 %v738, %v737
  %v848 = vpack.c.b16 %v740, %v739
  %v849 = vpack.c.b16 %v742, %v741
  %v850 = vpack.c.b16 %v744, %v743
  %v851 = vpack.c.b16 %v746, %v745
  %v852 = vpack.c.b16 %v748, %v747
  %v853 = vpack.c.b16 %v750, %v749
  %v854 = vpack.c.b16 %v752, %v751
  %v855 = vpack.c.b16 %v754, %v753
  %v856 = vpack.c.b16 %v756, %v755
  %v857 = vpack.c.b16 %v758, %v757
  %v858 = vpack.c.b16 %v760, %v759
  %v859 = vpack.c.b16 %v762, %v761
  %v860 = vpack.c.b16 %v764, %v763
  %v861 = vpack.c.b16 %v766, %v765
  %v862 = vpack.c.b16 %v768, %v767
  %v863 = vpack.c.b16 %v770, %v769
  %v864 = vpack.c.b16 %v772, %v771
  %v865 = vpack.c.b16 %v774, %v773
  %v866 = vpack.c.b16 %v776, %v775
  %v867 = vpack.c.b16 %v778, %v777
  %v868 = vpack.c.b16 %v780, %v779
  %v869 = vpack.c.b16 %v782, %v781
  %v870 = vpack.c.b16 %v784, %v783
  %v871 = vpack.c.b16 %v786, %v785
  %v872 = vpack.c.b16 %v788, %v787
  %v873 = vpack.c.b16 %v790, %v789
  %v874 = vpack.c.b16 %v792, %v791
  %v875 = vpack.c.b16 %v794, %v793
  %v876 = vpack.c.b16 %v796, %v795
  %957 = vmatpush.bf16.msra.mxu0 %v804
  %958 = vmatpush.bf16.msra.mxu0 %v803
  %959 = vmatpush.bf16.msra.mxu0 %v802
  %960 = vmatpush.bf16.msra.mxu0 %v801
  %961 = vmatpush.bf16.msra.mxu0 %v800
  %962 = vmatpush.bf16.msra.mxu0 %v799
  %963 = vmatpush.bf16.msra.mxu0 %v798
  %964 = vmatpush.bf16.msra.mxu0 %v797
  %965 = vmatmul.bf16.gmra.mxu0 %v307
  %v966 = vpop.f32.mrf.mxu0
  %v967 = vadd.f32 0.0, %v966
  %v968 = vpop.f32.mrf.mxu0
  %v969 = vadd.f32 0.0, %v968
  %970 = vdwg.mxu0
  %971 = vmatpush.bf16.msra.mxu0 %v812
  %972 = vmatpush.bf16.msra.mxu0 %v811
  %973 = vmatpush.bf16.msra.mxu0 %v810
  %974 = vmatpush.bf16.msra.mxu0 %v809
  %975 = vmatpush.bf16.msra.mxu0 %v808
  %976 = vmatpush.bf16.msra.mxu0 %v807
  %977 = vmatpush.bf16.msra.mxu0 %v806
  %978 = vmatpush.bf16.msra.mxu0 %v805
  %979 = vmatmul.bf16.gmra.mxu0 %v308
  %v980 = vpop.f32.mrf.mxu0
  %v981 = vadd.f32 %v967, %v980
  %v982 = vpop.f32.mrf.mxu0
  %v983 = vadd.f32 %v969, %v982
  %984 = vdwg.mxu0
  %985 = vmatpush.bf16.msra.mxu0 %v820
  %986 = vmatpush.bf16.msra.mxu0 %v819
  %987 = vmatpush.bf16.msra.mxu0 %v818
  %988 = vmatpush.bf16.msra.mxu0 %v817
  %989 = vmatpush.bf16.msra.mxu0 %v816
  %990 = vmatpush.bf16.msra.mxu0 %v815
  %991 = vmatpush.bf16.msra.mxu0 %v814
  %992 = vmatpush.bf16.msra.mxu0 %v813
  %993 = vmatmul.bf16.gmra.mxu0 %v309
  %v994 = vpop.f32.mrf.mxu0
  %v995 = vadd.f32 %v981, %v994
  %v996 = vpop.f32.mrf.mxu0
  %v997 = vadd.f32 %v983, %v996
  %998 = vdwg.mxu0
  %999 = vmatpush.bf16.msra.mxu0 %v828
  %1000 = vmatpush.bf16.msra.mxu0 %v827
  %1001 = vmatpush.bf16.msra.mxu0 %v826
  %1002 = vmatpush.bf16.msra.mxu0 %v825
  %1003 = vmatpush.bf16.msra.mxu0 %v824
  %1004 = vmatpush.bf16.msra.mxu0 %v823
  %1005 = vmatpush.bf16.msra.mxu0 %v822
  %1006 = vmatpush.bf16.msra.mxu0 %v821
  %1007 = vmatmul.bf16.gmra.mxu0 %v310
  %v1008 = vpop.f32.mrf.mxu0
  %v1009 = vadd.f32 %v995, %v1008
  %v1010 = vpop.f32.mrf.mxu0
  %v1011 = vadd.f32 %v997, %v1010
  %1012 = vdwg.mxu0
  %1013 = vmatpush.bf16.msra.mxu0 %v836
  %1014 = vmatpush.bf16.msra.mxu0 %v835
  %1015 = vmatpush.bf16.msra.mxu0 %v834
  %1016 = vmatpush.bf16.msra.mxu0 %v833
  %1017 = vmatpush.bf16.msra.mxu0 %v832
  %1018 = vmatpush.bf16.msra.mxu0 %v831
  %1019 = vmatpush.bf16.msra.mxu0 %v830
  %1020 = vmatpush.bf16.msra.mxu0 %v829
  %1021 = vmatmul.bf16.gmra.mxu0 %v311
  %v1022 = vpop.f32.mrf.mxu0
  %v1023 = vadd.f32 %v1009, %v1022
  %v1024 = vpop.f32.mrf.mxu0
  %v1025 = vadd.f32 %v1011, %v1024
  %1026 = vdwg.mxu0
  %1027 = vmatpush.bf16.msra.mxu0 %v844
  %1028 = vmatpush.bf16.msra.mxu0 %v843
  %1029 = vmatpush.bf16.msra.mxu0 %v842
  %1030 = vmatpush.bf16.msra.mxu0 %v841
  %1031 = vmatpush.bf16.msra.mxu0 %v840
  %1032 = vmatpush.bf16.msra.mxu0 %v839
  %1033 = vmatpush.bf16.msra.mxu0 %v838
  %1034 = vmatpush.bf16.msra.mxu0 %v837
  %1035 = vmatmul.bf16.gmra.mxu0 %v312
  %v1036 = vpop.f32.mrf.mxu0
  %v1037 = vadd.f32 %v1023, %v1036
  %v1038 = vpop.f32.mrf.mxu0
  %v1039 = vadd.f32 %v1025, %v1038
  %1040 = vdwg.mxu0
  %1041 = vmatpush.bf16.msra.mxu0 %v852
  %1042 = vmatpush.bf16.msra.mxu0 %v851
  %1043 = vmatpush.bf16.msra.mxu0 %v850
  %1044 = vmatpush.bf16.msra.mxu0 %v849
  %1045 = vmatpush.bf16.msra.mxu0 %v848
  %1046 = vmatpush.bf16.msra.mxu0 %v847
  %1047 = vmatpush.bf16.msra.mxu0 %v846
  %1048 = vmatpush.bf16.msra.mxu0 %v845
  %1049 = vmatmul.bf16.gmra.mxu0 %v313
  %v1050 = vpop.f32.mrf.mxu0
  %v1051 = vadd.f32 %v1037, %v1050
  %v1052 = vpop.f32.mrf.mxu0
  %v1053 = vadd.f32 %v1039, %v1052
  %1054 = vdwg.mxu0
  %1055 = vmatpush.bf16.msra.mxu0 %v860
  %1056 = vmatpush.bf16.msra.mxu0 %v859
  %1057 = vmatpush.bf16.msra.mxu0 %v858
  %1058 = vmatpush.bf16.msra.mxu0 %v857
  %1059 = vmatpush.bf16.msra.mxu0 %v856
  %1060 = vmatpush.bf16.msra.mxu0 %v855
  %1061 = vmatpush.bf16.msra.mxu0 %v854
  %1062 = vmatpush.bf16.msra.mxu0 %v853
  %1063 = vmatmul.bf16.gmra.mxu0 %v314
  %v1064 = vpop.f32.mrf.mxu0
  %v1065 = vadd.f32 %v1051, %v1064
  %v1066 = vpop.f32.mrf.mxu0
  %v1067 = vadd.f32 %v1053, %v1066
  %1068 = vdwg.mxu0
  %1069 = vmatpush.bf16.msra.mxu0 %v868
  %1070 = vmatpush.bf16.msra.mxu0 %v867
  %1071 = vmatpush.bf16.msra.mxu0 %v866
  %1072 = vmatpush.bf16.msra.mxu0 %v865
  %1073 = vmatpush.bf16.msra.mxu0 %v864
  %1074 = vmatpush.bf16.msra.mxu0 %v863
  %1075 = vmatpush.bf16.msra.mxu0 %v862
  %1076 = vmatpush.bf16.msra.mxu0 %v861
  %1077 = vmatmul.bf16.gmra.mxu0 %v315
  %v1078 = vpop.f32.mrf.mxu0
  %v1079 = vadd.f32 %v1065, %v1078
  %v1080 = vpop.f32.mrf.mxu0
  %v1081 = vadd.f32 %v1067, %v1080
  %1082 = vdwg.mxu0
  %1083 = vmatpush.bf16.msra.mxu0 %v876
  %1084 = vmatpush.bf16.msra.mxu0 %v875
  %1085 = vmatpush.bf16.msra.mxu0 %v874
  %1086 = vmatpush.bf16.msra.mxu0 %v873
  %1087 = vmatpush.bf16.msra.mxu0 %v872
  %1088 = vmatpush.bf16.msra.mxu0 %v871
  %1089 = vmatpush.bf16.msra.mxu0 %v870
  %1090 = vmatpush.bf16.msra.mxu0 %v869
  %1091 = vmatmul.bf16.gmra.mxu0 %v316
  %v1092 = vpop.f32.mrf.mxu0
  %v1093 = vadd.f32 %v1079, %v1092
  %v1094 = vpop.f32.mrf.mxu0
  %v1095 = vadd.f32 %v1081, %v1094
  %1096 = vdwg.mxu0
  %v1097 = vld [vmem:[%s1] sm:$0x3]
  %vm1098 = vcmp.gt.f32.partialorder %v1097, 0.5
  %v1099 = vsel %vm1098, 0.0, -1e+30
  %v1101 = vrot.slane %v1099, 1
  %v1102 = vld [vmem:[%s2 + $0x380] sm:$0xf]
  %v1103 = vld [vmem:[%s2 + $0x384] sm:$0xf]
  %v1104 = vld [vmem:[%s2 + $0x388] sm:$0xf]
  %v1105 = vld [vmem:[%s2 + $0x38c] sm:$0xf]
  %v1106 = vld [vmem:[%s2 + $0x390] sm:$0xf]
  %v1107 = vld [vmem:[%s2 + $0x394] sm:$0xf]
  %v1108 = vld [vmem:[%s2 + $0x398] sm:$0xf]
  %v1109 = vld [vmem:[%s2 + $0x39c] sm:$0xf]
  %v1110 = vld [vmem:[%s2 + $0x3a0] sm:$0xf]
  %v1111 = vld [vmem:[%s2 + $0x3a4] sm:$0xf]
  %v1112 = vld [vmem:[%s2 + $0x3a8] sm:$0xf]
  %v1113 = vld [vmem:[%s2 + $0x3ac] sm:$0xf]
  %v1114 = vld [vmem:[%s2 + $0x3b0] sm:$0xf]
  %v1115 = vld [vmem:[%s2 + $0x3b4] sm:$0xf]
  %v1116 = vld [vmem:[%s2 + $0x3b8] sm:$0xf]
  %v1117 = vld [vmem:[%s2 + $0x3bc] sm:$0xf]
  %v1118 = vld [vmem:[%s2 + $0x3c0] sm:$0xf]
  %v1119 = vld [vmem:[%s2 + $0x3c4] sm:$0xf]
  %v1120 = vld [vmem:[%s2 + $0x3c8] sm:$0xf]
  %v1121 = vld [vmem:[%s2 + $0x3cc] sm:$0xf]
  %v1122 = vld [vmem:[%s2 + $0x3d0] sm:$0xf]
  %v1123 = vld [vmem:[%s2 + $0x3d4] sm:$0xf]
  %v1124 = vld [vmem:[%s2 + $0x3d8] sm:$0xf]
  %v1125 = vld [vmem:[%s2 + $0x3dc] sm:$0xf]
  %v1126 = vld [vmem:[%s2 + $0x3e0] sm:$0xf]
  %v1127 = vld [vmem:[%s2 + $0x3e4] sm:$0xf]
  %v1128 = vld [vmem:[%s2 + $0x3e8] sm:$0xf]
  %v1129 = vld [vmem:[%s2 + $0x3ec] sm:$0xf]
  %v1130 = vld [vmem:[%s2 + $0x3f0] sm:$0xf]
  %v1131 = vld [vmem:[%s2 + $0x3f4] sm:$0xf]
  %v1132 = vld [vmem:[%s2 + $0x3f8] sm:$0xf]
  %v1133 = vld [vmem:[%s2 + $0x3fc] sm:$0xf]
  %v1134 = vld [vmem:[%s3] sm:$0xff]
  %v1135 = vpack.c.bf16 %v1095, %v1093
  %v1136 = vperm.slane %v1134, 0
  %v1149 = vunpack.c.l.b16 %v1102
  %v1150 = vunpack.c.l.b16 %v1103
  %v1151 = vunpack.c.l.b16 %v1104
  %v1152 = vunpack.c.l.b16 %v1105
  %v1153 = vunpack.c.l.b16 %v1106
  %v1154 = vunpack.c.l.b16 %v1107
  %v1155 = vunpack.c.l.b16 %v1108
  %v1156 = vunpack.c.l.b16 %v1109
  %v1157 = vunpack.c.l.b16 %v1110
  %v1158 = vunpack.c.l.b16 %v1111
  %v1159 = vunpack.c.l.b16 %v1112
  %v1160 = vunpack.c.l.b16 %v1113
  %v1161 = vpack.c.b16 %v1150, %v1149
  %v1162 = vpack.c.b16 %v1152, %v1151
  %v1163 = vpack.c.b16 %v1154, %v1153
  %v1164 = vpack.c.b16 %v1156, %v1155
  %v1165 = vpack.c.b16 %v1158, %v1157
  %v1166 = vpack.c.b16 %v1160, %v1159
  %vm1167 = vcmask 261120
  %v1169 = vsel %vm1167, %v1135, 0
  %v1172 = vsel %vm1167, %v1161, 0
  %v1175 = vsel %vm1167, %v1162, 0
  %v1178 = vsel %vm1167, %v1163, 0
  %v1181 = vsel %vm1167, %v1164, 0
  %v1184 = vsel %vm1167, %v1165, 0
  %v1187 = vsel %vm1167, %v1166, 0
  %1189 = vmatpush.bf16.xpose.msra.mxu0 0
  %1190 = vmatpush.bf16.xpose.msra.mxu0 0
  %1191 = vmatpush.bf16.xpose.msra.mxu0 %v1187
  %1192 = vmatpush.bf16.xpose.msra.mxu0 %v1184
  %1193 = vmatpush.bf16.xpose.msra.mxu0 %v1181
  %1194 = vmatpush.bf16.xpose.msra.mxu0 %v1178
  %1195 = vmatpush.bf16.xpose.msra.mxu0 %v1175
  %1196 = vmatpush.bf16.xpose.msra.mxu0 %v1172
  %1197 = vmatmul.bf16.gmra.mxu0 %v1169
  %v1198 = vpop.f32.mrf.mxu0
  %v1199 = vadd.f32 %v1136, %v1198
  %v1200 = vpop.f32.mrf.mxu0
  %v1201 = vadd.f32 %v1136, %v1200
  %1202 = vdwg.mxu0
  %1205 = vrot.lane.b32.xlu0 %v1199, 120
  %v1206 = vpop.permute.xlu0 %1205
  %1207 = vrot.lane.b32.xlu0 %v1201, 120
  %v1208 = vpop.permute.xlu0 %1207
  %1211 = vrot.lane.b32.xlu0 %v1199, 112
  %v1212 = vpop.permute.xlu0 %1211
  %1213 = vrot.lane.b32.xlu0 %v1201, 112
  %v1214 = vpop.permute.xlu0 %1213
  %1217 = vrot.lane.b32.xlu0 %v1199, 104
  %v1218 = vpop.permute.xlu0 %1217
  %1219 = vrot.lane.b32.xlu0 %v1201, 104
  %v1220 = vpop.permute.xlu0 %1219
  %v1223 = vpack.c.bf16 %v1199, %v1199
  %v1224 = vpack.c.bf16 %v1201, %v1201
  %v1225 = vpack.c.bf16 %v1206, %v1206
  %v1226 = vpack.c.bf16 %v1208, %v1208
  %v1227 = vpack.c.bf16 %v1212, %v1212
  %v1228 = vpack.c.bf16 %v1214, %v1214
  %v1229 = vpack.c.bf16 %v1218, %v1218
  %v1230 = vpack.c.bf16 %v1220, %v1220
  %v1231 = vperm.slane %v1099, 0
  %v1232 = vperm.slane %v1101, 0
  %v1236 = vunpack.c.l.b16 %v1223
  %v1237 = vpack.c.b16 %v1236, %v1236
  %1238 = vrot.lane.b32.xlu0 %v1237, 96
  %v1239 = vpop.permute.xlu0 %1238
  %vm1240 = vcmask 64512
  %v1242 = vsel %vm1240, %v1223, 0
  %v1245 = vsel %vm1240, %v1239, 0
  %1247 = vmatpush.bf16.xpose.msra.mxu0 0
  %1248 = vmatpush.bf16.xpose.msra.mxu0 0
  %1249 = vmatpush.bf16.xpose.msra.mxu0 0
  %1250 = vmatpush.bf16.xpose.msra.mxu0 0
  %1251 = vmatpush.bf16.xpose.msra.mxu0 0
  %1252 = vmatpush.bf16.xpose.msra.mxu0 0
  %1253 = vmatpush.bf16.xpose.msra.mxu0 0
  %1254 = vmatpush.bf16.xpose.msra.mxu0 %v1245
  %1255 = vmatmul.bf16.gmra.mxu0 %v1242
  %v1256 = vpop.f32.mrf.mxu0
  %v1257 = vadd.f32 %v1231, %v1256
  %v1258 = vpop.f32.mrf.mxu0
  %1259 = vdwg.mxu0
  %v1261 = vunpack.c.l.b16 %v1224
  %v1262 = vpack.c.b16 %v1261, %v1261
  %1263 = vrot.lane.b32.xlu0 %v1262, 96
  %v1264 = vpop.permute.xlu0 %1263
  %v1266 = vsel %vm1240, %v1224, 0
  %v1269 = vsel %vm1240, %v1264, 0
  %1271 = vmatpush.bf16.xpose.msra.mxu0 0
  %1272 = vmatpush.bf16.xpose.msra.mxu0 0
  %1273 = vmatpush.bf16.xpose.msra.mxu0 0
  %1274 = vmatpush.bf16.xpose.msra.mxu0 0
  %1275 = vmatpush.bf16.xpose.msra.mxu0 0
  %1276 = vmatpush.bf16.xpose.msra.mxu0 0
  %1277 = vmatpush.bf16.xpose.msra.mxu0 0
  %1278 = vmatpush.bf16.xpose.msra.mxu0 %v1269
  %1279 = vmatmul.bf16.gmra.mxu0 %v1266
  %v1280 = vpop.f32.mrf.mxu0
  %v1281 = vadd.f32 %v1232, %v1280
  %v1282 = vpop.f32.mrf.mxu0
  %1283 = vdwg.mxu0
  %v1285 = vunpack.c.l.b16 %v1225
  %v1286 = vpack.c.b16 %v1285, %v1285
  %1287 = vrot.lane.b32.xlu0 %v1286, 96
  %v1288 = vpop.permute.xlu0 %1287
  %v1290 = vsel %vm1240, %v1225, 0
  %v1293 = vsel %vm1240, %v1288, 0
  %1295 = vmatpush.bf16.xpose.msra.mxu0 0
  %1296 = vmatpush.bf16.xpose.msra.mxu0 0
  %1297 = vmatpush.bf16.xpose.msra.mxu0 0
  %1298 = vmatpush.bf16.xpose.msra.mxu0 0
  %1299 = vmatpush.bf16.xpose.msra.mxu0 0
  %1300 = vmatpush.bf16.xpose.msra.mxu0 0
  %1301 = vmatpush.bf16.xpose.msra.mxu0 0
  %1302 = vmatpush.bf16.xpose.msra.mxu0 %v1293
  %1303 = vmatmul.bf16.gmra.mxu0 %v1290
  %v1304 = vpop.f32.mrf.mxu0
  %v1305 = vadd.f32 %v1231, %v1304
  %v1306 = vpop.f32.mrf.mxu0
  %1307 = vdwg.mxu0
  %v1309 = vunpack.c.l.b16 %v1226
  %v1310 = vpack.c.b16 %v1309, %v1309
  %1311 = vrot.lane.b32.xlu0 %v1310, 96
  %v1312 = vpop.permute.xlu0 %1311
  %v1314 = vsel %vm1240, %v1226, 0
  %v1317 = vsel %vm1240, %v1312, 0
  %1319 = vmatpush.bf16.xpose.msra.mxu0 0
  %1320 = vmatpush.bf16.xpose.msra.mxu0 0
  %1321 = vmatpush.bf16.xpose.msra.mxu0 0
  %1322 = vmatpush.bf16.xpose.msra.mxu0 0
  %1323 = vmatpush.bf16.xpose.msra.mxu0 0
  %1324 = vmatpush.bf16.xpose.msra.mxu0 0
  %1325 = vmatpush.bf16.xpose.msra.mxu0 0
  %1326 = vmatpush.bf16.xpose.msra.mxu0 %v1317
  %1327 = vmatmul.bf16.gmra.mxu0 %v1314
  %v1328 = vpop.f32.mrf.mxu0
  %v1329 = vadd.f32 %v1232, %v1328
  %v1330 = vpop.f32.mrf.mxu0
  %1331 = vdwg.mxu0
  %v1333 = vunpack.c.l.b16 %v1227
  %v1334 = vpack.c.b16 %v1333, %v1333
  %1335 = vrot.lane.b32.xlu0 %v1334, 96
  %v1336 = vpop.permute.xlu0 %1335
  %v1338 = vsel %vm1240, %v1227, 0
  %v1341 = vsel %vm1240, %v1336, 0
  %1343 = vmatpush.bf16.xpose.msra.mxu0 0
  %1344 = vmatpush.bf16.xpose.msra.mxu0 0
  %1345 = vmatpush.bf16.xpose.msra.mxu0 0
  %1346 = vmatpush.bf16.xpose.msra.mxu0 0
  %1347 = vmatpush.bf16.xpose.msra.mxu0 0
  %1348 = vmatpush.bf16.xpose.msra.mxu0 0
  %1349 = vmatpush.bf16.xpose.msra.mxu0 0
  %1350 = vmatpush.bf16.xpose.msra.mxu0 %v1341
  %1351 = vmatmul.bf16.gmra.mxu0 %v1338
  %v1352 = vpop.f32.mrf.mxu0
  %v1353 = vadd.f32 %v1231, %v1352
  %v1354 = vpop.f32.mrf.mxu0
  %1355 = vdwg.mxu0
  %v1357 = vunpack.c.l.b16 %v1228
  %v1358 = vpack.c.b16 %v1357, %v1357
  %1359 = vrot.lane.b32.xlu0 %v1358, 96
  %v1360 = vpop.permute.xlu0 %1359
  %v1362 = vsel %vm1240, %v1228, 0
  %v1365 = vsel %vm1240, %v1360, 0
  %1367 = vmatpush.bf16.xpose.msra.mxu0 0
  %1368 = vmatpush.bf16.xpose.msra.mxu0 0
  %1369 = vmatpush.bf16.xpose.msra.mxu0 0
  %1370 = vmatpush.bf16.xpose.msra.mxu0 0
  %1371 = vmatpush.bf16.xpose.msra.mxu0 0
  %1372 = vmatpush.bf16.xpose.msra.mxu0 0
  %1373 = vmatpush.bf16.xpose.msra.mxu0 0
  %1374 = vmatpush.bf16.xpose.msra.mxu0 %v1365
  %1375 = vmatmul.bf16.gmra.mxu0 %v1362
  %v1376 = vpop.f32.mrf.mxu0
  %v1377 = vadd.f32 %v1232, %v1376
  %v1378 = vpop.f32.mrf.mxu0
  %1379 = vdwg.mxu0
  %v1381 = vunpack.c.l.b16 %v1229
  %v1382 = vpack.c.b16 %v1381, %v1381
  %1383 = vrot.lane.b32.xlu0 %v1382, 96
  %v1384 = vpop.permute.xlu0 %1383
  %v1386 = vsel %vm1240, %v1229, 0
  %v1389 = vsel %vm1240, %v1384, 0
  %1391 = vmatpush.bf16.xpose.msra.mxu0 0
  %1392 = vmatpush.bf16.xpose.msra.mxu0 0
  %1393 = vmatpush.bf16.xpose.msra.mxu0 0
  %1394 = vmatpush.bf16.xpose.msra.mxu0 0
  %1395 = vmatpush.bf16.xpose.msra.mxu0 0
  %1396 = vmatpush.bf16.xpose.msra.mxu0 0
  %1397 = vmatpush.bf16.xpose.msra.mxu0 0
  %1398 = vmatpush.bf16.xpose.msra.mxu0 %v1389
  %1399 = vmatmul.bf16.gmra.mxu0 %v1386
  %v1400 = vpop.f32.mrf.mxu0
  %v1401 = vadd.f32 %v1231, %v1400
  %v1402 = vpop.f32.mrf.mxu0
  %1403 = vdwg.mxu0
  %v1405 = vunpack.c.l.b16 %v1230
  %v1406 = vpack.c.b16 %v1405, %v1405
  %1407 = vrot.lane.b32.xlu0 %v1406, 96
  %v1408 = vpop.permute.xlu0 %1407
  %v1410 = vsel %vm1240, %v1230, 0
  %v1413 = vsel %vm1240, %v1408, 0
  %1415 = vmatpush.bf16.xpose.msra.mxu0 0
  %1416 = vmatpush.bf16.xpose.msra.mxu0 0
  %1417 = vmatpush.bf16.xpose.msra.mxu0 0
  %1418 = vmatpush.bf16.xpose.msra.mxu0 0
  %1419 = vmatpush.bf16.xpose.msra.mxu0 0
  %1420 = vmatpush.bf16.xpose.msra.mxu0 0
  %1421 = vmatpush.bf16.xpose.msra.mxu0 0
  %1422 = vmatpush.bf16.xpose.msra.mxu0 %v1413
  %1423 = vmatmul.bf16.gmra.mxu0 %v1410
  %v1424 = vpop.f32.mrf.mxu0
  %v1425 = vadd.f32 %v1232, %v1424
  %v1426 = vpop.f32.mrf.mxu0
  %1427 = vdwg.mxu0
  %v1428 = vsel %vm1240, %v1257, -inf
  %1429 = vmax.xlane.f32.xlu0 %v1428
  %v1430 = vpop.xlane.xlu0 %1429
  %v1431 = vsel %vm1240, %v1281, -inf
  %1432 = vmax.xlane.f32.xlu0 %v1431
  %v1433 = vpop.xlane.xlu0 %1432
  %v1434 = vsel %vm1240, %v1305, -inf
  %1435 = vmax.xlane.f32.xlu0 %v1434
  %v1436 = vpop.xlane.xlu0 %1435
  %v1437 = vsel %vm1240, %v1329, -inf
  %1438 = vmax.xlane.f32.xlu0 %v1437
  %v1439 = vpop.xlane.xlu0 %1438
  %v1440 = vsel %vm1240, %v1353, -inf
  %1441 = vmax.xlane.f32.xlu0 %v1440
  %v1442 = vpop.xlane.xlu0 %1441
  %v1443 = vsel %vm1240, %v1377, -inf
  %1444 = vmax.xlane.f32.xlu0 %v1443
  %v1445 = vpop.xlane.xlu0 %1444
  %v1446 = vsel %vm1240, %v1401, -inf
  %1447 = vmax.xlane.f32.xlu0 %v1446
  %v1448 = vpop.xlane.xlu0 %1447
  %v1449 = vsel %vm1240, %v1425, -inf
  %1450 = vmax.xlane.f32.xlu0 %v1449
  %v1451 = vpop.xlane.xlu0 %1450
  %v1452 = vsub.f32 %v1257, %v1430
  %v1453 = vsub.f32 %v1281, %v1433
  %v1454 = vsub.f32 %v1305, %v1436
  %v1455 = vsub.f32 %v1329, %v1439
  %v1456 = vsub.f32 %v1353, %v1442
  %v1457 = vsub.f32 %v1377, %v1445
  %v1458 = vsub.f32 %v1401, %v1448
  %v1459 = vsub.f32 %v1425, %v1451
  %v1460 = vmul.f32 %v1452, 1.442695
  %v1461 = vpow.pop %v1460
  %v1462 = vmul.f32 %v1453, 1.442695
  %v1463 = vpow.pop %v1462
  %v1464 = vmul.f32 %v1454, 1.442695
  %v1465 = vpow.pop %v1464
  %v1466 = vmul.f32 %v1455, 1.442695
  %v1467 = vpow.pop %v1466
  %v1468 = vmul.f32 %v1456, 1.442695
  %v1469 = vpow.pop %v1468
  %v1470 = vmul.f32 %v1457, 1.442695
  %v1471 = vpow.pop %v1470
  %v1472 = vmul.f32 %v1458, 1.442695
  %v1473 = vpow.pop %v1472
  %v1474 = vmul.f32 %v1459, 1.442695
  %v1475 = vpow.pop %v1474
  %v1476 = vsel %vm1240, %v1461, 0.0
  %1477 = vadd.xlane.f32.xlu0 %v1476
  %v1478 = vpop.xlane.xlu0 %1477
  %v1479 = vsel %vm1240, %v1463, 0.0
  %1480 = vadd.xlane.f32.xlu0 %v1479
  %v1481 = vpop.xlane.xlu0 %1480
  %v1482 = vsel %vm1240, %v1465, 0.0
  %1483 = vadd.xlane.f32.xlu0 %v1482
  %v1484 = vpop.xlane.xlu0 %1483
  %v1485 = vsel %vm1240, %v1467, 0.0
  %1486 = vadd.xlane.f32.xlu0 %v1485
  %v1487 = vpop.xlane.xlu0 %1486
  %v1488 = vsel %vm1240, %v1469, 0.0
  %1489 = vadd.xlane.f32.xlu0 %v1488
  %v1490 = vpop.xlane.xlu0 %1489
  %v1491 = vsel %vm1240, %v1471, 0.0
  %1492 = vadd.xlane.f32.xlu0 %v1491
  %v1493 = vpop.xlane.xlu0 %1492
  %v1494 = vsel %vm1240, %v1473, 0.0
  %1495 = vadd.xlane.f32.xlu0 %v1494
  %v1496 = vpop.xlane.xlu0 %1495
  %v1497 = vsel %vm1240, %v1475, 0.0
  %1498 = vadd.xlane.f32.xlu0 %v1497
  %v1499 = vpop.xlane.xlu0 %1498
  %v1500 = vpack.c.bf16 %v1461, %v1461
  %v1501 = vpack.c.bf16 %v1463, %v1463
  %v1502 = vpack.c.bf16 %v1465, %v1465
  %v1503 = vpack.c.bf16 %v1467, %v1467
  %v1504 = vpack.c.bf16 %v1469, %v1469
  %v1505 = vpack.c.bf16 %v1471, %v1471
  %v1506 = vpack.c.bf16 %v1473, %v1473
  %v1507 = vpack.c.bf16 %v1475, %v1475
  %1508 = vrot.lane.b32.xlu0 %v1237, 64
  %v1509 = vpop.permute.xlu0 %1508
  %v1511 = vsel %vm1240, %v1500, 0
  %vm1513 = vcmask 1043456
  %v1515 = vsel %vm1513, %v1509, 0
  %1517 = vmatpush.bf16.msra.mxu0 0
  %1518 = vmatpush.bf16.msra.mxu0 0
  %1519 = vmatpush.bf16.msra.mxu0 0
  %1520 = vmatpush.bf16.msra.mxu0 0
  %1521 = vmatpush.bf16.msra.mxu0 0
  %1522 = vmatpush.bf16.msra.mxu0 0
  %1523 = vmatpush.bf16.msra.mxu0 0
  %1524 = vmatpush.bf16.msra.mxu0 %v1515
  %1525 = vmatmul.bf16.gmra.mxu0 %v1511
  %v1526 = vpop.f32.mrf.mxu0
  %v1527 = vadd.f32 0.0, %v1526
  %v1528 = vpop.f32.mrf.mxu0
  %1529 = vdwg.mxu0
  %1530 = vrot.lane.b32.xlu0 %v1262, 64
  %v1531 = vpop.permute.xlu0 %1530
  %v1533 = vsel %vm1240, %v1501, 0
  %v1536 = vsel %vm1513, %v1531, 0
  %1538 = vmatpush.bf16.msra.mxu0 0
  %1539 = vmatpush.bf16.msra.mxu0 0
  %1540 = vmatpush.bf16.msra.mxu0 0
  %1541 = vmatpush.bf16.msra.mxu0 0
  %1542 = vmatpush.bf16.msra.mxu0 0
  %1543 = vmatpush.bf16.msra.mxu0 0
  %1544 = vmatpush.bf16.msra.mxu0 0
  %1545 = vmatpush.bf16.msra.mxu0 %v1536
  %1546 = vmatmul.bf16.gmra.mxu0 %v1533
  %v1547 = vpop.f32.mrf.mxu0
  %v1548 = vadd.f32 0.0, %v1547
  %v1549 = vpop.f32.mrf.mxu0
  %1550 = vdwg.mxu0
  %1551 = vrot.lane.b32.xlu0 %v1286, 64
  %v1552 = vpop.permute.xlu0 %1551
  %v1554 = vsel %vm1240, %v1502, 0
  %v1557 = vsel %vm1513, %v1552, 0
  %1559 = vmatpush.bf16.msra.mxu0 0
  %1560 = vmatpush.bf16.msra.mxu0 0
  %1561 = vmatpush.bf16.msra.mxu0 0
  %1562 = vmatpush.bf16.msra.mxu0 0
  %1563 = vmatpush.bf16.msra.mxu0 0
  %1564 = vmatpush.bf16.msra.mxu0 0
  %1565 = vmatpush.bf16.msra.mxu0 0
  %1566 = vmatpush.bf16.msra.mxu0 %v1557
  %1567 = vmatmul.bf16.gmra.mxu0 %v1554
  %v1568 = vpop.f32.mrf.mxu0
  %v1569 = vadd.f32 0.0, %v1568
  %v1570 = vpop.f32.mrf.mxu0
  %1571 = vdwg.mxu0
  %1572 = vrot.lane.b32.xlu0 %v1310, 64
  %v1573 = vpop.permute.xlu0 %1572
  %v1575 = vsel %vm1240, %v1503, 0
  %v1578 = vsel %vm1513, %v1573, 0
  %1580 = vmatpush.bf16.msra.mxu0 0
  %1581 = vmatpush.bf16.msra.mxu0 0
  %1582 = vmatpush.bf16.msra.mxu0 0
  %1583 = vmatpush.bf16.msra.mxu0 0
  %1584 = vmatpush.bf16.msra.mxu0 0
  %1585 = vmatpush.bf16.msra.mxu0 0
  %1586 = vmatpush.bf16.msra.mxu0 0
  %1587 = vmatpush.bf16.msra.mxu0 %v1578
  %1588 = vmatmul.bf16.gmra.mxu0 %v1575
  %v1589 = vpop.f32.mrf.mxu0
  %v1590 = vadd.f32 0.0, %v1589
  %v1591 = vpop.f32.mrf.mxu0
  %1592 = vdwg.mxu0
  %1593 = vrot.lane.b32.xlu0 %v1334, 64
  %v1594 = vpop.permute.xlu0 %1593
  %v1596 = vsel %vm1240, %v1504, 0
  %v1599 = vsel %vm1513, %v1594, 0
  %1601 = vmatpush.bf16.msra.mxu0 0
  %1602 = vmatpush.bf16.msra.mxu0 0
  %1603 = vmatpush.bf16.msra.mxu0 0
  %1604 = vmatpush.bf16.msra.mxu0 0
  %1605 = vmatpush.bf16.msra.mxu0 0
  %1606 = vmatpush.bf16.msra.mxu0 0
  %1607 = vmatpush.bf16.msra.mxu0 0
  %1608 = vmatpush.bf16.msra.mxu0 %v1599
  %1609 = vmatmul.bf16.gmra.mxu0 %v1596
  %v1610 = vpop.f32.mrf.mxu0
  %v1611 = vadd.f32 0.0, %v1610
  %v1612 = vpop.f32.mrf.mxu0
  %1613 = vdwg.mxu0
  %1614 = vrot.lane.b32.xlu0 %v1358, 64
  %v1615 = vpop.permute.xlu0 %1614
  %v1617 = vsel %vm1240, %v1505, 0
  %v1620 = vsel %vm1513, %v1615, 0
  %1622 = vmatpush.bf16.msra.mxu0 0
  %1623 = vmatpush.bf16.msra.mxu0 0
  %1624 = vmatpush.bf16.msra.mxu0 0
  %1625 = vmatpush.bf16.msra.mxu0 0
  %1626 = vmatpush.bf16.msra.mxu0 0
  %1627 = vmatpush.bf16.msra.mxu0 0
  %1628 = vmatpush.bf16.msra.mxu0 0
  %1629 = vmatpush.bf16.msra.mxu0 %v1620
  %1630 = vmatmul.bf16.gmra.mxu0 %v1617
  %v1631 = vpop.f32.mrf.mxu0
  %v1632 = vadd.f32 0.0, %v1631
  %v1633 = vpop.f32.mrf.mxu0
  %1634 = vdwg.mxu0
  %1635 = vrot.lane.b32.xlu0 %v1382, 64
  %v1636 = vpop.permute.xlu0 %1635
  %v1638 = vsel %vm1240, %v1506, 0
  %v1641 = vsel %vm1513, %v1636, 0
  %1643 = vmatpush.bf16.msra.mxu0 0
  %1644 = vmatpush.bf16.msra.mxu0 0
  %1645 = vmatpush.bf16.msra.mxu0 0
  %1646 = vmatpush.bf16.msra.mxu0 0
  %1647 = vmatpush.bf16.msra.mxu0 0
  %1648 = vmatpush.bf16.msra.mxu0 0
  %1649 = vmatpush.bf16.msra.mxu0 0
  %1650 = vmatpush.bf16.msra.mxu0 %v1641
  %1651 = vmatmul.bf16.gmra.mxu0 %v1638
  %v1652 = vpop.f32.mrf.mxu0
  %v1653 = vadd.f32 0.0, %v1652
  %v1654 = vpop.f32.mrf.mxu0
  %1655 = vdwg.mxu0
  %1656 = vrot.lane.b32.xlu0 %v1406, 64
  %v1657 = vpop.permute.xlu0 %1656
  %v1659 = vsel %vm1240, %v1507, 0
  %v1662 = vsel %vm1513, %v1657, 0
  %1664 = vmatpush.bf16.msra.mxu0 0
  %1665 = vmatpush.bf16.msra.mxu0 0
  %1666 = vmatpush.bf16.msra.mxu0 0
  %1667 = vmatpush.bf16.msra.mxu0 0
  %1668 = vmatpush.bf16.msra.mxu0 0
  %1669 = vmatpush.bf16.msra.mxu0 0
  %1670 = vmatpush.bf16.msra.mxu0 0
  %1671 = vmatpush.bf16.msra.mxu0 %v1662
  %1672 = vmatmul.bf16.gmra.mxu0 %v1659
  %v1673 = vpop.f32.mrf.mxu0
  %v1674 = vadd.f32 0.0, %v1673
  %v1675 = vpop.f32.mrf.mxu0
  %1676 = vdwg.mxu0
  %v1677 = vrcp.pop %v1478
  %v1678 = vrcp.pop %v1481
  %v1679 = vrcp.pop %v1484
  %v1680 = vrcp.pop %v1487
  %v1681 = vrcp.pop %v1490
  %v1682 = vrcp.pop %v1493
  %v1683 = vrcp.pop %v1496
  %v1684 = vrcp.pop %v1499
  %v1685 = vmul.f32 %v1527, %v1677
  %v1686 = vmul.f32 %v1548, %v1678
  %v1687 = vmul.f32 %v1569, %v1679
  %v1688 = vmul.f32 %v1590, %v1680
  %v1689 = vmul.f32 %v1611, %v1681
  %v1690 = vmul.f32 %v1632, %v1682
  %v1691 = vmul.f32 %v1653, %v1683
  %v1692 = vmul.f32 %v1674, %v1684
  %1695 = vrot.lane.b32.xlu0 %v1687, 8
  %v1696 = vpop.permute.xlu0 %1695
  %1697 = vrot.lane.b32.xlu0 %v1688, 8
  %v1698 = vpop.permute.xlu0 %1697
  %1703 = vrot.lane.b32.xlu0 %v1689, 16
  %v1704 = vpop.permute.xlu0 %1703
  %1705 = vrot.lane.b32.xlu0 %v1690, 16
  %v1706 = vpop.permute.xlu0 %1705
  %1711 = vrot.lane.b32.xlu0 %v1691, 24
  %v1712 = vpop.permute.xlu0 %1711
  %1713 = vrot.lane.b32.xlu0 %v1692, 24
  %v1714 = vpop.permute.xlu0 %1713
  %v1717 = vsel %vm1240, %v1685, %v1696
  %v1718 = vsel %vm1240, %v1686, %v1698
  %vm1719 = vcmask 130048
  %v1720 = vsel %vm1719, %v1717, %v1704
  %v1721 = vsel %vm1719, %v1718, %v1706
  %vm1722 = vcmask 195584
  %v1723 = vsel %vm1722, %v1720, %v1712
  %v1724 = vsel %vm1722, %v1721, %v1714
  %v1725 = vpack.c.bf16 %v1724, %v1723
  %v1726 = vperm.slane %v1134, 1
  %v1731 = vunpack.c.l.b16 %v1114
  %v1732 = vunpack.c.l.b16 %v1115
  %v1733 = vunpack.c.l.b16 %v1116
  %v1734 = vunpack.c.l.b16 %v1117
  %v1735 = vpack.c.b16 %v1732, %v1731
  %v1736 = vpack.c.b16 %v1734, %v1733
  %v1738 = vsel %vm1167, %v1725, 0
  %v1741 = vsel %vm1167, %v1735, 0
  %v1744 = vsel %vm1167, %v1736, 0
  %1746 = vmatpush.bf16.xpose.msra.mxu0 0
  %1747 = vmatpush.bf16.xpose.msra.mxu0 0
  %1748 = vmatpush.bf16.xpose.msra.mxu0 0
  %1749 = vmatpush.bf16.xpose.msra.mxu0 0
  %1750 = vmatpush.bf16.xpose.msra.mxu0 0
  %1751 = vmatpush.bf16.xpose.msra.mxu0 0
  %1752 = vmatpush.bf16.xpose.msra.mxu0 %v1744
  %1753 = vmatpush.bf16.xpose.msra.mxu0 %v1741
  %1754 = vmatmul.bf16.gmra.mxu0 %v1738
  %v1755 = vpop.f32.mrf.mxu0
  %v1756 = vadd.f32 %v1726, %v1755
  %v1757 = vpop.f32.mrf.mxu0
  %v1758 = vadd.f32 %v1726, %v1757
  %1759 = vdwg.mxu0
  %v1760 = vadd.f32 %v1093, %v1756
  %v1761 = vadd.f32 %v1095, %v1758
  %v1762 = vsel %vm1167, %v1760, 0.0
  %1763 = vadd.xlane.f32.xlu0 %v1762
  %v1764 = vpop.xlane.xlu0 %1763
  %v1765 = vsel %vm1167, %v1761, 0.0
  %1766 = vadd.xlane.f32.xlu0 %v1765
  %v1767 = vpop.xlane.xlu0 %1766
  %v1768 = vrcp.pop 32.0
  %v1769 = vmul.f32 32.0, %v1768
  %v1770 = vsub.f32 1.0, %v1769
  %v1771 = vmul.f32 %v1768, %v1770
  %v1772 = vadd.f32 %v1768, %v1771
  %vm1773 = vweird.f32 %v1768
  %v1774 = vsel %vm1773, %v1768, %v1772
  %v1775 = vmul.f32 %v1764, %v1774
  %v1776 = vmul.f32 %v1767, %v1774
  %v1777 = vsub.f32 %v1760, %v1775
  %v1778 = vsub.f32 %v1761, %v1776
  %v1779 = vmul.f32 %v1777, %v1777
  %v1780 = vmul.f32 %v1778, %v1778
  %v1781 = vsel %vm1167, %v1779, 0.0
  %1782 = vadd.xlane.f32.xlu0 %v1781
  %v1783 = vpop.xlane.xlu0 %1782
  %v1784 = vsel %vm1167, %v1780, 0.0
  %1785 = vadd.xlane.f32.xlu0 %v1784
  %v1786 = vpop.xlane.xlu0 %1785
  %v1787 = vmul.f32 %v1783, %v1774
  %v1788 = vmul.f32 %v1786, %v1774
  %v1789 = vadd.f32 %v1787, 1e-05
  %v1790 = vadd.f32 %v1788, 1e-05
  %v1791 = vrsqrt.pop %v1789
  %v1792 = vmul.f32 %v1791, %v1789
  %v1793 = vmul.f32 %v1792, %v1791
  %v1794 = vmul.f32 0.5, %v1793
  %v1795 = vsub.f32 1.5, %v1794
  %v1796 = vmul.f32 %v1791, %v1795
  %vm1797 = vweird.f32 %v1789
  %vm1798 = vweird.f32 %v1791
  %vm1799 = vmor %vm1797, %vm1798
  %v1800 = vsel %vm1799, %v1791, %v1796
  %v1801 = vrsqrt.pop %v1790
  %v1802 = vmul.f32 %v1801, %v1790
  %v1803 = vmul.f32 %v1802, %v1801
  %v1804 = vmul.f32 0.5, %v1803
  %v1805 = vsub.f32 1.5, %v1804
  %v1806 = vmul.f32 %v1801, %v1805
  %vm1807 = vweird.f32 %v1790
  %vm1808 = vweird.f32 %v1801
  %vm1809 = vmor %vm1807, %vm1808
  %v1810 = vsel %vm1809, %v1801, %v1806
  %v1811 = vmul.f32 %v1777, %v1800
  %v1812 = vmul.f32 %v1778, %v1810
  %v1813 = vperm.slane %v1134, 2
  %v1814 = vmul.f32 %v1811, %v1813
  %v1815 = vmul.f32 %v1812, %v1813
  %v1816 = vperm.slane %v1134, 3
  %v1817 = vadd.f32 %v1814, %v1816
  %v1818 = vadd.f32 %v1815, %v1816
  %v1819 = vpack.c.bf16 %v1818, %v1817
  %v1820 = vperm.slane %v1134, 4
  %v1829 = vunpack.c.l.b16 %v1118
  %v1830 = vunpack.c.l.b16 %v1119
  %v1831 = vunpack.c.l.b16 %v1120
  %v1832 = vunpack.c.l.b16 %v1121
  %v1833 = vunpack.c.l.b16 %v1122
  %v1834 = vunpack.c.l.b16 %v1123
  %v1835 = vunpack.c.l.b16 %v1124
  %v1836 = vunpack.c.l.b16 %v1125
  %v1837 = vpack.c.b16 %v1830, %v1829
  %v1838 = vpack.c.b16 %v1832, %v1831
  %v1839 = vpack.c.b16 %v1834, %v1833
  %v1840 = vpack.c.b16 %v1836, %v1835
  %v1842 = vsel %vm1167, %v1819, 0
  %v1845 = vsel %vm1167, %v1837, 0
  %v1848 = vsel %vm1167, %v1838, 0
  %v1851 = vsel %vm1167, %v1839, 0
  %v1854 = vsel %vm1167, %v1840, 0
  %1856 = vmatpush.bf16.xpose.msra.mxu0 0
  %1857 = vmatpush.bf16.xpose.msra.mxu0 0
  %1858 = vmatpush.bf16.xpose.msra.mxu0 0
  %1859 = vmatpush.bf16.xpose.msra.mxu0 0
  %1860 = vmatpush.bf16.xpose.msra.mxu0 %v1854
  %1861 = vmatpush.bf16.xpose.msra.mxu0 %v1851
  %1862 = vmatpush.bf16.xpose.msra.mxu0 %v1848
  %1863 = vmatpush.bf16.xpose.msra.mxu0 %v1845
  %1864 = vmatmul.bf16.gmra.mxu0 %v1842
  %v1865 = vpop.f32.mrf.mxu0
  %v1866 = vadd.f32 %v1820, %v1865
  %v1867 = vpop.f32.mrf.mxu0
  %v1868 = vadd.f32 %v1820, %v1867
  %1869 = vdwg.mxu0
  %v1870 = vmax.f32 %v1866, 0.0
  %v1871 = vmax.f32 %v1868, 0.0
  %v1872 = vpack.c.bf16 %v1871, %v1870
  %v1873 = vperm.slane %v1134, 5
  %v1882 = vunpack.c.l.b16 %v1126
  %v1883 = vunpack.c.l.b16 %v1127
  %v1884 = vunpack.c.l.b16 %v1128
  %v1885 = vunpack.c.l.b16 %v1129
  %v1886 = vunpack.c.l.b16 %v1130
  %v1887 = vunpack.c.l.b16 %v1131
  %v1888 = vunpack.c.l.b16 %v1132
  %v1889 = vunpack.c.l.b16 %v1133
  %v1890 = vpack.c.b16 %v1883, %v1882
  %v1891 = vpack.c.b16 %v1885, %v1884
  %v1892 = vpack.c.b16 %v1887, %v1886
  %v1893 = vpack.c.b16 %v1889, %v1888
  %vm1898 = vcmask 523264
  %v1900 = vsel %vm1898, %v1872, 0
  %1902 = vmatpush.bf16.msra.mxu0 0
  %1903 = vmatpush.bf16.msra.mxu0 0
  %1904 = vmatpush.bf16.msra.mxu0 0
  %1905 = vmatpush.bf16.msra.mxu0 0
  %1906 = vmatpush.bf16.msra.mxu0 %v1893
  %1907 = vmatpush.bf16.msra.mxu0 %v1892
  %1908 = vmatpush.bf16.msra.mxu0 %v1891
  %1909 = vmatpush.bf16.msra.mxu0 %v1890
  %1910 = vmatmul.bf16.gmra.mxu0 %v1900
  %v1911 = vpop.f32.mrf.mxu0
  %v1912 = vadd.f32 %v1873, %v1911
  %v1913 = vpop.f32.mrf.mxu0
  %v1914 = vadd.f32 %v1873, %v1913
  %1915 = vdwg.mxu0
  %v1916 = vadd.f32 %v1817, %v1912
  %v1917 = vadd.f32 %v1818, %v1914
  %v1918 = vsel %vm1167, %v1916, 0.0
  %1919 = vadd.xlane.f32.xlu0 %v1918
  %v1920 = vpop.xlane.xlu0 %1919
  %v1921 = vsel %vm1167, %v1917, 0.0
  %1922 = vadd.xlane.f32.xlu0 %v1921
  %v1923 = vpop.xlane.xlu0 %1922
  %v1924 = vmul.f32 %v1920, %v1774
  %v1925 = vmul.f32 %v1923, %v1774
  %v1926 = vsub.f32 %v1916, %v1924
  %v1927 = vsub.f32 %v1917, %v1925
  %v1928 = vmul.f32 %v1926, %v1926
  %v1929 = vmul.f32 %v1927, %v1927
  %v1930 = vsel %vm1167, %v1928, 0.0
  %1931 = vadd.xlane.f32.xlu0 %v1930
  %v1932 = vpop.xlane.xlu0 %1931
  %v1933 = vsel %vm1167, %v1929, 0.0
  %1934 = vadd.xlane.f32.xlu0 %v1933
  %v1935 = vpop.xlane.xlu0 %1934
  %v1936 = vmul.f32 %v1932, %v1774
  %v1937 = vmul.f32 %v1935, %v1774
  %v1938 = vadd.f32 %v1936, 1e-05
  %v1939 = vadd.f32 %v1937, 1e-05
  %v1940 = vrsqrt.pop %v1938
  %v1941 = vmul.f32 %v1940, %v1938
  %v1942 = vmul.f32 %v1941, %v1940
  %v1943 = vmul.f32 0.5, %v1942
  %v1944 = vsub.f32 1.5, %v1943
  %v1945 = vmul.f32 %v1940, %v1944
  %vm1946 = vweird.f32 %v1938
  %vm1947 = vweird.f32 %v1940
  %vm1948 = vmor %vm1946, %vm1947
  %v1949 = vsel %vm1948, %v1940, %v1945
  %v1950 = vrsqrt.pop %v1939
  %v1951 = vmul.f32 %v1950, %v1939
  %v1952 = vmul.f32 %v1951, %v1950
  %v1953 = vmul.f32 0.5, %v1952
  %v1954 = vsub.f32 1.5, %v1953
  %v1955 = vmul.f32 %v1950, %v1954
  %vm1956 = vweird.f32 %v1939
  %vm1957 = vweird.f32 %v1950
  %vm1958 = vmor %vm1956, %vm1957
  %v1959 = vsel %vm1958, %v1950, %v1955
  %v1960 = vmul.f32 %v1926, %v1949
  %v1961 = vmul.f32 %v1927, %v1959
  %v1962 = vperm.slane %v1134, 6
  %v1963 = vmul.f32 %v1960, %v1962
  %v1964 = vmul.f32 %v1961, %v1962
  %v1965 = vperm.slane %v1134, 7
  %v1966 = vadd.f32 %v1963, %v1965
  %v1967 = vadd.f32 %v1964, %v1965
  %v1968 = vld [vmem:[%s2 + $0x400] sm:$0xf]
  %v1969 = vld [vmem:[%s2 + $0x404] sm:$0xf]
  %v1970 = vld [vmem:[%s2 + $0x408] sm:$0xf]
  %v1971 = vld [vmem:[%s2 + $0x40c] sm:$0xf]
  %v1972 = vld [vmem:[%s2 + $0x410] sm:$0xf]
  %v1973 = vld [vmem:[%s2 + $0x414] sm:$0xf]
  %v1974 = vld [vmem:[%s2 + $0x418] sm:$0xf]
  %v1975 = vld [vmem:[%s2 + $0x41c] sm:$0xf]
  %v1976 = vld [vmem:[%s2 + $0x420] sm:$0xf]
  %v1977 = vld [vmem:[%s2 + $0x424] sm:$0xf]
  %v1978 = vld [vmem:[%s2 + $0x428] sm:$0xf]
  %v1979 = vld [vmem:[%s2 + $0x42c] sm:$0xf]
  %v1980 = vld [vmem:[%s2 + $0x430] sm:$0xf]
  %v1981 = vld [vmem:[%s2 + $0x434] sm:$0xf]
  %v1982 = vld [vmem:[%s2 + $0x438] sm:$0xf]
  %v1983 = vld [vmem:[%s2 + $0x43c] sm:$0xf]
  %v1984 = vld [vmem:[%s2 + $0x440] sm:$0xf]
  %v1985 = vld [vmem:[%s2 + $0x444] sm:$0xf]
  %v1986 = vld [vmem:[%s2 + $0x448] sm:$0xf]
  %v1987 = vld [vmem:[%s2 + $0x44c] sm:$0xf]
  %v1988 = vld [vmem:[%s2 + $0x450] sm:$0xf]
  %v1989 = vld [vmem:[%s2 + $0x454] sm:$0xf]
  %v1990 = vld [vmem:[%s2 + $0x458] sm:$0xf]
  %v1991 = vld [vmem:[%s2 + $0x45c] sm:$0xf]
  %v1992 = vld [vmem:[%s2 + $0x460] sm:$0xf]
  %v1993 = vld [vmem:[%s2 + $0x464] sm:$0xf]
  %v1994 = vld [vmem:[%s2 + $0x468] sm:$0xf]
  %v1995 = vld [vmem:[%s2 + $0x46c] sm:$0xf]
  %v1996 = vld [vmem:[%s2 + $0x470] sm:$0xf]
  %v1997 = vld [vmem:[%s2 + $0x474] sm:$0xf]
  %v1998 = vld [vmem:[%s2 + $0x478] sm:$0xf]
  %v1999 = vld [vmem:[%s2 + $0x47c] sm:$0xf]
  %v2000 = vld [vmem:[%s3 + $0x20] sm:$0xff]
  %v2001 = vpack.c.bf16 %v1967, %v1966
  %v2002 = vperm.slane %v2000, 0
  %v2015 = vunpack.c.l.b16 %v1968
  %v2016 = vunpack.c.l.b16 %v1969
  %v2017 = vunpack.c.l.b16 %v1970
  %v2018 = vunpack.c.l.b16 %v1971
  %v2019 = vunpack.c.l.b16 %v1972
  %v2020 = vunpack.c.l.b16 %v1973
  %v2021 = vunpack.c.l.b16 %v1974
  %v2022 = vunpack.c.l.b16 %v1975
  %v2023 = vunpack.c.l.b16 %v1976
  %v2024 = vunpack.c.l.b16 %v1977
  %v2025 = vunpack.c.l.b16 %v1978
  %v2026 = vunpack.c.l.b16 %v1979
  %v2027 = vpack.c.b16 %v2016, %v2015
  %v2028 = vpack.c.b16 %v2018, %v2017
  %v2029 = vpack.c.b16 %v2020, %v2019
  %v2030 = vpack.c.b16 %v2022, %v2021
  %v2031 = vpack.c.b16 %v2024, %v2023
  %v2032 = vpack.c.b16 %v2026, %v2025
  %v2034 = vsel %vm1167, %v2001, 0
  %v2037 = vsel %vm1167, %v2027, 0
  %v2040 = vsel %vm1167, %v2028, 0
  %v2043 = vsel %vm1167, %v2029, 0
  %v2046 = vsel %vm1167, %v2030, 0
  %v2049 = vsel %vm1167, %v2031, 0
  %v2052 = vsel %vm1167, %v2032, 0
  %2054 = vmatpush.bf16.xpose.msra.mxu0 0
  %2055 = vmatpush.bf16.xpose.msra.mxu0 0
  %2056 = vmatpush.bf16.xpose.msra.mxu0 %v2052
  %2057 = vmatpush.bf16.xpose.msra.mxu0 %v2049
  %2058 = vmatpush.bf16.xpose.msra.mxu0 %v2046
  %2059 = vmatpush.bf16.xpose.msra.mxu0 %v2043
  %2060 = vmatpush.bf16.xpose.msra.mxu0 %v2040
  %2061 = vmatpush.bf16.xpose.msra.mxu0 %v2037
  %2062 = vmatmul.bf16.gmra.mxu0 %v2034
  %v2063 = vpop.f32.mrf.mxu0
  %v2064 = vadd.f32 %v2002, %v2063
  %v2065 = vpop.f32.mrf.mxu0
  %v2066 = vadd.f32 %v2002, %v2065
  %2067 = vdwg.mxu0
  %2070 = vrot.lane.b32.xlu0 %v2064, 120
  %v2071 = vpop.permute.xlu0 %2070
  %2072 = vrot.lane.b32.xlu0 %v2066, 120
  %v2073 = vpop.permute.xlu0 %2072
  %2076 = vrot.lane.b32.xlu0 %v2064, 112
  %v2077 = vpop.permute.xlu0 %2076
  %2078 = vrot.lane.b32.xlu0 %v2066, 112
  %v2079 = vpop.permute.xlu0 %2078
  %2082 = vrot.lane.b32.xlu0 %v2064, 104
  %v2083 = vpop.permute.xlu0 %2082
  %2084 = vrot.lane.b32.xlu0 %v2066, 104
  %v2085 = vpop.permute.xlu0 %2084
  %v2088 = vpack.c.bf16 %v2064, %v2064
  %v2089 = vpack.c.bf16 %v2066, %v2066
  %v2090 = vpack.c.bf16 %v2071, %v2071
  %v2091 = vpack.c.bf16 %v2073, %v2073
  %v2092 = vpack.c.bf16 %v2077, %v2077
  %v2093 = vpack.c.bf16 %v2079, %v2079
  %v2094 = vpack.c.bf16 %v2083, %v2083
  %v2095 = vpack.c.bf16 %v2085, %v2085
  %v2097 = vunpack.c.l.b16 %v2088
  %v2098 = vpack.c.b16 %v2097, %v2097
  %2099 = vrot.lane.b32.xlu0 %v2098, 96
  %v2100 = vpop.permute.xlu0 %2099
  %v2102 = vsel %vm1240, %v2088, 0
  %v2105 = vsel %vm1240, %v2100, 0
  %2107 = vmatpush.bf16.xpose.msra.mxu0 0
  %2108 = vmatpush.bf16.xpose.msra.mxu0 0
  %2109 = vmatpush.bf16.xpose.msra.mxu0 0
  %2110 = vmatpush.bf16.xpose.msra.mxu0 0
  %2111 = vmatpush.bf16.xpose.msra.mxu0 0
  %2112 = vmatpush.bf16.xpose.msra.mxu0 0
  %2113 = vmatpush.bf16.xpose.msra.mxu0 0
  %2114 = vmatpush.bf16.xpose.msra.mxu0 %v2105
  %2115 = vmatmul.bf16.gmra.mxu0 %v2102
  %v2116 = vpop.f32.mrf.mxu0
  %v2117 = vadd.f32 %v1231, %v2116
  %v2118 = vpop.f32.mrf.mxu0
  %2119 = vdwg.mxu0
  %v2121 = vunpack.c.l.b16 %v2089
  %v2122 = vpack.c.b16 %v2121, %v2121
  %2123 = vrot.lane.b32.xlu0 %v2122, 96
  %v2124 = vpop.permute.xlu0 %2123
  %v2126 = vsel %vm1240, %v2089, 0
  %v2129 = vsel %vm1240, %v2124, 0
  %2131 = vmatpush.bf16.xpose.msra.mxu0 0
  %2132 = vmatpush.bf16.xpose.msra.mxu0 0
  %2133 = vmatpush.bf16.xpose.msra.mxu0 0
  %2134 = vmatpush.bf16.xpose.msra.mxu0 0
  %2135 = vmatpush.bf16.xpose.msra.mxu0 0
  %2136 = vmatpush.bf16.xpose.msra.mxu0 0
  %2137 = vmatpush.bf16.xpose.msra.mxu0 0
  %2138 = vmatpush.bf16.xpose.msra.mxu0 %v2129
  %2139 = vmatmul.bf16.gmra.mxu0 %v2126
  %v2140 = vpop.f32.mrf.mxu0
  %v2141 = vadd.f32 %v1232, %v2140
  %v2142 = vpop.f32.mrf.mxu0
  %2143 = vdwg.mxu0
  %v2145 = vunpack.c.l.b16 %v2090
  %v2146 = vpack.c.b16 %v2145, %v2145
  %2147 = vrot.lane.b32.xlu0 %v2146, 96
  %v2148 = vpop.permute.xlu0 %2147
  %v2150 = vsel %vm1240, %v2090, 0
  %v2153 = vsel %vm1240, %v2148, 0
  %2155 = vmatpush.bf16.xpose.msra.mxu0 0
  %2156 = vmatpush.bf16.xpose.msra.mxu0 0
  %2157 = vmatpush.bf16.xpose.msra.mxu0 0
  %2158 = vmatpush.bf16.xpose.msra.mxu0 0
  %2159 = vmatpush.bf16.xpose.msra.mxu0 0
  %2160 = vmatpush.bf16.xpose.msra.mxu0 0
  %2161 = vmatpush.bf16.xpose.msra.mxu0 0
  %2162 = vmatpush.bf16.xpose.msra.mxu0 %v2153
  %2163 = vmatmul.bf16.gmra.mxu0 %v2150
  %v2164 = vpop.f32.mrf.mxu0
  %v2165 = vadd.f32 %v1231, %v2164
  %v2166 = vpop.f32.mrf.mxu0
  %2167 = vdwg.mxu0
  %v2169 = vunpack.c.l.b16 %v2091
  %v2170 = vpack.c.b16 %v2169, %v2169
  %2171 = vrot.lane.b32.xlu0 %v2170, 96
  %v2172 = vpop.permute.xlu0 %2171
  %v2174 = vsel %vm1240, %v2091, 0
  %v2177 = vsel %vm1240, %v2172, 0
  %2179 = vmatpush.bf16.xpose.msra.mxu0 0
  %2180 = vmatpush.bf16.xpose.msra.mxu0 0
  %2181 = vmatpush.bf16.xpose.msra.mxu0 0
  %2182 = vmatpush.bf16.xpose.msra.mxu0 0
  %2183 = vmatpush.bf16.xpose.msra.mxu0 0
  %2184 = vmatpush.bf16.xpose.msra.mxu0 0
  %2185 = vmatpush.bf16.xpose.msra.mxu0 0
  %2186 = vmatpush.bf16.xpose.msra.mxu0 %v2177
  %2187 = vmatmul.bf16.gmra.mxu0 %v2174
  %v2188 = vpop.f32.mrf.mxu0
  %v2189 = vadd.f32 %v1232, %v2188
  %v2190 = vpop.f32.mrf.mxu0
  %2191 = vdwg.mxu0
  %v2193 = vunpack.c.l.b16 %v2092
  %v2194 = vpack.c.b16 %v2193, %v2193
  %2195 = vrot.lane.b32.xlu0 %v2194, 96
  %v2196 = vpop.permute.xlu0 %2195
  %v2198 = vsel %vm1240, %v2092, 0
  %v2201 = vsel %vm1240, %v2196, 0
  %2203 = vmatpush.bf16.xpose.msra.mxu0 0
  %2204 = vmatpush.bf16.xpose.msra.mxu0 0
  %2205 = vmatpush.bf16.xpose.msra.mxu0 0
  %2206 = vmatpush.bf16.xpose.msra.mxu0 0
  %2207 = vmatpush.bf16.xpose.msra.mxu0 0
  %2208 = vmatpush.bf16.xpose.msra.mxu0 0
  %2209 = vmatpush.bf16.xpose.msra.mxu0 0
  %2210 = vmatpush.bf16.xpose.msra.mxu0 %v2201
  %2211 = vmatmul.bf16.gmra.mxu0 %v2198
  %v2212 = vpop.f32.mrf.mxu0
  %v2213 = vadd.f32 %v1231, %v2212
  %v2214 = vpop.f32.mrf.mxu0
  %2215 = vdwg.mxu0
  %v2217 = vunpack.c.l.b16 %v2093
  %v2218 = vpack.c.b16 %v2217, %v2217
  %2219 = vrot.lane.b32.xlu0 %v2218, 96
  %v2220 = vpop.permute.xlu0 %2219
  %v2222 = vsel %vm1240, %v2093, 0
  %v2225 = vsel %vm1240, %v2220, 0
  %2227 = vmatpush.bf16.xpose.msra.mxu0 0
  %2228 = vmatpush.bf16.xpose.msra.mxu0 0
  %2229 = vmatpush.bf16.xpose.msra.mxu0 0
  %2230 = vmatpush.bf16.xpose.msra.mxu0 0
  %2231 = vmatpush.bf16.xpose.msra.mxu0 0
  %2232 = vmatpush.bf16.xpose.msra.mxu0 0
  %2233 = vmatpush.bf16.xpose.msra.mxu0 0
  %2234 = vmatpush.bf16.xpose.msra.mxu0 %v2225
  %2235 = vmatmul.bf16.gmra.mxu0 %v2222
  %v2236 = vpop.f32.mrf.mxu0
  %v2237 = vadd.f32 %v1232, %v2236
  %v2238 = vpop.f32.mrf.mxu0
  %2239 = vdwg.mxu0
  %v2241 = vunpack.c.l.b16 %v2094
  %v2242 = vpack.c.b16 %v2241, %v2241
  %2243 = vrot.lane.b32.xlu0 %v2242, 96
  %v2244 = vpop.permute.xlu0 %2243
  %v2246 = vsel %vm1240, %v2094, 0
  %v2249 = vsel %vm1240, %v2244, 0
  %2251 = vmatpush.bf16.xpose.msra.mxu0 0
  %2252 = vmatpush.bf16.xpose.msra.mxu0 0
  %2253 = vmatpush.bf16.xpose.msra.mxu0 0
  %2254 = vmatpush.bf16.xpose.msra.mxu0 0
  %2255 = vmatpush.bf16.xpose.msra.mxu0 0
  %2256 = vmatpush.bf16.xpose.msra.mxu0 0
  %2257 = vmatpush.bf16.xpose.msra.mxu0 0
  %2258 = vmatpush.bf16.xpose.msra.mxu0 %v2249
  %2259 = vmatmul.bf16.gmra.mxu0 %v2246
  %v2260 = vpop.f32.mrf.mxu0
  %v2261 = vadd.f32 %v1231, %v2260
  %v2262 = vpop.f32.mrf.mxu0
  %2263 = vdwg.mxu0
  %v2265 = vunpack.c.l.b16 %v2095
  %v2266 = vpack.c.b16 %v2265, %v2265
  %2267 = vrot.lane.b32.xlu0 %v2266, 96
  %v2268 = vpop.permute.xlu0 %2267
  %v2270 = vsel %vm1240, %v2095, 0
  %v2273 = vsel %vm1240, %v2268, 0
  %2275 = vmatpush.bf16.xpose.msra.mxu0 0
  %2276 = vmatpush.bf16.xpose.msra.mxu0 0
  %2277 = vmatpush.bf16.xpose.msra.mxu0 0
  %2278 = vmatpush.bf16.xpose.msra.mxu0 0
  %2279 = vmatpush.bf16.xpose.msra.mxu0 0
  %2280 = vmatpush.bf16.xpose.msra.mxu0 0
  %2281 = vmatpush.bf16.xpose.msra.mxu0 0
  %2282 = vmatpush.bf16.xpose.msra.mxu0 %v2273
  %2283 = vmatmul.bf16.gmra.mxu0 %v2270
  %v2284 = vpop.f32.mrf.mxu0
  %v2285 = vadd.f32 %v1232, %v2284
  %v2286 = vpop.f32.mrf.mxu0
  %2287 = vdwg.mxu0
  %v2288 = vsel %vm1240, %v2117, -inf
  %2289 = vmax.xlane.f32.xlu0 %v2288
  %v2290 = vpop.xlane.xlu0 %2289
  %v2291 = vsel %vm1240, %v2141, -inf
  %2292 = vmax.xlane.f32.xlu0 %v2291
  %v2293 = vpop.xlane.xlu0 %2292
  %v2294 = vsel %vm1240, %v2165, -inf
  %2295 = vmax.xlane.f32.xlu0 %v2294
  %v2296 = vpop.xlane.xlu0 %2295
  %v2297 = vsel %vm1240, %v2189, -inf
  %2298 = vmax.xlane.f32.xlu0 %v2297
  %v2299 = vpop.xlane.xlu0 %2298
  %v2300 = vsel %vm1240, %v2213, -inf
  %2301 = vmax.xlane.f32.xlu0 %v2300
  %v2302 = vpop.xlane.xlu0 %2301
  %v2303 = vsel %vm1240, %v2237, -inf
  %2304 = vmax.xlane.f32.xlu0 %v2303
  %v2305 = vpop.xlane.xlu0 %2304
  %v2306 = vsel %vm1240, %v2261, -inf
  %2307 = vmax.xlane.f32.xlu0 %v2306
  %v2308 = vpop.xlane.xlu0 %2307
  %v2309 = vsel %vm1240, %v2285, -inf
  %2310 = vmax.xlane.f32.xlu0 %v2309
  %v2311 = vpop.xlane.xlu0 %2310
  %v2312 = vsub.f32 %v2117, %v2290
  %v2313 = vsub.f32 %v2141, %v2293
  %v2314 = vsub.f32 %v2165, %v2296
  %v2315 = vsub.f32 %v2189, %v2299
  %v2316 = vsub.f32 %v2213, %v2302
  %v2317 = vsub.f32 %v2237, %v2305
  %v2318 = vsub.f32 %v2261, %v2308
  %v2319 = vsub.f32 %v2285, %v2311
  %v2320 = vmul.f32 %v2312, 1.442695
  %v2321 = vpow.pop %v2320
  %v2322 = vmul.f32 %v2313, 1.442695
  %v2323 = vpow.pop %v2322
  %v2324 = vmul.f32 %v2314, 1.442695
  %v2325 = vpow.pop %v2324
  %v2326 = vmul.f32 %v2315, 1.442695
  %v2327 = vpow.pop %v2326
  %v2328 = vmul.f32 %v2316, 1.442695
  %v2329 = vpow.pop %v2328
  %v2330 = vmul.f32 %v2317, 1.442695
  %v2331 = vpow.pop %v2330
  %v2332 = vmul.f32 %v2318, 1.442695
  %v2333 = vpow.pop %v2332
  %v2334 = vmul.f32 %v2319, 1.442695
  %v2335 = vpow.pop %v2334
  %v2336 = vsel %vm1240, %v2321, 0.0
  %2337 = vadd.xlane.f32.xlu0 %v2336
  %v2338 = vpop.xlane.xlu0 %2337
  %v2339 = vsel %vm1240, %v2323, 0.0
  %2340 = vadd.xlane.f32.xlu0 %v2339
  %v2341 = vpop.xlane.xlu0 %2340
  %v2342 = vsel %vm1240, %v2325, 0.0
  %2343 = vadd.xlane.f32.xlu0 %v2342
  %v2344 = vpop.xlane.xlu0 %2343
  %v2345 = vsel %vm1240, %v2327, 0.0
  %2346 = vadd.xlane.f32.xlu0 %v2345
  %v2347 = vpop.xlane.xlu0 %2346
  %v2348 = vsel %vm1240, %v2329, 0.0
  %2349 = vadd.xlane.f32.xlu0 %v2348
  %v2350 = vpop.xlane.xlu0 %2349
  %v2351 = vsel %vm1240, %v2331, 0.0
  %2352 = vadd.xlane.f32.xlu0 %v2351
  %v2353 = vpop.xlane.xlu0 %2352
  %v2354 = vsel %vm1240, %v2333, 0.0
  %2355 = vadd.xlane.f32.xlu0 %v2354
  %v2356 = vpop.xlane.xlu0 %2355
  %v2357 = vsel %vm1240, %v2335, 0.0
  %2358 = vadd.xlane.f32.xlu0 %v2357
  %v2359 = vpop.xlane.xlu0 %2358
  %v2360 = vpack.c.bf16 %v2321, %v2321
  %v2361 = vpack.c.bf16 %v2323, %v2323
  %v2362 = vpack.c.bf16 %v2325, %v2325
  %v2363 = vpack.c.bf16 %v2327, %v2327
  %v2364 = vpack.c.bf16 %v2329, %v2329
  %v2365 = vpack.c.bf16 %v2331, %v2331
  %v2366 = vpack.c.bf16 %v2333, %v2333
  %v2367 = vpack.c.bf16 %v2335, %v2335
  %2368 = vrot.lane.b32.xlu0 %v2098, 64
  %v2369 = vpop.permute.xlu0 %2368
  %v2371 = vsel %vm1240, %v2360, 0
  %v2374 = vsel %vm1513, %v2369, 0
  %2376 = vmatpush.bf16.msra.mxu0 0
  %2377 = vmatpush.bf16.msra.mxu0 0
  %2378 = vmatpush.bf16.msra.mxu0 0
  %2379 = vmatpush.bf16.msra.mxu0 0
  %2380 = vmatpush.bf16.msra.mxu0 0
  %2381 = vmatpush.bf16.msra.mxu0 0
  %2382 = vmatpush.bf16.msra.mxu0 0
  %2383 = vmatpush.bf16.msra.mxu0 %v2374
  %2384 = vmatmul.bf16.gmra.mxu0 %v2371
  %v2385 = vpop.f32.mrf.mxu0
  %v2386 = vadd.f32 0.0, %v2385
  %v2387 = vpop.f32.mrf.mxu0
  %2388 = vdwg.mxu0
  %2389 = vrot.lane.b32.xlu0 %v2122, 64
  %v2390 = vpop.permute.xlu0 %2389
  %v2392 = vsel %vm1240, %v2361, 0
  %v2395 = vsel %vm1513, %v2390, 0
  %2397 = vmatpush.bf16.msra.mxu0 0
  %2398 = vmatpush.bf16.msra.mxu0 0
  %2399 = vmatpush.bf16.msra.mxu0 0
  %2400 = vmatpush.bf16.msra.mxu0 0
  %2401 = vmatpush.bf16.msra.mxu0 0
  %2402 = vmatpush.bf16.msra.mxu0 0
  %2403 = vmatpush.bf16.msra.mxu0 0
  %2404 = vmatpush.bf16.msra.mxu0 %v2395
  %2405 = vmatmul.bf16.gmra.mxu0 %v2392
  %v2406 = vpop.f32.mrf.mxu0
  %v2407 = vadd.f32 0.0, %v2406
  %v2408 = vpop.f32.mrf.mxu0
  %2409 = vdwg.mxu0
  %2410 = vrot.lane.b32.xlu0 %v2146, 64
  %v2411 = vpop.permute.xlu0 %2410
  %v2413 = vsel %vm1240, %v2362, 0
  %v2416 = vsel %vm1513, %v2411, 0
  %2418 = vmatpush.bf16.msra.mxu0 0
  %2419 = vmatpush.bf16.msra.mxu0 0
  %2420 = vmatpush.bf16.msra.mxu0 0
  %2421 = vmatpush.bf16.msra.mxu0 0
  %2422 = vmatpush.bf16.msra.mxu0 0
  %2423 = vmatpush.bf16.msra.mxu0 0
  %2424 = vmatpush.bf16.msra.mxu0 0
  %2425 = vmatpush.bf16.msra.mxu0 %v2416
  %2426 = vmatmul.bf16.gmra.mxu0 %v2413
  %v2427 = vpop.f32.mrf.mxu0
  %v2428 = vadd.f32 0.0, %v2427
  %v2429 = vpop.f32.mrf.mxu0
  %2430 = vdwg.mxu0
  %2431 = vrot.lane.b32.xlu0 %v2170, 64
  %v2432 = vpop.permute.xlu0 %2431
  %v2434 = vsel %vm1240, %v2363, 0
  %v2437 = vsel %vm1513, %v2432, 0
  %2439 = vmatpush.bf16.msra.mxu0 0
  %2440 = vmatpush.bf16.msra.mxu0 0
  %2441 = vmatpush.bf16.msra.mxu0 0
  %2442 = vmatpush.bf16.msra.mxu0 0
  %2443 = vmatpush.bf16.msra.mxu0 0
  %2444 = vmatpush.bf16.msra.mxu0 0
  %2445 = vmatpush.bf16.msra.mxu0 0
  %2446 = vmatpush.bf16.msra.mxu0 %v2437
  %2447 = vmatmul.bf16.gmra.mxu0 %v2434
  %v2448 = vpop.f32.mrf.mxu0
  %v2449 = vadd.f32 0.0, %v2448
  %v2450 = vpop.f32.mrf.mxu0
  %2451 = vdwg.mxu0
  %2452 = vrot.lane.b32.xlu0 %v2194, 64
  %v2453 = vpop.permute.xlu0 %2452
  %v2455 = vsel %vm1240, %v2364, 0
  %v2458 = vsel %vm1513, %v2453, 0
  %2460 = vmatpush.bf16.msra.mxu0 0
  %2461 = vmatpush.bf16.msra.mxu0 0
  %2462 = vmatpush.bf16.msra.mxu0 0
  %2463 = vmatpush.bf16.msra.mxu0 0
  %2464 = vmatpush.bf16.msra.mxu0 0
  %2465 = vmatpush.bf16.msra.mxu0 0
  %2466 = vmatpush.bf16.msra.mxu0 0
  %2467 = vmatpush.bf16.msra.mxu0 %v2458
  %2468 = vmatmul.bf16.gmra.mxu0 %v2455
  %v2469 = vpop.f32.mrf.mxu0
  %v2470 = vadd.f32 0.0, %v2469
  %v2471 = vpop.f32.mrf.mxu0
  %2472 = vdwg.mxu0
  %2473 = vrot.lane.b32.xlu0 %v2218, 64
  %v2474 = vpop.permute.xlu0 %2473
  %v2476 = vsel %vm1240, %v2365, 0
  %v2479 = vsel %vm1513, %v2474, 0
  %2481 = vmatpush.bf16.msra.mxu0 0
  %2482 = vmatpush.bf16.msra.mxu0 0
  %2483 = vmatpush.bf16.msra.mxu0 0
  %2484 = vmatpush.bf16.msra.mxu0 0
  %2485 = vmatpush.bf16.msra.mxu0 0
  %2486 = vmatpush.bf16.msra.mxu0 0
  %2487 = vmatpush.bf16.msra.mxu0 0
  %2488 = vmatpush.bf16.msra.mxu0 %v2479
  %2489 = vmatmul.bf16.gmra.mxu0 %v2476
  %v2490 = vpop.f32.mrf.mxu0
  %v2491 = vadd.f32 0.0, %v2490
  %v2492 = vpop.f32.mrf.mxu0
  %2493 = vdwg.mxu0
  %2494 = vrot.lane.b32.xlu0 %v2242, 64
  %v2495 = vpop.permute.xlu0 %2494
  %v2497 = vsel %vm1240, %v2366, 0
  %v2500 = vsel %vm1513, %v2495, 0
  %2502 = vmatpush.bf16.msra.mxu0 0
  %2503 = vmatpush.bf16.msra.mxu0 0
  %2504 = vmatpush.bf16.msra.mxu0 0
  %2505 = vmatpush.bf16.msra.mxu0 0
  %2506 = vmatpush.bf16.msra.mxu0 0
  %2507 = vmatpush.bf16.msra.mxu0 0
  %2508 = vmatpush.bf16.msra.mxu0 0
  %2509 = vmatpush.bf16.msra.mxu0 %v2500
  %2510 = vmatmul.bf16.gmra.mxu0 %v2497
  %v2511 = vpop.f32.mrf.mxu0
  %v2512 = vadd.f32 0.0, %v2511
  %v2513 = vpop.f32.mrf.mxu0
  %2514 = vdwg.mxu0
  %2515 = vrot.lane.b32.xlu0 %v2266, 64
  %v2516 = vpop.permute.xlu0 %2515
  %v2518 = vsel %vm1240, %v2367, 0
  %v2521 = vsel %vm1513, %v2516, 0
  %2523 = vmatpush.bf16.msra.mxu0 0
  %2524 = vmatpush.bf16.msra.mxu0 0
  %2525 = vmatpush.bf16.msra.mxu0 0
  %2526 = vmatpush.bf16.msra.mxu0 0
  %2527 = vmatpush.bf16.msra.mxu0 0
  %2528 = vmatpush.bf16.msra.mxu0 0
  %2529 = vmatpush.bf16.msra.mxu0 0
  %2530 = vmatpush.bf16.msra.mxu0 %v2521
  %2531 = vmatmul.bf16.gmra.mxu0 %v2518
  %v2532 = vpop.f32.mrf.mxu0
  %v2533 = vadd.f32 0.0, %v2532
  %v2534 = vpop.f32.mrf.mxu0
  %2535 = vdwg.mxu0
  %v2536 = vrcp.pop %v2338
  %v2537 = vrcp.pop %v2341
  %v2538 = vrcp.pop %v2344
  %v2539 = vrcp.pop %v2347
  %v2540 = vrcp.pop %v2350
  %v2541 = vrcp.pop %v2353
  %v2542 = vrcp.pop %v2356
  %v2543 = vrcp.pop %v2359
  %v2544 = vmul.f32 %v2386, %v2536
  %v2545 = vmul.f32 %v2407, %v2537
  %v2546 = vmul.f32 %v2428, %v2538
  %v2547 = vmul.f32 %v2449, %v2539
  %v2548 = vmul.f32 %v2470, %v2540
  %v2549 = vmul.f32 %v2491, %v2541
  %v2550 = vmul.f32 %v2512, %v2542
  %v2551 = vmul.f32 %v2533, %v2543
  %2554 = vrot.lane.b32.xlu0 %v2546, 8
  %v2555 = vpop.permute.xlu0 %2554
  %2556 = vrot.lane.b32.xlu0 %v2547, 8
  %v2557 = vpop.permute.xlu0 %2556
  %2562 = vrot.lane.b32.xlu0 %v2548, 16
  %v2563 = vpop.permute.xlu0 %2562
  %2564 = vrot.lane.b32.xlu0 %v2549, 16
  %v2565 = vpop.permute.xlu0 %2564
  %2570 = vrot.lane.b32.xlu0 %v2550, 24
  %v2571 = vpop.permute.xlu0 %2570
  %2572 = vrot.lane.b32.xlu0 %v2551, 24
  %v2573 = vpop.permute.xlu0 %2572
  %v2576 = vsel %vm1240, %v2544, %v2555
  %v2577 = vsel %vm1240, %v2545, %v2557
  %v2578 = vsel %vm1719, %v2576, %v2563
  %v2579 = vsel %vm1719, %v2577, %v2565
  %v2580 = vsel %vm1722, %v2578, %v2571
  %v2581 = vsel %vm1722, %v2579, %v2573
  %v2582 = vpack.c.bf16 %v2581, %v2580
  %v2583 = vperm.slane %v2000, 1
  %v2588 = vunpack.c.l.b16 %v1980
  %v2589 = vunpack.c.l.b16 %v1981
  %v2590 = vunpack.c.l.b16 %v1982
  %v2591 = vunpack.c.l.b16 %v1983
  %v2592 = vpack.c.b16 %v2589, %v2588
  %v2593 = vpack.c.b16 %v2591, %v2590
  %v2595 = vsel %vm1167, %v2582, 0
  %v2598 = vsel %vm1167, %v2592, 0
  %v2601 = vsel %vm1167, %v2593, 0
  %2603 = vmatpush.bf16.xpose.msra.mxu0 0
  %2604 = vmatpush.bf16.xpose.msra.mxu0 0
  %2605 = vmatpush.bf16.xpose.msra.mxu0 0
  %2606 = vmatpush.bf16.xpose.msra.mxu0 0
  %2607 = vmatpush.bf16.xpose.msra.mxu0 0
  %2608 = vmatpush.bf16.xpose.msra.mxu0 0
  %2609 = vmatpush.bf16.xpose.msra.mxu0 %v2601
  %2610 = vmatpush.bf16.xpose.msra.mxu0 %v2598
  %2611 = vmatmul.bf16.gmra.mxu0 %v2595
  %v2612 = vpop.f32.mrf.mxu0
  %v2613 = vadd.f32 %v2583, %v2612
  %v2614 = vpop.f32.mrf.mxu0
  %v2615 = vadd.f32 %v2583, %v2614
  %2616 = vdwg.mxu0
  %v2617 = vadd.f32 %v1966, %v2613
  %v2618 = vadd.f32 %v1967, %v2615
  %v2619 = vsel %vm1167, %v2617, 0.0
  %2620 = vadd.xlane.f32.xlu0 %v2619
  %v2621 = vpop.xlane.xlu0 %2620
  %v2622 = vsel %vm1167, %v2618, 0.0
  %2623 = vadd.xlane.f32.xlu0 %v2622
  %v2624 = vpop.xlane.xlu0 %2623
  %v2625 = vmul.f32 %v2621, %v1774
  %v2626 = vmul.f32 %v2624, %v1774
  %v2627 = vsub.f32 %v2617, %v2625
  %v2628 = vsub.f32 %v2618, %v2626
  %v2629 = vmul.f32 %v2627, %v2627
  %v2630 = vmul.f32 %v2628, %v2628
  %v2631 = vsel %vm1167, %v2629, 0.0
  %2632 = vadd.xlane.f32.xlu0 %v2631
  %v2633 = vpop.xlane.xlu0 %2632
  %v2634 = vsel %vm1167, %v2630, 0.0
  %2635 = vadd.xlane.f32.xlu0 %v2634
  %v2636 = vpop.xlane.xlu0 %2635
  %v2637 = vmul.f32 %v2633, %v1774
  %v2638 = vmul.f32 %v2636, %v1774
  %v2639 = vadd.f32 %v2637, 1e-05
  %v2640 = vadd.f32 %v2638, 1e-05
  %v2641 = vrsqrt.pop %v2639
  %v2642 = vmul.f32 %v2641, %v2639
  %v2643 = vmul.f32 %v2642, %v2641
  %v2644 = vmul.f32 0.5, %v2643
  %v2645 = vsub.f32 1.5, %v2644
  %v2646 = vmul.f32 %v2641, %v2645
  %vm2647 = vweird.f32 %v2639
  %vm2648 = vweird.f32 %v2641
  %vm2649 = vmor %vm2647, %vm2648
  %v2650 = vsel %vm2649, %v2641, %v2646
  %v2651 = vrsqrt.pop %v2640
  %v2652 = vmul.f32 %v2651, %v2640
  %v2653 = vmul.f32 %v2652, %v2651
  %v2654 = vmul.f32 0.5, %v2653
  %v2655 = vsub.f32 1.5, %v2654
  %v2656 = vmul.f32 %v2651, %v2655
  %vm2657 = vweird.f32 %v2640
  %vm2658 = vweird.f32 %v2651
  %vm2659 = vmor %vm2657, %vm2658
  %v2660 = vsel %vm2659, %v2651, %v2656
  %v2661 = vmul.f32 %v2627, %v2650
  %v2662 = vmul.f32 %v2628, %v2660
  %v2663 = vperm.slane %v2000, 2
  %v2664 = vmul.f32 %v2661, %v2663
  %v2665 = vmul.f32 %v2662, %v2663
  %v2666 = vperm.slane %v2000, 3
  %v2667 = vadd.f32 %v2664, %v2666
  %v2668 = vadd.f32 %v2665, %v2666
  %v2669 = vpack.c.bf16 %v2668, %v2667
  %v2670 = vperm.slane %v2000, 4
  %v2679 = vunpack.c.l.b16 %v1984
  %v2680 = vunpack.c.l.b16 %v1985
  %v2681 = vunpack.c.l.b16 %v1986
  %v2682 = vunpack.c.l.b16 %v1987
  %v2683 = vunpack.c.l.b16 %v1988
  %v2684 = vunpack.c.l.b16 %v1989
  %v2685 = vunpack.c.l.b16 %v1990
  %v2686 = vunpack.c.l.b16 %v1991
  %v2687 = vpack.c.b16 %v2680, %v2679
  %v2688 = vpack.c.b16 %v2682, %v2681
  %v2689 = vpack.c.b16 %v2684, %v2683
  %v2690 = vpack.c.b16 %v2686, %v2685
  %v2692 = vsel %vm1167, %v2669, 0
  %v2695 = vsel %vm1167, %v2687, 0
  %v2698 = vsel %vm1167, %v2688, 0
  %v2701 = vsel %vm1167, %v2689, 0
  %v2704 = vsel %vm1167, %v2690, 0
  %2706 = vmatpush.bf16.xpose.msra.mxu0 0
  %2707 = vmatpush.bf16.xpose.msra.mxu0 0
  %2708 = vmatpush.bf16.xpose.msra.mxu0 0
  %2709 = vmatpush.bf16.xpose.msra.mxu0 0
  %2710 = vmatpush.bf16.xpose.msra.mxu0 %v2704
  %2711 = vmatpush.bf16.xpose.msra.mxu0 %v2701
  %2712 = vmatpush.bf16.xpose.msra.mxu0 %v2698
  %2713 = vmatpush.bf16.xpose.msra.mxu0 %v2695
  %2714 = vmatmul.bf16.gmra.mxu0 %v2692
  %v2715 = vpop.f32.mrf.mxu0
  %v2716 = vadd.f32 %v2670, %v2715
  %v2717 = vpop.f32.mrf.mxu0
  %v2718 = vadd.f32 %v2670, %v2717
  %2719 = vdwg.mxu0
  %v2720 = vmax.f32 %v2716, 0.0
  %v2721 = vmax.f32 %v2718, 0.0
  %v2722 = vpack.c.bf16 %v2721, %v2720
  %v2723 = vperm.slane %v2000, 5
  %v2732 = vunpack.c.l.b16 %v1992
  %v2733 = vunpack.c.l.b16 %v1993
  %v2734 = vunpack.c.l.b16 %v1994
  %v2735 = vunpack.c.l.b16 %v1995
  %v2736 = vunpack.c.l.b16 %v1996
  %v2737 = vunpack.c.l.b16 %v1997
  %v2738 = vunpack.c.l.b16 %v1998
  %v2739 = vunpack.c.l.b16 %v1999
  %v2740 = vpack.c.b16 %v2733, %v2732
  %v2741 = vpack.c.b16 %v2735, %v2734
  %v2742 = vpack.c.b16 %v2737, %v2736
  %v2743 = vpack.c.b16 %v2739, %v2738
  %v2749 = vsel %vm1898, %v2722, 0
  %2751 = vmatpush.bf16.msra.mxu0 0
  %2752 = vmatpush.bf16.msra.mxu0 0
  %2753 = vmatpush.bf16.msra.mxu0 0
  %2754 = vmatpush.bf16.msra.mxu0 0
  %2755 = vmatpush.bf16.msra.mxu0 %v2743
  %2756 = vmatpush.bf16.msra.mxu0 %v2742
  %2757 = vmatpush.bf16.msra.mxu0 %v2741
  %2758 = vmatpush.bf16.msra.mxu0 %v2740
  %2759 = vmatmul.bf16.gmra.mxu0 %v2749
  %v2760 = vpop.f32.mrf.mxu0
  %v2761 = vadd.f32 %v2723, %v2760
  %v2762 = vpop.f32.mrf.mxu0
  %v2763 = vadd.f32 %v2723, %v2762
  %2764 = vdwg.mxu0
  %v2765 = vadd.f32 %v2667, %v2761
  %v2766 = vadd.f32 %v2668, %v2763
  %v2767 = vsel %vm1167, %v2765, 0.0
  %2768 = vadd.xlane.f32.xlu0 %v2767
  %v2769 = vpop.xlane.xlu0 %2768
  %v2770 = vsel %vm1167, %v2766, 0.0
  %2771 = vadd.xlane.f32.xlu0 %v2770
  %v2772 = vpop.xlane.xlu0 %2771
  %v2773 = vmul.f32 %v2769, %v1774
  %v2774 = vmul.f32 %v2772, %v1774
  %v2775 = vsub.f32 %v2765, %v2773
  %v2776 = vsub.f32 %v2766, %v2774
  %v2777 = vmul.f32 %v2775, %v2775
  %v2778 = vmul.f32 %v2776, %v2776
  %v2779 = vsel %vm1167, %v2777, 0.0
  %2780 = vadd.xlane.f32.xlu0 %v2779
  %v2781 = vpop.xlane.xlu0 %2780
  %v2782 = vsel %vm1167, %v2778, 0.0
  %2783 = vadd.xlane.f32.xlu0 %v2782
  %v2784 = vpop.xlane.xlu0 %2783
  %v2785 = vmul.f32 %v2781, %v1774
  %v2786 = vmul.f32 %v2784, %v1774
  %v2787 = vadd.f32 %v2785, 1e-05
  %v2788 = vadd.f32 %v2786, 1e-05
  %v2789 = vrsqrt.pop %v2787
  %v2790 = vmul.f32 %v2789, %v2787
  %v2791 = vmul.f32 %v2790, %v2789
  %v2792 = vmul.f32 0.5, %v2791
  %v2793 = vsub.f32 1.5, %v2792
  %v2794 = vmul.f32 %v2789, %v2793
  %vm2795 = vweird.f32 %v2787
  %vm2796 = vweird.f32 %v2789
  %vm2797 = vmor %vm2795, %vm2796
  %v2798 = vsel %vm2797, %v2789, %v2794
  %v2799 = vrsqrt.pop %v2788
  %v2800 = vmul.f32 %v2799, %v2788
  %v2801 = vmul.f32 %v2800, %v2799
  %v2802 = vmul.f32 0.5, %v2801
  %v2803 = vsub.f32 1.5, %v2802
  %v2804 = vmul.f32 %v2799, %v2803
  %vm2805 = vweird.f32 %v2788
  %vm2806 = vweird.f32 %v2799
  %vm2807 = vmor %vm2805, %vm2806
  %v2808 = vsel %vm2807, %v2799, %v2804
  %v2809 = vmul.f32 %v2775, %v2798
  %v2810 = vmul.f32 %v2776, %v2808
  %v2811 = vperm.slane %v2000, 6
  %v2812 = vmul.f32 %v2809, %v2811
  %v2813 = vmul.f32 %v2810, %v2811
  %v2814 = vperm.slane %v2000, 7
  %v2815 = vadd.f32 %v2812, %v2814
  %v2816 = vadd.f32 %v2813, %v2814
  %v2817 = vld [vmem:[%s2 + $0x280] sm:$0xf]
  %v2818 = vld [vmem:[%s2 + $0x284] sm:$0xf]
  %v2819 = vld [vmem:[%s2 + $0x288] sm:$0xf]
  %v2820 = vld [vmem:[%s2 + $0x28c] sm:$0xf]
  %v2821 = vld [vmem:[%s2 + $0x290] sm:$0xf]
  %v2822 = vld [vmem:[%s2 + $0x294] sm:$0xf]
  %v2823 = vld [vmem:[%s2 + $0x298] sm:$0xf]
  %v2824 = vld [vmem:[%s2 + $0x29c] sm:$0xf]
  %v2825 = vld [vmem:[%s2 + $0x2a0] sm:$0xf]
  %v2826 = vld [vmem:[%s2 + $0x2a4] sm:$0xf]
  %v2827 = vld [vmem:[%s2 + $0x2a8] sm:$0xf]
  %v2828 = vld [vmem:[%s2 + $0x2ac] sm:$0xf]
  %v2829 = vld [vmem:[%s2 + $0x2b0] sm:$0xf]
  %v2830 = vld [vmem:[%s2 + $0x2b4] sm:$0xf]
  %v2831 = vld [vmem:[%s2 + $0x2b8] sm:$0xf]
  %v2832 = vld [vmem:[%s2 + $0x2bc] sm:$0xf]
  %v2833 = vld [vmem:[%s2 + $0x2c0] sm:$0xf]
  %v2834 = vld [vmem:[%s2 + $0x2c4] sm:$0xf]
  %v2835 = vld [vmem:[%s2 + $0x2c8] sm:$0xf]
  %v2836 = vld [vmem:[%s2 + $0x2cc] sm:$0xf]
  %v2837 = vld [vmem:[%s2 + $0x2d0] sm:$0xf]
  %v2838 = vld [vmem:[%s2 + $0x2d4] sm:$0xf]
  %v2839 = vld [vmem:[%s2 + $0x2d8] sm:$0xf]
  %v2840 = vld [vmem:[%s2 + $0x2dc] sm:$0xf]
  %v2841 = vld [vmem:[%s2 + $0x2e0] sm:$0xf]
  %v2842 = vld [vmem:[%s2 + $0x2e4] sm:$0xf]
  %v2843 = vld [vmem:[%s2 + $0x2e8] sm:$0xf]
  %v2844 = vld [vmem:[%s2 + $0x2ec] sm:$0xf]
  %v2845 = vld [vmem:[%s2 + $0x2f0] sm:$0xf]
  %v2846 = vld [vmem:[%s2 + $0x2f4] sm:$0xf]
  %v2847 = vld [vmem:[%s2 + $0x2f8] sm:$0xf]
  %v2848 = vld [vmem:[%s2 + $0x2fc] sm:$0xf]
  %v2849 = vld [vmem:[%s2 + $0x300] sm:$0xf]
  %v2850 = vld [vmem:[%s2 + $0x304] sm:$0xf]
  %v2851 = vld [vmem:[%s2 + $0x308] sm:$0xf]
  %v2852 = vld [vmem:[%s2 + $0x30c] sm:$0xf]
  %v2853 = vld [vmem:[%s2 + $0x310] sm:$0xf]
  %v2854 = vld [vmem:[%s2 + $0x314] sm:$0xf]
  %v2855 = vld [vmem:[%s2 + $0x318] sm:$0xf]
  %v2856 = vld [vmem:[%s2 + $0x31c] sm:$0xf]
  %v2857 = vld [vmem:[%s2 + $0x320] sm:$0xf]
  %v2858 = vld [vmem:[%s2 + $0x324] sm:$0xf]
  %v2859 = vld [vmem:[%s2 + $0x328] sm:$0xf]
  %v2860 = vld [vmem:[%s2 + $0x32c] sm:$0xf]
  %v2861 = vld [vmem:[%s2 + $0x330] sm:$0xf]
  %v2862 = vld [vmem:[%s2 + $0x334] sm:$0xf]
  %v2863 = vld [vmem:[%s2 + $0x338] sm:$0xf]
  %v2864 = vld [vmem:[%s2 + $0x33c] sm:$0xf]
  %v2865 = vld [vmem:[%s2 + $0x340] sm:$0xf]
  %v2866 = vld [vmem:[%s2 + $0x344] sm:$0xf]
  %v2867 = vld [vmem:[%s2 + $0x348] sm:$0xf]
  %v2868 = vld [vmem:[%s2 + $0x34c] sm:$0xf]
  %v2869 = vld [vmem:[%s2 + $0x350] sm:$0xf]
  %v2870 = vld [vmem:[%s2 + $0x354] sm:$0xf]
  %v2871 = vld [vmem:[%s2 + $0x358] sm:$0xf]
  %v2872 = vld [vmem:[%s2 + $0x35c] sm:$0xf]
  %v2873 = vld [vmem:[%s2 + $0x360] sm:$0xf]
  %v2874 = vld [vmem:[%s2 + $0x364] sm:$0xf]
  %v2875 = vld [vmem:[%s2 + $0x368] sm:$0xf]
  %v2876 = vld [vmem:[%s2 + $0x36c] sm:$0xf]
  %v2877 = vld [vmem:[%s2 + $0x370] sm:$0xf]
  %v2878 = vld [vmem:[%s2 + $0x374] sm:$0xf]
  %v2879 = vld [vmem:[%s2 + $0x378] sm:$0xf]
  %v2880 = vld [vmem:[%s2 + $0x37c] sm:$0xf]
  %s2881 = scalar_lea.vmem %s3, 64
  %v2882 = vld [vmem:[%s2881] ss:$8 sm:$0xf]
  %v2883 = vpack.c.bf16 %v2816, %v2815
  %v2885 = vperm.slane %v2882, 0
  %v2886 = vperm.slane %v2882, 1
  %v2887 = vperm.slane %v2882, 2
  %v2888 = vperm.slane %v2882, 3
  %v2957 = vunpack.c.l.b16 %v2817
  %v2958 = vunpack.c.l.b16 %v2818
  %v2959 = vunpack.c.l.b16 %v2819
  %v2960 = vunpack.c.l.b16 %v2820
  %v2961 = vunpack.c.l.b16 %v2821
  %v2962 = vunpack.c.l.b16 %v2822
  %v2963 = vunpack.c.l.b16 %v2823
  %v2964 = vunpack.c.l.b16 %v2824
  %v2965 = vunpack.c.l.b16 %v2825
  %v2966 = vunpack.c.l.b16 %v2826
  %v2967 = vunpack.c.l.b16 %v2827
  %v2968 = vunpack.c.l.b16 %v2828
  %v2969 = vunpack.c.l.b16 %v2829
  %v2970 = vunpack.c.l.b16 %v2830
  %v2971 = vunpack.c.l.b16 %v2831
  %v2972 = vunpack.c.l.b16 %v2832
  %v2973 = vunpack.c.l.b16 %v2833
  %v2974 = vunpack.c.l.b16 %v2834
  %v2975 = vunpack.c.l.b16 %v2835
  %v2976 = vunpack.c.l.b16 %v2836
  %v2977 = vunpack.c.l.b16 %v2837
  %v2978 = vunpack.c.l.b16 %v2838
  %v2979 = vunpack.c.l.b16 %v2839
  %v2980 = vunpack.c.l.b16 %v2840
  %v2981 = vunpack.c.l.b16 %v2841
  %v2982 = vunpack.c.l.b16 %v2842
  %v2983 = vunpack.c.l.b16 %v2843
  %v2984 = vunpack.c.l.b16 %v2844
  %v2985 = vunpack.c.l.b16 %v2845
  %v2986 = vunpack.c.l.b16 %v2846
  %v2987 = vunpack.c.l.b16 %v2847
  %v2988 = vunpack.c.l.b16 %v2848
  %v2989 = vunpack.c.l.b16 %v2849
  %v2990 = vunpack.c.l.b16 %v2850
  %v2991 = vunpack.c.l.b16 %v2851
  %v2992 = vunpack.c.l.b16 %v2852
  %v2993 = vunpack.c.l.b16 %v2853
  %v2994 = vunpack.c.l.b16 %v2854
  %v2995 = vunpack.c.l.b16 %v2855
  %v2996 = vunpack.c.l.b16 %v2856
  %v2997 = vunpack.c.l.b16 %v2857
  %v2998 = vunpack.c.l.b16 %v2858
  %v2999 = vunpack.c.l.b16 %v2859
  %v3000 = vunpack.c.l.b16 %v2860
  %v3001 = vunpack.c.l.b16 %v2861
  %v3002 = vunpack.c.l.b16 %v2862
  %v3003 = vunpack.c.l.b16 %v2863
  %v3004 = vunpack.c.l.b16 %v2864
  %v3005 = vunpack.c.l.b16 %v2865
  %v3006 = vunpack.c.l.b16 %v2866
  %v3007 = vunpack.c.l.b16 %v2867
  %v3008 = vunpack.c.l.b16 %v2868
  %v3009 = vunpack.c.l.b16 %v2869
  %v3010 = vunpack.c.l.b16 %v2870
  %v3011 = vunpack.c.l.b16 %v2871
  %v3012 = vunpack.c.l.b16 %v2872
  %v3013 = vunpack.c.l.b16 %v2873
  %v3014 = vunpack.c.l.b16 %v2874
  %v3015 = vunpack.c.l.b16 %v2875
  %v3016 = vunpack.c.l.b16 %v2876
  %v3017 = vunpack.c.l.b16 %v2877
  %v3018 = vunpack.c.l.b16 %v2878
  %v3019 = vunpack.c.l.b16 %v2879
  %v3020 = vunpack.c.l.b16 %v2880
  %v3021 = vpack.c.b16 %v2958, %v2957
  %v3022 = vpack.c.b16 %v2960, %v2959
  %v3023 = vpack.c.b16 %v2962, %v2961
  %v3024 = vpack.c.b16 %v2964, %v2963
  %v3025 = vpack.c.b16 %v2966, %v2965
  %v3026 = vpack.c.b16 %v2968, %v2967
  %v3027 = vpack.c.b16 %v2970, %v2969
  %v3028 = vpack.c.b16 %v2972, %v2971
  %v3029 = vpack.c.b16 %v2974, %v2973
  %v3030 = vpack.c.b16 %v2976, %v2975
  %v3031 = vpack.c.b16 %v2978, %v2977
  %v3032 = vpack.c.b16 %v2980, %v2979
  %v3033 = vpack.c.b16 %v2982, %v2981
  %v3034 = vpack.c.b16 %v2984, %v2983
  %v3035 = vpack.c.b16 %v2986, %v2985
  %v3036 = vpack.c.b16 %v2988, %v2987
  %v3037 = vpack.c.b16 %v2990, %v2989
  %v3038 = vpack.c.b16 %v2992, %v2991
  %v3039 = vpack.c.b16 %v2994, %v2993
  %v3040 = vpack.c.b16 %v2996, %v2995
  %v3041 = vpack.c.b16 %v2998, %v2997
  %v3042 = vpack.c.b16 %v3000, %v2999
  %v3043 = vpack.c.b16 %v3002, %v3001
  %v3044 = vpack.c.b16 %v3004, %v3003
  %v3045 = vpack.c.b16 %v3006, %v3005
  %v3046 = vpack.c.b16 %v3008, %v3007
  %v3047 = vpack.c.b16 %v3010, %v3009
  %v3048 = vpack.c.b16 %v3012, %v3011
  %v3049 = vpack.c.b16 %v3014, %v3013
  %v3050 = vpack.c.b16 %v3016, %v3015
  %v3051 = vpack.c.b16 %v3018, %v3017
  %v3052 = vpack.c.b16 %v3020, %v3019
  %v3054 = vsel %vm1167, %v2883, 0
  %v3057 = vsel %vm1167, %v3021, 0
  %v3060 = vsel %vm1167, %v3022, 0
  %v3063 = vsel %vm1167, %v3023, 0
  %v3066 = vsel %vm1167, %v3024, 0
  %v3069 = vsel %vm1167, %v3025, 0
  %v3072 = vsel %vm1167, %v3026, 0
  %v3075 = vsel %vm1167, %v3027, 0
  %v3078 = vsel %vm1167, %v3028, 0
  %v3081 = vsel %vm1167, %v3029, 0
  %v3084 = vsel %vm1167, %v3030, 0
  %v3087 = vsel %vm1167, %v3031, 0
  %v3090 = vsel %vm1167, %v3032, 0
  %v3093 = vsel %vm1167, %v3033, 0
  %v3096 = vsel %vm1167, %v3034, 0
  %v3099 = vsel %vm1167, %v3035, 0
  %v3102 = vsel %vm1167, %v3036, 0
  %v3105 = vsel %vm1167, %v3037, 0
  %v3108 = vsel %vm1167, %v3038, 0
  %v3111 = vsel %vm1167, %v3039, 0
  %v3114 = vsel %vm1167, %v3040, 0
  %v3117 = vsel %vm1167, %v3041, 0
  %v3120 = vsel %vm1167, %v3042, 0
  %v3123 = vsel %vm1167, %v3043, 0
  %v3126 = vsel %vm1167, %v3044, 0
  %v3129 = vsel %vm1167, %v3045, 0
  %v3132 = vsel %vm1167, %v3046, 0
  %v3135 = vsel %vm1167, %v3047, 0
  %v3138 = vsel %vm1167, %v3048, 0
  %v3141 = vsel %vm1167, %v3049, 0
  %v3144 = vsel %vm1167, %v3050, 0
  %v3147 = vsel %vm1167, %v3051, 0
  %v3150 = vsel %vm1167, %v3052, 0
  %3152 = vmatpush.bf16.xpose.msra.mxu0 %v3078
  %3153 = vmatpush.bf16.xpose.msra.mxu0 %v3075
  %3154 = vmatpush.bf16.xpose.msra.mxu0 %v3072
  %3155 = vmatpush.bf16.xpose.msra.mxu0 %v3069
  %3156 = vmatpush.bf16.xpose.msra.mxu0 %v3066
  %3157 = vmatpush.bf16.xpose.msra.mxu0 %v3063
  %3158 = vmatpush.bf16.xpose.msra.mxu0 %v3060
  %3159 = vmatpush.bf16.xpose.msra.mxu0 %v3057
  %3160 = vmatmul.bf16.gmra.mxu0 %v3054
  %v3161 = vpop.f32.mrf.mxu0
  %v3162 = vadd.f32 %v2885, %v3161
  %v3163 = vpop.f32.mrf.mxu0
  %v3164 = vadd.f32 %v2885, %v3163
  %3165 = vdwg.mxu0
  %3166 = vmatpush.bf16.xpose.msra.mxu0 %v3102
  %3167 = vmatpush.bf16.xpose.msra.mxu0 %v3099
  %3168 = vmatpush.bf16.xpose.msra.mxu0 %v3096
  %3169 = vmatpush.bf16.xpose.msra.mxu0 %v3093
  %3170 = vmatpush.bf16.xpose.msra.mxu0 %v3090
  %3171 = vmatpush.bf16.xpose.msra.mxu0 %v3087
  %3172 = vmatpush.bf16.xpose.msra.mxu0 %v3084
  %3173 = vmatpush.bf16.xpose.msra.mxu0 %v3081
  %3174 = vmatmul.bf16.gmra.mxu0 %v3054
  %v3175 = vpop.f32.mrf.mxu0
  %v3176 = vadd.f32 %v2886, %v3175
  %v3177 = vpop.f32.mrf.mxu0
  %v3178 = vadd.f32 %v2886, %v3177
  %3179 = vdwg.mxu0
  %3180 = vmatpush.bf16.xpose.msra.mxu0 %v3126
  %3181 = vmatpush.bf16.xpose.msra.mxu0 %v3123
  %3182 = vmatpush.bf16.xpose.msra.mxu0 %v3120
  %3183 = vmatpush.bf16.xpose.msra.mxu0 %v3117
  %3184 = vmatpush.bf16.xpose.msra.mxu0 %v3114
  %3185 = vmatpush.bf16.xpose.msra.mxu0 %v3111
  %3186 = vmatpush.bf16.xpose.msra.mxu0 %v3108
  %3187 = vmatpush.bf16.xpose.msra.mxu0 %v3105
  %3188 = vmatmul.bf16.gmra.mxu0 %v3054
  %v3189 = vpop.f32.mrf.mxu0
  %v3190 = vadd.f32 %v2887, %v3189
  %v3191 = vpop.f32.mrf.mxu0
  %v3192 = vadd.f32 %v2887, %v3191
  %3193 = vdwg.mxu0
  %3194 = vmatpush.bf16.xpose.msra.mxu0 %v3150
  %3195 = vmatpush.bf16.xpose.msra.mxu0 %v3147
  %3196 = vmatpush.bf16.xpose.msra.mxu0 %v3144
  %3197 = vmatpush.bf16.xpose.msra.mxu0 %v3141
  %3198 = vmatpush.bf16.xpose.msra.mxu0 %v3138
  %3199 = vmatpush.bf16.xpose.msra.mxu0 %v3135
  %3200 = vmatpush.bf16.xpose.msra.mxu0 %v3132
  %3201 = vmatpush.bf16.xpose.msra.mxu0 %v3129
  %3202 = vmatmul.bf16.gmra.mxu0 %v3054
  %v3203 = vpop.f32.mrf.mxu0
  %v3204 = vadd.f32 %v2888, %v3203
  %v3205 = vpop.f32.mrf.mxu0
  %v3206 = vadd.f32 %v2888, %v3205
  %3207 = vdwg.mxu0
  %3208 = vst [vmem:[%s4] sm:$0xff] %v3162
  %3209 = vst [vmem:[%s4 + $0x8] sm:$0xff] %v3176
  %3210 = vst [vmem:[%s4 + $0x10] sm:$0xff] %v3190
  %3211 = vst [vmem:[%s4 + $0x18] sm:$0xff] %v3204
  %3212 = vst [vmem:[%s4 + $0x28] sm:$0xff] %v3164
  %3213 = vst [vmem:[%s4 + $0x30] sm:$0xff] %v3178
  %3214 = vst [vmem:[%s4 + $0x38] sm:$0xff] %v3192
  %3215 = vst [vmem:[%s4 + $0x40] sm:$0xff] %v3206
  %v3216 = vsel %vm1167, %v2815, 0.0
  %v3217 = vsel %vm1167, %v2816, 0.0
  %3218 = vst [vmem:[%s4 + $0x20] sm:$0xff] %v3216
  %3219 = vst [vmem:[%s4 + $0x48] sm:$0xff] %v3217
  // Predicated region
  $region18: #{cm_bert_forward.1} parent=0 // pred_check
    _
  $region19: #{cm_bert_forward.1} parent=0 // pred_check_branch
    %3221 = sbr.rel (0) target = $region21
  $region20: #{cm_bert_forward.1} parent=0 // pred_region
    _
  $region21: #{cm_bert_forward.1} parent=0 // pred_fallthru
    _
  // Predicated region
  $region22: #{cm_bert_forward.1} parent=0 // pred_check
    _
  $region23: #{cm_bert_forward.1} parent=0 // pred_check_branch
    %3223 = sbr.rel (0) target = $region25
  $region24: #{cm_bert_forward.1} parent=0 // pred_region
    _
  $region25: #{cm_bert_forward.1} parent=0 // pred_fallthru
    _

</llo_original>
